<compile_context>
chip_gen: v7x
topology: tpu7x:2x2x1
jax: 0.10.0
libtpu: 0.0.40
codegen_flags: <defaults>
</compile_context>

<pallas_src>
import functools
import numpy as np
import jax
import jax.numpy as jnp
from jax.experimental import pallas as pl
from jax.experimental.pallas import tpu as pltpu


# ---------------------------------------------------------------------------
# Host-side constant builders (shape-only selection / averaging matrices)
# ---------------------------------------------------------------------------
def _adaptive_avg_matrix(out_size, in_size):
    """A[i, s] = 1/|bin_i| if s in bin_i (PyTorch AdaptiveAvgPool binning)."""
    A = np.zeros((out_size, in_size), np.float32)
    for i in range(out_size):
        s = (i * in_size) // out_size
        e = -(-((i + 1) * in_size) // out_size)          # ceil
        A[i, s:e] = 1.0 / (e - s)
    return A


def _build_selectors(H, W, B, oc=4, out_hw=6):
    Hc = (H + 2 - 2) // 2 + 1            # Conv2d(k=2, s=2, p=1) output height
    Wc = (W + 2 - 2) // 2 + 1
    Ph = (Hc - 3) // 2 + 1               # MaxPool2d(k=3, s=2) output height
    Pw = (Wc - 3) // 2 + 1
    HCP = ((Hc + 7) // 8) * 8            # per-image conv-row block (padded)
    CW = oc * Wc                         # conv lanes   (channel-major)
    PW = oc * Pw                         # maxpool lanes (channel-major)
    assert CW <= 128 and PW <= 128, "image too wide for single-lane-tile layout"
    assert B % 8 == 0, "block batch must be a multiple of 8 (sublane alignment)"

    # Conv row selectors (zero padding folded in), block-diagonal over the B
    # images of one grid step.  Output row b*HCP+i picks x row 2i+ki-1 of image b.
    RSB = np.zeros((2, B * HCP, B * H), np.float32)
    for ki in range(2):
        for b in range(B):
            for i in range(Hc):
                r = 2 * i + ki - 1
                if 0 <= r < H:
                    RSB[ki, b * HCP + i, b * H + r] = 1.0

    # MaxPool column gathers: 3 window offsets side by side (128-lane blocks).
    HS = np.zeros((128, 3 * 128), np.float32)
    for k in range(3):
        for c in range(oc):
            for j in range(Pw):
                HS[c * Wc + 2 * j + k, k * 128 + c * Pw + j] = 1.0

    # MaxPool row gathers: 3 offsets stacked on rows, block-diagonal over images.
    # Output row k*Ph*B + i*B + b picks conv row 2i+k of image b.
    GB = np.zeros((3 * Ph * B, B * HCP), np.float32)
    for k in range(3):
        for i in range(Ph):
            for b in range(B):
                GB[k * Ph * B + i * B + b, b * HCP + 2 * i + k] = 1.0

    # AdaptiveAvgPool row averaging, batched over images (kron with I_B keeps
    # images apart; output row r*B+b).
    Arow = _adaptive_avg_matrix(out_hw, Ph)                  # [6, Ph]
    AB = np.kron(Arow, np.eye(B, dtype=np.float32))          # [6B, Ph*B]
    Acol = _adaptive_avg_matrix(out_hw, Pw)                  # [6, Pw]

    # Conv column-tap selectors (conv weights folded in later, host-side).
    C = np.zeros((2, W, Wc), np.float32)
    for kj in range(2):
        for j in range(Wc):
            s = 2 * j + kj - 1
            if 0 <= s < W:
                C[kj, s, j] = 1.0

    return dict(Hc=Hc, Wc=Wc, Ph=Ph, Pw=Pw, HCP=HCP, CW=CW, PW=PW,
                RSB=RSB, HS=HS, GB=GB, AB=AB, Acol=Acol, C=C)


# ---------------------------------------------------------------------------
# Fused kernel: conv -> relu -> maxpool -> (avgpool+flatten+MLP) for B images
# ---------------------------------------------------------------------------
def _make_kernel(B, PhB, h1_dim, h2_dim, out_dim, out_hw):
    def kernel(x_ref, mcat_ref, rsb_ref, hscat_ref, gbig_ref, arow_ref,
               w1_ref, w2_ref, w3_ref, bias_ref, out_ref):
        f32 = jnp.float32

        # 1) Conv column taps (both kernel rows, all channels): one batched matmul.
        y = jnp.dot(x_ref[...], mcat_ref[...],
                    preferred_element_type=f32)                      # [B*H, 256]

        # 2) Conv row selection + combination (block-diag over images) + bias, ReLU.
        conv = (jnp.dot(rsb_ref[0], y[:, :128], preferred_element_type=f32)
                + jnp.dot(rsb_ref[1], y[:, 128:], preferred_element_type=f32)
                + bias_ref[0:1, 0:128])                              # [B*HCP, 128]
        conv = jnp.maximum(conv, 0.0)

        # 3) MaxPool column gathers: one push, then max of 3 aligned lane slices.
        cm3 = jnp.dot(conv, hscat_ref[...], preferred_element_type=f32)   # [B*HCP, 384]
        cm = jnp.maximum(jnp.maximum(cm3[:, 0:128], cm3[:, 128:256]),
                         cm3[:, 256:384])                            # [B*HCP, 128]

        # 4) MaxPool row gathers: one push, then max of 3 aligned row blocks.
        g3 = jnp.dot(gbig_ref[...], cm, preferred_element_type=f32)  # [3*Ph*B, 128]
        mp = jnp.maximum(jnp.maximum(g3[0:PhB], g3[PhB:2 * PhB]),
                         g3[2 * PhB:3 * PhB])                        # [Ph*B, 128]

        # 5) AdaptiveAvgPool row averaging (column averaging is folded into W1).
        pooled = jnp.dot(arow_ref[...], mp, preferred_element_type=f32)   # [6*B, 128]

        # 6) flatten + Linear(144,150): 6 batched matmuls against the
        #    avgpool/flatten-folded W1 row blocks.  Slices are sublane-aligned.
        h1 = bias_ref[1:2, 0:h1_dim]                                 # [1, 150]
        for r in range(out_hw):
            h1 = h1 + jnp.dot(pooled[r * B:(r + 1) * B, :], w1_ref[r],
                              preferred_element_type=f32)
        h1 = jnp.maximum(h1, 0.0)                                    # [B, 150]

        # 7) Linear(150,50) + ReLU ; 8) Linear(50,2).  Fully batched.
        h2 = jnp.maximum(jnp.dot(h1, w2_ref[...], preferred_element_type=f32)
                         + bias_ref[2:3, 0:h2_dim], 0.0)             # [B, 50]
        out_ref[...] = (jnp.dot(h2, w3_ref[...], preferred_element_type=f32)
                        + bias_ref[3:4, 0:out_dim])                  # [B, 2]
    return kernel


# ---------------------------------------------------------------------------
# Wrapper: fold weights into constants, launch the fused kernel
# ---------------------------------------------------------------------------
def conv1_forward(x, params, *, block_batch=8):
    wc, bc, w1, b1, w2, b2, w3, b3 = params
    N, cin, H, W = x.shape
    assert cin == 1
    oc = wc.shape[0]                                # 4 output channels
    out_hw = 6
    B = block_batch
    sel = _build_selectors(H, W, B, oc, out_hw)
    Wc, Ph, Pw = sel["Wc"], sel["Ph"], sel["Pw"]
    HCP, CW, PW = sel["HCP"], sel["CW"], sel["PW"]
    h1_dim, h2_dim, out_dim = w1.shape[1], w2.shape[1], w3.shape[1]

    # Conv weights folded into the column-tap selectors: [W, 2*128].
    C0, C1 = jnp.asarray(sel["C"][0]), jnp.asarray(sel["C"][1])

    def col_block(ki):
        blk = jnp.concatenate([wc[c, 0, ki, 0] * C0 + wc[c, 0, ki, 1] * C1
                               for c in range(oc)], axis=1)          # [W, oc*Wc]
        return jnp.pad(blk, ((0, 0), (0, 128 - CW)))

    mcat = jnp.concatenate([col_block(0), col_block(1)], axis=1)     # [W, 256]

    # AdaptiveAvgPool columns + flatten folded into W1: [6, 128, 150].
    w1r = w1.reshape(oc, out_hw, out_hw, h1_dim)                     # [c, r, q, o]
    wf = jnp.einsum('qj,crqo->rcjo', jnp.asarray(sel["Acol"]), w1r)  # [r, c, j, o]
    wf = wf.reshape(out_hw, oc * Pw, h1_dim)
    w1fold = jnp.pad(wf, ((0, 0), (0, 128 - PW), (0, 0)))            # [6, 128, 150]

    # All biases packed into a single [4, 256] buffer (fewer constant inputs).
    bias_all = jnp.zeros((4, 256), jnp.float32)
    bias_all = bias_all.at[0, :CW].set(jnp.repeat(bc, Wc))
    bias_all = bias_all.at[1, :h1_dim].set(b1.reshape(-1))
    bias_all = bias_all.at[2, :h2_dim].set(b2.reshape(-1))
    bias_all = bias_all.at[3, :out_dim].set(b3.reshape(-1))

    rsb = jnp.asarray(sel["RSB"])      # [2, B*HCP, B*H]
    hscat = jnp.asarray(sel["HS"])     # [128, 384]
    gbig = jnp.asarray(sel["GB"])      # [3*Ph*B, B*HCP]
    arowbig = jnp.asarray(sel["AB"])   # [6*B, Ph*B]

    # Pad the batch to a multiple of B and present the image stack row-dense.
    Np = ((N + B - 1) // B) * B
    xs = x[:, 0].astype(jnp.float32)
    if Np != N:
        xs = jnp.pad(xs, ((0, Np - N), (0, 0), (0, 0)))
    xs = xs.reshape(Np * H, W)

    kernel = _make_kernel(B, Ph * B, h1_dim, h2_dim, out_dim, out_hw)
    full2 = lambda n: (0, 0)
    full3 = lambda n: (0, 0, 0)

    out = pl.pallas_call(
        kernel,
        out_shape=jax.ShapeDtypeStruct((Np, out_dim), jnp.float32),
        grid=(Np // B,),
        in_specs=[
            pl.BlockSpec((B * H, W), lambda n: (n, 0)),              # B-image slab
            pl.BlockSpec((W, 2 * 128), full2),                       # conv col taps (weights folded)
            pl.BlockSpec((2, B * HCP, B * H), full3),                # conv row selectors (block-diag)
            pl.BlockSpec((128, 3 * 128), full2),                     # maxpool col gathers (merged)
            pl.BlockSpec((3 * Ph * B, B * HCP), full2),              # maxpool row gathers (merged)
            pl.BlockSpec((out_hw * B, Ph * B), full2),               # avgpool row averaging
            pl.BlockSpec((out_hw, 128, h1_dim), full3),              # W1 (avgpool cols + flatten folded)
            pl.BlockSpec((h1_dim, h2_dim), full2),                   # W2
            pl.BlockSpec((h2_dim, out_dim), full2),                  # W3
            pl.BlockSpec((4, 256), full2),                           # packed biases
        ],
        out_specs=pl.BlockSpec((B, out_dim), lambda n: (n, 0)),
        compiler_params=pltpu.CompilerParams(
            dimension_semantics=("parallel",),        # >=2 steps -> v7x 2-TC split
            vmem_limit_bytes=32 * 1024 * 1024),
    )(xs, mcat, rsb, hscat, gbig, arowbig, w1fold, w2, w3, bias_all)
    return out[:N]


# ---------------------------------------------------------------------------
# Pure-JAX reference (for a numerical sanity check of the fused kernel)
# ---------------------------------------------------------------------------
def conv1_reference(x, params):
    wc, bc, w1, b1, w2, b2, w3, b3 = params
    y = jax.lax.conv_general_dilated(
        x, wc, window_strides=(2, 2), padding=((1, 1), (1, 1)),
        dimension_numbers=('NCHW', 'OIHW', 'NCHW'))
    y = jnp.maximum(y + bc.reshape(1, -1, 1, 1), 0.0)
    y = jax.lax.reduce_window(y, -jnp.inf, jax.lax.max,
                              (1, 1, 3, 3), (1, 1, 2, 2), 'VALID')
    _, _, Ph, Pw = y.shape
    Arow = jnp.asarray(_adaptive_avg_matrix(6, Ph))
    Acol = jnp.asarray(_adaptive_avg_matrix(6, Pw))
    y = jnp.einsum('ri,ncij,qj->ncrq', Arow, y, Acol)
    y = y.reshape(y.shape[0], -1)
    # Dropout is identity at inference.
    h1 = jnp.maximum(y @ w1 + b1.reshape(1, -1), 0.0)
    h2 = jnp.maximum(h1 @ w2 + b2.reshape(1, -1), 0.0)
    return h2 @ w3 + b3.reshape(1, -1)


# ---------------------------------------------------------------------------
# Deterministic parameter init (PyTorch default: U(+-1/sqrt(fan_in)))
# ---------------------------------------------------------------------------
def init_params(key):
    def uniform(k, shape, bound):
        return jax.random.uniform(k, shape, jnp.float32, -bound, bound)

    ks = jax.random.split(key, 8)
    cb = 1.0 / np.sqrt(1 * 2 * 2)                   # Conv2d fan_in = 1*2*2
    wc = uniform(ks[0], (4, 1, 2, 2), cb)
    bc = uniform(ks[1], (4,), cb)
    params = [wc, bc]
    for i, (fin, fout) in enumerate([(4 * 6 * 6, 150), (150, 50), (50, 2)]):
        bound = 1.0 / np.sqrt(fin)
        params.append(uniform(ks[2 + 2 * i], (fin, fout), bound))
        params.append(uniform(ks[3 + 2 * i], (1, fout), bound))
    return tuple(params)


if __name__ == "__main__":
    key = jax.random.PRNGKey(0)
    # [N=16, C=1, 48, 48]: conv 25x25 -> maxpool 12x12 -> avgpool 6x6 -> MLP.
    # With block_batch=8 the grid is (2,) so v7x still splits across both TCs.
    N, H, W = 16, 48, 48
    x = jax.random.normal(jax.random.fold_in(key, 1), (N, 1, H, W), jnp.float32)
    params = init_params(jax.random.fold_in(key, 2))

    out = jax.jit(conv1_forward)(x, params)
    jax.block_until_ready(out)
    assert out.shape == (N, 2), out.shape
    assert bool(jnp.all(jnp.isfinite(out)))

    ref = jax.jit(conv1_reference)(x, params)
    jax.block_until_ready(ref)
    max_err = float(jnp.max(jnp.abs(out - ref)))
    assert max_err < 2e-4, f"mismatch vs reference: {max_err}"

    print("KERNEL_OK")
</pallas_src>

<mosaic_0001>
module attributes {stable_mosaic.version = 11 : i64} {
  func.func @kernel(%arg0: i32, %arg1: memref<384x48xf32, #tpu.memory_space<vmem>>, %arg2: memref<48x256xf32, #tpu.memory_space<vmem>>, %arg3: memref<2x256x384xf32, #tpu.memory_space<vmem>>, %arg4: memref<128x384xf32, #tpu.memory_space<vmem>>, %arg5: memref<288x256xf32, #tpu.memory_space<vmem>>, %arg6: memref<48x96xf32, #tpu.memory_space<vmem>>, %arg7: memref<6x128x150xf32, #tpu.memory_space<vmem>>, %arg8: memref<150x50xf32, #tpu.memory_space<vmem>>, %arg9: memref<50x2xf32, #tpu.memory_space<vmem>>, %arg10: memref<4x256xf32, #tpu.memory_space<vmem>>, %arg11: memref<8x2xf32, #tpu.memory_space<vmem>>) attributes {dimension_semantics = [#tpu.dimension_semantics<parallel>], iteration_bounds = array<i64: 2>, scalar_prefetch = 0 : i64, scratch_operands = 0 : i64, tpu.core_type = #tpu.core_type<tc>, window_params = [{transform_indices = @transform_0, window_bounds = array<i64: 384, 48>}, {pipeline_mode = #tpu.pipeline_mode<synchronous>, transform_indices = @transform_1, window_bounds = array<i64: 48, 256>}, {pipeline_mode = #tpu.pipeline_mode<synchronous>, transform_indices = @transform_2, window_bounds = array<i64: 2, 256, 384>}, {pipeline_mode = #tpu.pipeline_mode<synchronous>, transform_indices = @transform_3, window_bounds = array<i64: 128, 384>}, {pipeline_mode = #tpu.pipeline_mode<synchronous>, transform_indices = @transform_4, window_bounds = array<i64: 288, 256>}, {pipeline_mode = #tpu.pipeline_mode<synchronous>, transform_indices = @transform_5, window_bounds = array<i64: 48, 96>}, {pipeline_mode = #tpu.pipeline_mode<synchronous>, transform_indices = @transform_6, window_bounds = array<i64: 6, 128, 150>}, {pipeline_mode = #tpu.pipeline_mode<synchronous>, transform_indices = @transform_7, window_bounds = array<i64: 150, 50>}, {pipeline_mode = #tpu.pipeline_mode<synchronous>, transform_indices = @transform_8, window_bounds = array<i64: 50, 2>}, {pipeline_mode = #tpu.pipeline_mode<synchronous>, transform_indices = @transform_9, window_bounds = array<i64: 4, 256>}, {transform_indices = @transform_10, window_bounds = array<i64: 8, 2>}]} {
    %c0 = arith.constant 0 : index
    %c0_0 = arith.constant 0 : index
    %0 = vector.load %arg1[%c0, %c0_0] : memref<384x48xf32, #tpu.memory_space<vmem>>, vector<384x48xf32>
    %c0_1 = arith.constant 0 : index
    %c0_2 = arith.constant 0 : index
    %1 = vector.load %arg2[%c0_1, %c0_2] : memref<48x256xf32, #tpu.memory_space<vmem>>, vector<48x256xf32>
    %cst = arith.constant dense<0.000000e+00> : vector<384x256xf32>
    %2 = tpu.matmul %0, %1, %cst {dimension_numbers = #tpu.dot_dimension_numbers<[1], [0], [0], [1], [0, 0, 1, 1], [], []>} : vector<384x48xf32>, vector<48x256xf32>, vector<384x256xf32> -> vector<384x256xf32>
    %c0_3 = arith.constant 0 : index
    %c0_4 = arith.constant 0 : index
    %c0_5 = arith.constant 0 : index
    %3 = vector.load %arg3[%c0_3, %c0_4, %c0_5] : memref<2x256x384xf32, #tpu.memory_space<vmem>>, vector<1x256x384xf32>
    %4 = vector.shape_cast %3 : vector<1x256x384xf32> to vector<256x384xf32>
    %5 = vector.extract_strided_slice %2 {offsets = [0, 0], sizes = [384, 128], strides = [1, 1]} : vector<384x256xf32> to vector<384x128xf32>
    %cst_6 = arith.constant dense<0.000000e+00> : vector<256x128xf32>
    %6 = tpu.matmul %4, %5, %cst_6 {dimension_numbers = #tpu.dot_dimension_numbers<[1], [0], [0], [1], [0, 0, 1, 1], [], []>} : vector<256x384xf32>, vector<384x128xf32>, vector<256x128xf32> -> vector<256x128xf32>
    %c1 = arith.constant 1 : index
    %c0_7 = arith.constant 0 : index
    %c0_8 = arith.constant 0 : index
    %7 = vector.load %arg3[%c1, %c0_7, %c0_8] : memref<2x256x384xf32, #tpu.memory_space<vmem>>, vector<1x256x384xf32>
    %8 = vector.shape_cast %7 : vector<1x256x384xf32> to vector<256x384xf32>
    %9 = vector.extract_strided_slice %2 {offsets = [0, 128], sizes = [384, 128], strides = [1, 1]} : vector<384x256xf32> to vector<384x128xf32>
    %cst_9 = arith.constant dense<0.000000e+00> : vector<256x128xf32>
    %10 = tpu.matmul %8, %9, %cst_9 {dimension_numbers = #tpu.dot_dimension_numbers<[1], [0], [0], [1], [0, 0, 1, 1], [], []>} : vector<256x384xf32>, vector<384x128xf32>, vector<256x128xf32> -> vector<256x128xf32>
    %11 = arith.addf %6, %10 : vector<256x128xf32>
    %c0_10 = arith.constant 0 : index
    %c0_11 = arith.constant 0 : index
    %12 = vector.load %arg10[%c0_10, %c0_11] : memref<4x256xf32, #tpu.memory_space<vmem>>, vector<1x128xf32>
    %13 = vector.broadcast %12 : vector<1x128xf32> to vector<256x128xf32>
    %14 = arith.addf %11, %13 : vector<256x128xf32>
    %cst_12 = arith.constant 0.000000e+00 : f32
    %15 = vector.broadcast %cst_12 : f32 to vector<256x128xf32>
    %16 = arith.maximumf %14, %15 : vector<256x128xf32>
    %c0_13 = arith.constant 0 : index
    %c0_14 = arith.constant 0 : index
    %17 = vector.load %arg4[%c0_13, %c0_14] : memref<128x384xf32, #tpu.memory_space<vmem>>, vector<128x384xf32>
    %cst_15 = arith.constant dense<0.000000e+00> : vector<256x384xf32>
    %18 = tpu.matmul %16, %17, %cst_15 {dimension_numbers = #tpu.dot_dimension_numbers<[1], [0], [0], [1], [0, 0, 1, 1], [], []>} : vector<256x128xf32>, vector<128x384xf32>, vector<256x384xf32> -> vector<256x384xf32>
    %19 = vector.extract_strided_slice %18 {offsets = [0, 0], sizes = [256, 128], strides = [1, 1]} : vector<256x384xf32> to vector<256x128xf32>
    %20 = vector.extract_strided_slice %18 {offsets = [0, 128], sizes = [256, 128], strides = [1, 1]} : vector<256x384xf32> to vector<256x128xf32>
    %21 = arith.maximumf %19, %20 : vector<256x128xf32>
    %22 = vector.extract_strided_slice %18 {offsets = [0, 256], sizes = [256, 128], strides = [1, 1]} : vector<256x384xf32> to vector<256x128xf32>
    %23 = arith.maximumf %21, %22 : vector<256x128xf32>
    %c0_16 = arith.constant 0 : index
    %c0_17 = arith.constant 0 : index
    %24 = vector.load %arg5[%c0_16, %c0_17] : memref<288x256xf32, #tpu.memory_space<vmem>>, vector<288x256xf32>
    %cst_18 = arith.constant dense<0.000000e+00> : vector<288x128xf32>
    %25 = tpu.matmul %24, %23, %cst_18 {dimension_numbers = #tpu.dot_dimension_numbers<[1], [0], [0], [1], [0, 0, 1, 1], [], []>} : vector<288x256xf32>, vector<256x128xf32>, vector<288x128xf32> -> vector<288x128xf32>
    %26 = vector.extract_strided_slice %25 {offsets = [0, 0], sizes = [96, 128], strides = [1, 1]} : vector<288x128xf32> to vector<96x128xf32>
    %27 = vector.extract_strided_slice %25 {offsets = [96, 0], sizes = [96, 128], strides = [1, 1]} : vector<288x128xf32> to vector<96x128xf32>
    %28 = arith.maximumf %26, %27 : vector<96x128xf32>
    %29 = vector.extract_strided_slice %25 {offsets = [192, 0], sizes = [96, 128], strides = [1, 1]} : vector<288x128xf32> to vector<96x128xf32>
    %30 = arith.maximumf %28, %29 : vector<96x128xf32>
    %c0_19 = arith.constant 0 : index
    %c0_20 = arith.constant 0 : index
    %31 = vector.load %arg6[%c0_19, %c0_20] : memref<48x96xf32, #tpu.memory_space<vmem>>, vector<48x96xf32>
    %cst_21 = arith.constant dense<0.000000e+00> : vector<48x128xf32>
    %32 = tpu.matmul %31, %30, %cst_21 {dimension_numbers = #tpu.dot_dimension_numbers<[1], [0], [0], [1], [0, 0, 1, 1], [], []>} : vector<48x96xf32>, vector<96x128xf32>, vector<48x128xf32> -> vector<48x128xf32>
    %c1_22 = arith.constant 1 : index
    %c0_23 = arith.constant 0 : index
    %33 = vector.load %arg10[%c1_22, %c0_23] : memref<4x256xf32, #tpu.memory_space<vmem>>, vector<1x150xf32>
    %34 = vector.extract_strided_slice %32 {offsets = [0, 0], sizes = [8, 128], strides = [1, 1]} : vector<48x128xf32> to vector<8x128xf32>
    %c0_24 = arith.constant 0 : index
    %c0_25 = arith.constant 0 : index
    %c0_26 = arith.constant 0 : index
    %35 = vector.load %arg7[%c0_24, %c0_25, %c0_26] : memref<6x128x150xf32, #tpu.memory_space<vmem>>, vector<1x128x150xf32>
    %36 = vector.shape_cast %35 : vector<1x128x150xf32> to vector<128x150xf32>
    %cst_27 = arith.constant dense<0.000000e+00> : vector<8x150xf32>
    %37 = tpu.matmul %34, %36, %cst_27 {dimension_numbers = #tpu.dot_dimension_numbers<[1], [0], [0], [1], [0, 0, 1, 1], [], []>} : vector<8x128xf32>, vector<128x150xf32>, vector<8x150xf32> -> vector<8x150xf32>
    %38 = vector.broadcast %33 : vector<1x150xf32> to vector<8x150xf32>
    %39 = arith.addf %38, %37 : vector<8x150xf32>
    %40 = vector.extract_strided_slice %32 {offsets = [8, 0], sizes = [8, 128], strides = [1, 1]} : vector<48x128xf32> to vector<8x128xf32>
    %c1_28 = arith.constant 1 : index
    %c0_29 = arith.constant 0 : index
    %c0_30 = arith.constant 0 : index
    %41 = vector.load %arg7[%c1_28, %c0_29, %c0_30] : memref<6x128x150xf32, #tpu.memory_space<vmem>>, vector<1x128x150xf32>
    %42 = vector.shape_cast %41 : vector<1x128x150xf32> to vector<128x150xf32>
    %cst_31 = arith.constant dense<0.000000e+00> : vector<8x150xf32>
    %43 = tpu.matmul %40, %42, %cst_31 {dimension_numbers = #tpu.dot_dimension_numbers<[1], [0], [0], [1], [0, 0, 1, 1], [], []>} : vector<8x128xf32>, vector<128x150xf32>, vector<8x150xf32> -> vector<8x150xf32>
    %44 = arith.addf %39, %43 : vector<8x150xf32>
    %45 = vector.extract_strided_slice %32 {offsets = [16, 0], sizes = [8, 128], strides = [1, 1]} : vector<48x128xf32> to vector<8x128xf32>
    %c2 = arith.constant 2 : index
    %c0_32 = arith.constant 0 : index
    %c0_33 = arith.constant 0 : index
    %46 = vector.load %arg7[%c2, %c0_32, %c0_33] : memref<6x128x150xf32, #tpu.memory_space<vmem>>, vector<1x128x150xf32>
    %47 = vector.shape_cast %46 : vector<1x128x150xf32> to vector<128x150xf32>
    %cst_34 = arith.constant dense<0.000000e+00> : vector<8x150xf32>
    %48 = tpu.matmul %45, %47, %cst_34 {dimension_numbers = #tpu.dot_dimension_numbers<[1], [0], [0], [1], [0, 0, 1, 1], [], []>} : vector<8x128xf32>, vector<128x150xf32>, vector<8x150xf32> -> vector<8x150xf32>
    %49 = arith.addf %44, %48 : vector<8x150xf32>
    %50 = vector.extract_strided_slice %32 {offsets = [24, 0], sizes = [8, 128], strides = [1, 1]} : vector<48x128xf32> to vector<8x128xf32>
    %c3 = arith.constant 3 : index
    %c0_35 = arith.constant 0 : index
    %c0_36 = arith.constant 0 : index
    %51 = vector.load %arg7[%c3, %c0_35, %c0_36] : memref<6x128x150xf32, #tpu.memory_space<vmem>>, vector<1x128x150xf32>
    %52 = vector.shape_cast %51 : vector<1x128x150xf32> to vector<128x150xf32>
    %cst_37 = arith.constant dense<0.000000e+00> : vector<8x150xf32>
    %53 = tpu.matmul %50, %52, %cst_37 {dimension_numbers = #tpu.dot_dimension_numbers<[1], [0], [0], [1], [0, 0, 1, 1], [], []>} : vector<8x128xf32>, vector<128x150xf32>, vector<8x150xf32> -> vector<8x150xf32>
    %54 = arith.addf %49, %53 : vector<8x150xf32>
    %55 = vector.extract_strided_slice %32 {offsets = [32, 0], sizes = [8, 128], strides = [1, 1]} : vector<48x128xf32> to vector<8x128xf32>
    %c4 = arith.constant 4 : index
    %c0_38 = arith.constant 0 : index
    %c0_39 = arith.constant 0 : index
    %56 = vector.load %arg7[%c4, %c0_38, %c0_39] : memref<6x128x150xf32, #tpu.memory_space<vmem>>, vector<1x128x150xf32>
    %57 = vector.shape_cast %56 : vector<1x128x150xf32> to vector<128x150xf32>
    %cst_40 = arith.constant dense<0.000000e+00> : vector<8x150xf32>
    %58 = tpu.matmul %55, %57, %cst_40 {dimension_numbers = #tpu.dot_dimension_numbers<[1], [0], [0], [1], [0, 0, 1, 1], [], []>} : vector<8x128xf32>, vector<128x150xf32>, vector<8x150xf32> -> vector<8x150xf32>
    %59 = arith.addf %54, %58 : vector<8x150xf32>
    %60 = vector.extract_strided_slice %32 {offsets = [40, 0], sizes = [8, 128], strides = [1, 1]} : vector<48x128xf32> to vector<8x128xf32>
    %c5 = arith.constant 5 : index
    %c0_41 = arith.constant 0 : index
    %c0_42 = arith.constant 0 : index
    %61 = vector.load %arg7[%c5, %c0_41, %c0_42] : memref<6x128x150xf32, #tpu.memory_space<vmem>>, vector<1x128x150xf32>
    %62 = vector.shape_cast %61 : vector<1x128x150xf32> to vector<128x150xf32>
    %cst_43 = arith.constant dense<0.000000e+00> : vector<8x150xf32>
    %63 = tpu.matmul %60, %62, %cst_43 {dimension_numbers = #tpu.dot_dimension_numbers<[1], [0], [0], [1], [0, 0, 1, 1], [], []>} : vector<8x128xf32>, vector<128x150xf32>, vector<8x150xf32> -> vector<8x150xf32>
    %64 = arith.addf %59, %63 : vector<8x150xf32>
    %cst_44 = arith.constant 0.000000e+00 : f32
    %65 = vector.broadcast %cst_44 : f32 to vector<8x150xf32>
    %66 = arith.maximumf %64, %65 : vector<8x150xf32>
    %c0_45 = arith.constant 0 : index
    %c0_46 = arith.constant 0 : index
    %67 = vector.load %arg8[%c0_45, %c0_46] : memref<150x50xf32, #tpu.memory_space<vmem>>, vector<150x50xf32>
    %cst_47 = arith.constant dense<0.000000e+00> : vector<8x50xf32>
    %68 = tpu.matmul %66, %67, %cst_47 {dimension_numbers = #tpu.dot_dimension_numbers<[1], [0], [0], [1], [0, 0, 1, 1], [], []>} : vector<8x150xf32>, vector<150x50xf32>, vector<8x50xf32> -> vector<8x50xf32>
    %c2_48 = arith.constant 2 : index
    %c0_49 = arith.constant 0 : index
    %69 = vector.load %arg10[%c2_48, %c0_49] : memref<4x256xf32, #tpu.memory_space<vmem>>, vector<1x50xf32>
    %70 = vector.broadcast %69 : vector<1x50xf32> to vector<8x50xf32>
    %71 = arith.addf %68, %70 : vector<8x50xf32>
    %cst_50 = arith.constant 0.000000e+00 : f32
    %72 = vector.broadcast %cst_50 : f32 to vector<8x50xf32>
    %73 = arith.maximumf %71, %72 : vector<8x50xf32>
    %c0_51 = arith.constant 0 : index
    %c0_52 = arith.constant 0 : index
    %74 = vector.load %arg9[%c0_51, %c0_52] : memref<50x2xf32, #tpu.memory_space<vmem>>, vector<50x2xf32>
    %cst_53 = arith.constant dense<0.000000e+00> : vector<8x2xf32>
    %75 = tpu.matmul %73, %74, %cst_53 {dimension_numbers = #tpu.dot_dimension_numbers<[1], [0], [0], [1], [0, 0, 1, 1], [], []>} : vector<8x50xf32>, vector<50x2xf32>, vector<8x2xf32> -> vector<8x2xf32>
    %c3_54 = arith.constant 3 : index
    %c0_55 = arith.constant 0 : index
    %76 = vector.load %arg10[%c3_54, %c0_55] : memref<4x256xf32, #tpu.memory_space<vmem>>, vector<1x2xf32>
    %77 = vector.broadcast %76 : vector<1x2xf32> to vector<8x2xf32>
    %78 = arith.addf %75, %77 : vector<8x2xf32>
    %c0_56 = arith.constant 0 : index
    %c0_57 = arith.constant 0 : index
    %79 = vector.load %arg11[%c0_56, %c0_57] : memref<8x2xf32, #tpu.memory_space<vmem>>, vector<8x2xf32>
    tpu.vector_store %arg11[%c0_56, %c0_57], %78 {strides = array<i32>} : memref<8x2xf32, #tpu.memory_space<vmem>>, vector<8x2xf32>,
    return
  }
  func.func @transform_0(%arg0: i32) -> (i32, i32) {
    %c0_i32 = arith.constant 0 : i32
    %c0_i32_0 = arith.constant 0 : i32
    return %arg0, %c0_i32 : i32, i32
  }
  func.func @transform_1(%arg0: i32) -> (i32, i32) {
    %c0_i32 = arith.constant 0 : i32
    %c0_i32_0 = arith.constant 0 : i32
    %c0_i32_1 = arith.constant 0 : i32
    return %c0_i32, %c0_i32_0 : i32, i32
  }
  func.func @transform_2(%arg0: i32) -> (i32, i32, i32) {
    %c0_i32 = arith.constant 0 : i32
    %c0_i32_0 = arith.constant 0 : i32
    %c0_i32_1 = arith.constant 0 : i32
    %c0_i32_2 = arith.constant 0 : i32
    return %c0_i32, %c0_i32_0, %c0_i32_1 : i32, i32, i32
  }
  func.func @transform_3(%arg0: i32) -> (i32, i32) {
    %c0_i32 = arith.constant 0 : i32
    %c0_i32_0 = arith.constant 0 : i32
    %c0_i32_1 = arith.constant 0 : i32
    return %c0_i32, %c0_i32_0 : i32, i32
  }
  func.func @transform_4(%arg0: i32) -> (i32, i32) {
    %c0_i32 = arith.constant 0 : i32
    %c0_i32_0 = arith.constant 0 : i32
    %c0_i32_1 = arith.constant 0 : i32
    return %c0_i32, %c0_i32_0 : i32, i32
  }
  func.func @transform_5(%arg0: i32) -> (i32, i32) {
    %c0_i32 = arith.constant 0 : i32
    %c0_i32_0 = arith.constant 0 : i32
    %c0_i32_1 = arith.constant 0 : i32
    return %c0_i32, %c0_i32_0 : i32, i32
  }
  func.func @transform_6(%arg0: i32) -> (i32, i32, i32) {
    %c0_i32 = arith.constant 0 : i32
    %c0_i32_0 = arith.constant 0 : i32
    %c0_i32_1 = arith.constant 0 : i32
    %c0_i32_2 = arith.constant 0 : i32
    return %c0_i32, %c0_i32_0, %c0_i32_1 : i32, i32, i32
  }
  func.func @transform_7(%arg0: i32) -> (i32, i32) {
    %c0_i32 = arith.constant 0 : i32
    %c0_i32_0 = arith.constant 0 : i32
    %c0_i32_1 = arith.constant 0 : i32
    return %c0_i32, %c0_i32_0 : i32, i32
  }
  func.func @transform_8(%arg0: i32) -> (i32, i32) {
    %c0_i32 = arith.constant 0 : i32
    %c0_i32_0 = arith.constant 0 : i32
    %c0_i32_1 = arith.constant 0 : i32
    return %c0_i32, %c0_i32_0 : i32, i32
  }
  func.func @transform_9(%arg0: i32) -> (i32, i32) {
    %c0_i32 = arith.constant 0 : i32
    %c0_i32_0 = arith.constant 0 : i32
    %c0_i32_1 = arith.constant 0 : i32
    return %c0_i32, %c0_i32_0 : i32, i32
  }
  func.func @transform_10(%arg0: i32) -> (i32, i32) {
    %c0_i32 = arith.constant 0 : i32
    %c0_i32_0 = arith.constant 0 : i32
    return %arg0, %c0_i32 : i32, i32
  }
}

</mosaic_0001>

<llo_original>
// kernel: conv1_forward.1
$region0: #{conv1_forward.1}
  #allocation0 [shape = 'u32[]', space=smem, size = 0x4, offset = 0x4, fixed_abs, tag = 'smem constant byte address 0x4 - core index']
  #allocation1 [shape = 'u32[144,128]{1,0:T(1,128)}', space=vmem, size = 0x12000, scoped, tag = 'internal scratch']
  %s0 = inlined_call_operand.vmem [shape: f32[768,48], index: 0, kind: input, shape index: {}]
  %s1 = inlined_call_operand.vmem [shape: f32[48,256], index: 1, kind: input, shape index: {}]
  %s2 = inlined_call_operand.vmem [shape: f32[2,256,384], index: 2, kind: input, shape index: {}]
  %s3 = inlined_call_operand.vmem [shape: f32[128,384], index: 3, kind: input, shape index: {}]
  %s4 = inlined_call_operand.vmem [shape: f32[288,256], index: 4, kind: input, shape index: {}]
  %s5 = inlined_call_operand.vmem [shape: f32[48,96], index: 5, kind: input, shape index: {}]
  %s6 = inlined_call_operand.vmem [shape: f32[6,128,150], index: 6, kind: input, shape index: {}]
  %s7 = inlined_call_operand.vmem [shape: f32[150,50], index: 7, kind: input, shape index: {}]
  %s8 = inlined_call_operand.vmem [shape: f32[50,2], index: 8, kind: input, shape index: {}]
  %s9 = inlined_call_operand.vmem [shape: f32[4,256], index: 9, kind: input, shape index: {}]
  %s10 = inlined_call_operand.vmem [shape: f32[16,2], index: 10, kind: output, shape index: {}]
  %s11 = sld [smem:[#allocation0]]
  $region73: #{conv1_forward.1} parent=0
    _
  %s13 = ssub.s32 1, %s11
  %s14 = scalar_select 0, %s13, %s11
  loop: start=0, step=1, limit=4
  $region2: #{conv1_forward.1} parent=0 // loop_pre_header
    _
  $region3: #{conv1_forward.1} parent=0 // loop_header
    %s16 = sphi 0, %s20
    %p17 = scmp.ge.s32.totalorder %s16, 4
    %s26 = sphi 0, %s28
    %s29 = sphi 0, %s26
    %s30 = sphi 0, %s29
    %s46 = sphi 0, %s30
    %s50 = sphi 0, %s50
    %s52 = sphi 0, %s50
    %s53 = sphi 0, %s52
    %s67 = sphi 0, %s53
    %s71 = sphi 0, %s71
    %s73 = sphi 0, %s71
    %s74 = sphi 0, %s73
    %s88 = sphi 0, %s74
    %s92 = sphi 0, %s92
    %s94 = sphi 0, %s92
    %s95 = sphi 0, %s94
    %s109 = sphi 0, %s95
    %s113 = sphi 0, %s113
    %s115 = sphi 0, %s113
    %s116 = sphi 0, %s115
    %s130 = sphi 0, %s116
    %s134 = sphi 0, %s134
    %s136 = sphi 0, %s134
    %s137 = sphi 0, %s136
    %s151 = sphi 0, %s137
    %s155 = sphi 0, %s155
    %s157 = sphi 0, %s155
    %s158 = sphi 0, %s157
    %s172 = sphi 0, %s158
    %s176 = sphi 0, %s176
    %s178 = sphi 0, %s176
    %s179 = sphi 0, %s178
    %s193 = sphi 0, %s179
    %s197 = sphi 0, %s197
    %s199 = sphi 0, %s197
    %s200 = sphi 0, %s199
    %s214 = sphi 0, %s200
    %s218 = sphi 0, %s218
    %s220 = sphi 0, %s218
    %s221 = sphi 0, %s220
    %s235 = sphi 0, %s221
    %s241 = sphi 0, %s243
    %s244 = sphi 0, %s241
    %s245 = sphi 0, %s244
    %s261 = sphi 0, %s245
  $region4: #{conv1_forward.1} parent=0 // loop_header_branch
    %19 = sbr.rel (%p17) target = $region8
  $region5: #{conv1_forward.1} parent=0 // loop_body
    %s21 = ssub.s32 %s16, 1
    %s22 = ssub.s32 %s16, 2
    %s23 = sadd.s32 %s16, 1
    %s24 = ssub.s32 %s16, %s23
    %p25 = scmp.eq.s32.totalorder %s24, 0
    %s27 = sadd.s32 %s26, 1
    %s28 = scalar_select %p25, %s26, %s27
    %p31 = pneg %p25
    %p32 = scmp.eq.s32.totalorder %s16, 1
    %p33 = por %p31, %p32
    %p34 = scmp.ne.s32.totalorder %s26, %s29
    %p35 = scmp.eq.s32.totalorder %s16, 0
    %p36 = por %p34, %p35
    %p37 = scmp.ne.s32.totalorder %s26, %s29
    %p38 = scmp.eq.s32.totalorder %s21, 1
    %p39 = por %p37, %p38
    %p40 = scmp.ne.s32.totalorder %s29, %s30
    %p41 = scmp.eq.s32.totalorder %s21, 0
    %p42 = por %p40, %p41
    %p43 = scmp.ne.s32.totalorder %s29, %s30
    %p44 = scmp.eq.s32.totalorder %s22, 1
    %p45 = por %p43, %p44
    %p47 = scmp.ne.s32.totalorder %s30, %s46
    %p48 = scmp.eq.s32.totalorder %s22, 0
    %p49 = por %p47, %p48
    %s51 = sadd.s32 %s50, 1
    %p54 = scmp.eq.s32.totalorder %s16, 1
    %p55 = scmp.ne.s32.totalorder %s50, %s52
    %p56 = scmp.eq.s32.totalorder %s16, 0
    %p57 = por %p55, %p56
    %p58 = scmp.ne.s32.totalorder %s50, %s52
    %p59 = scmp.eq.s32.totalorder %s21, 1
    %p60 = por %p58, %p59
    %p61 = scmp.ne.s32.totalorder %s52, %s53
    %p62 = scmp.eq.s32.totalorder %s21, 0
    %p63 = por %p61, %p62
    %p64 = scmp.ne.s32.totalorder %s52, %s53
    %p65 = scmp.eq.s32.totalorder %s22, 1
    %p66 = por %p64, %p65
    %p68 = scmp.ne.s32.totalorder %s53, %s67
    %p69 = scmp.eq.s32.totalorder %s22, 0
    %p70 = por %p68, %p69
    %s72 = sadd.s32 %s71, 1
    %p75 = scmp.eq.s32.totalorder %s16, 1
    %p76 = scmp.ne.s32.totalorder %s71, %s73
    %p77 = scmp.eq.s32.totalorder %s16, 0
    %p78 = por %p76, %p77
    %p79 = scmp.ne.s32.totalorder %s71, %s73
    %p80 = scmp.eq.s32.totalorder %s21, 1
    %p81 = por %p79, %p80
    %p82 = scmp.ne.s32.totalorder %s73, %s74
    %p83 = scmp.eq.s32.totalorder %s21, 0
    %p84 = por %p82, %p83
    %p85 = scmp.ne.s32.totalorder %s73, %s74
    %p86 = scmp.eq.s32.totalorder %s22, 1
    %p87 = por %p85, %p86
    %p89 = scmp.ne.s32.totalorder %s74, %s88
    %p90 = scmp.eq.s32.totalorder %s22, 0
    %p91 = por %p89, %p90
    %s93 = sadd.s32 %s92, 1
    %p96 = scmp.eq.s32.totalorder %s16, 1
    %p97 = scmp.ne.s32.totalorder %s92, %s94
    %p98 = scmp.eq.s32.totalorder %s16, 0
    %p99 = por %p97, %p98
    %p100 = scmp.ne.s32.totalorder %s92, %s94
    %p101 = scmp.eq.s32.totalorder %s21, 1
    %p102 = por %p100, %p101
    %p103 = scmp.ne.s32.totalorder %s94, %s95
    %p104 = scmp.eq.s32.totalorder %s21, 0
    %p105 = por %p103, %p104
    %p106 = scmp.ne.s32.totalorder %s94, %s95
    %p107 = scmp.eq.s32.totalorder %s22, 1
    %p108 = por %p106, %p107
    %p110 = scmp.ne.s32.totalorder %s95, %s109
    %p111 = scmp.eq.s32.totalorder %s22, 0
    %p112 = por %p110, %p111
    %s114 = sadd.s32 %s113, 1
    %p117 = scmp.eq.s32.totalorder %s16, 1
    %p118 = scmp.ne.s32.totalorder %s113, %s115
    %p119 = scmp.eq.s32.totalorder %s16, 0
    %p120 = por %p118, %p119
    %p121 = scmp.ne.s32.totalorder %s113, %s115
    %p122 = scmp.eq.s32.totalorder %s21, 1
    %p123 = por %p121, %p122
    %p124 = scmp.ne.s32.totalorder %s115, %s116
    %p125 = scmp.eq.s32.totalorder %s21, 0
    %p126 = por %p124, %p125
    %p127 = scmp.ne.s32.totalorder %s115, %s116
    %p128 = scmp.eq.s32.totalorder %s22, 1
    %p129 = por %p127, %p128
    %p131 = scmp.ne.s32.totalorder %s116, %s130
    %p132 = scmp.eq.s32.totalorder %s22, 0
    %p133 = por %p131, %p132
    %s135 = sadd.s32 %s134, 1
    %p138 = scmp.eq.s32.totalorder %s16, 1
    %p139 = scmp.ne.s32.totalorder %s134, %s136
    %p140 = scmp.eq.s32.totalorder %s16, 0
    %p141 = por %p139, %p140
    %p142 = scmp.ne.s32.totalorder %s134, %s136
    %p143 = scmp.eq.s32.totalorder %s21, 1
    %p144 = por %p142, %p143
    %p145 = scmp.ne.s32.totalorder %s136, %s137
    %p146 = scmp.eq.s32.totalorder %s21, 0
    %p147 = por %p145, %p146
    %p148 = scmp.ne.s32.totalorder %s136, %s137
    %p149 = scmp.eq.s32.totalorder %s22, 1
    %p150 = por %p148, %p149
    %p152 = scmp.ne.s32.totalorder %s137, %s151
    %p153 = scmp.eq.s32.totalorder %s22, 0
    %p154 = por %p152, %p153
    %s156 = sadd.s32 %s155, 1
    %p159 = scmp.eq.s32.totalorder %s16, 1
    %p160 = scmp.ne.s32.totalorder %s155, %s157
    %p161 = scmp.eq.s32.totalorder %s16, 0
    %p162 = por %p160, %p161
    %p163 = scmp.ne.s32.totalorder %s155, %s157
    %p164 = scmp.eq.s32.totalorder %s21, 1
    %p165 = por %p163, %p164
    %p166 = scmp.ne.s32.totalorder %s157, %s158
    %p167 = scmp.eq.s32.totalorder %s21, 0
    %p168 = por %p166, %p167
    %p169 = scmp.ne.s32.totalorder %s157, %s158
    %p170 = scmp.eq.s32.totalorder %s22, 1
    %p171 = por %p169, %p170
    %p173 = scmp.ne.s32.totalorder %s158, %s172
    %p174 = scmp.eq.s32.totalorder %s22, 0
    %p175 = por %p173, %p174
    %s177 = sadd.s32 %s176, 1
    %p180 = scmp.eq.s32.totalorder %s16, 1
    %p181 = scmp.ne.s32.totalorder %s176, %s178
    %p182 = scmp.eq.s32.totalorder %s16, 0
    %p183 = por %p181, %p182
    %p184 = scmp.ne.s32.totalorder %s176, %s178
    %p185 = scmp.eq.s32.totalorder %s21, 1
    %p186 = por %p184, %p185
    %p187 = scmp.ne.s32.totalorder %s178, %s179
    %p188 = scmp.eq.s32.totalorder %s21, 0
    %p189 = por %p187, %p188
    %p190 = scmp.ne.s32.totalorder %s178, %s179
    %p191 = scmp.eq.s32.totalorder %s22, 1
    %p192 = por %p190, %p191
    %p194 = scmp.ne.s32.totalorder %s179, %s193
    %p195 = scmp.eq.s32.totalorder %s22, 0
    %p196 = por %p194, %p195
    %s198 = sadd.s32 %s197, 1
    %p201 = scmp.eq.s32.totalorder %s16, 1
    %p202 = scmp.ne.s32.totalorder %s197, %s199
    %p203 = scmp.eq.s32.totalorder %s16, 0
    %p204 = por %p202, %p203
    %p205 = scmp.ne.s32.totalorder %s197, %s199
    %p206 = scmp.eq.s32.totalorder %s21, 1
    %p207 = por %p205, %p206
    %p208 = scmp.ne.s32.totalorder %s199, %s200
    %p209 = scmp.eq.s32.totalorder %s21, 0
    %p210 = por %p208, %p209
    %p211 = scmp.ne.s32.totalorder %s199, %s200
    %p212 = scmp.eq.s32.totalorder %s22, 1
    %p213 = por %p211, %p212
    %p215 = scmp.ne.s32.totalorder %s200, %s214
    %p216 = scmp.eq.s32.totalorder %s22, 0
    %p217 = por %p215, %p216
    %s219 = sadd.s32 %s218, 1
    %p222 = scmp.eq.s32.totalorder %s16, 1
    %p223 = scmp.ne.s32.totalorder %s218, %s220
    %p224 = scmp.eq.s32.totalorder %s16, 0
    %p225 = por %p223, %p224
    %p226 = scmp.ne.s32.totalorder %s218, %s220
    %p227 = scmp.eq.s32.totalorder %s21, 1
    %p228 = por %p226, %p227
    %p229 = scmp.ne.s32.totalorder %s220, %s221
    %p230 = scmp.eq.s32.totalorder %s21, 0
    %p231 = por %p229, %p230
    %p232 = scmp.ne.s32.totalorder %s220, %s221
    %p233 = scmp.eq.s32.totalorder %s22, 1
    %p234 = por %p232, %p233
    %p236 = scmp.ne.s32.totalorder %s221, %s235
    %p237 = scmp.eq.s32.totalorder %s22, 0
    %p238 = por %p236, %p237
    %s239 = ssub.s32 %s16, %s23
    %p240 = scmp.eq.s32.totalorder %s239, 0
    %s242 = sadd.s32 %s241, 1
    %s243 = scalar_select %p240, %s241, %s242
    %p246 = pneg %p240
    %p247 = scmp.eq.s32.totalorder %s16, 1
    %p248 = por %p246, %p247
    %p249 = scmp.ne.s32.totalorder %s241, %s244
    %p250 = scmp.eq.s32.totalorder %s16, 0
    %p251 = por %p249, %p250
    %p252 = scmp.ne.s32.totalorder %s241, %s244
    %p253 = scmp.eq.s32.totalorder %s21, 1
    %p254 = por %p252, %p253
    %p255 = scmp.ne.s32.totalorder %s244, %s245
    %p256 = scmp.eq.s32.totalorder %s21, 0
    %p257 = por %p255, %p256
    %p258 = scmp.ne.s32.totalorder %s244, %s245
    %p259 = scmp.eq.s32.totalorder %s22, 1
    %p260 = por %p258, %p259
    %p262 = scmp.ne.s32.totalorder %s245, %s261
    %p263 = scmp.eq.s32.totalorder %s22, 0
    %p264 = por %p262, %p263
    %p265 = scmp.le.s32.totalorder 1, %s16
    %p266 = scmp.lt.s32.totalorder %s16, 3
    %p267 = pnand %p265, %p266
    %p268 = pneg %p267
    // Predicated region
    $region9: #{conv1_forward.1} parent=5 // pred_check
      _
    $region10: #{conv1_forward.1} parent=5 // pred_check_branch
      %270 = sbr.rel (%p267) target = $region12
    $region11: #{conv1_forward.1} parent=5 // pred_region
      %s271 = ssub.s32 %s16, 1
      // Predicated region
      $region13: #{conv1_forward.1} parent=11 // pred_check
        %p272 = pneg %p63
      $region14: #{conv1_forward.1} parent=11 // pred_check_branch
        %274 = sbr.rel (%p272) target = $region16
      $region15: #{conv1_forward.1} parent=11 // pred_region
        _
      $region16: #{conv1_forward.1} parent=11 // pred_fallthru
        _
      // Predicated region
      $region17: #{conv1_forward.1} parent=11 // pred_check
        %p275 = pneg %p84
      $region18: #{conv1_forward.1} parent=11 // pred_check_branch
        %277 = sbr.rel (%p275) target = $region20
      $region19: #{conv1_forward.1} parent=11 // pred_region
        _
      $region20: #{conv1_forward.1} parent=11 // pred_fallthru
        _
      // Predicated region
      $region21: #{conv1_forward.1} parent=11 // pred_check
        %p278 = pneg %p105
      $region22: #{conv1_forward.1} parent=11 // pred_check_branch
        %280 = sbr.rel (%p278) target = $region24
      $region23: #{conv1_forward.1} parent=11 // pred_region
        _
      $region24: #{conv1_forward.1} parent=11 // pred_fallthru
        _
      // Predicated region
      $region25: #{conv1_forward.1} parent=11 // pred_check
        %p281 = pneg %p126
      $region26: #{conv1_forward.1} parent=11 // pred_check_branch
        %283 = sbr.rel (%p281) target = $region28
      $region27: #{conv1_forward.1} parent=11 // pred_region
        _
      $region28: #{conv1_forward.1} parent=11 // pred_fallthru
        _
      // Predicated region
      $region29: #{conv1_forward.1} parent=11 // pred_check
        %p284 = pneg %p147
      $region30: #{conv1_forward.1} parent=11 // pred_check_branch
        %286 = sbr.rel (%p284) target = $region32
      $region31: #{conv1_forward.1} parent=11 // pred_region
        _
      $region32: #{conv1_forward.1} parent=11 // pred_fallthru
        _
      // Predicated region
      $region33: #{conv1_forward.1} parent=11 // pred_check
        %p287 = pneg %p168
      $region34: #{conv1_forward.1} parent=11 // pred_check_branch
        %289 = sbr.rel (%p287) target = $region36
      $region35: #{conv1_forward.1} parent=11 // pred_region
        _
      $region36: #{conv1_forward.1} parent=11 // pred_fallthru
        _
      // Predicated region
      $region37: #{conv1_forward.1} parent=11 // pred_check
        %p290 = pneg %p189
      $region38: #{conv1_forward.1} parent=11 // pred_check_branch
        %292 = sbr.rel (%p290) target = $region40
      $region39: #{conv1_forward.1} parent=11 // pred_region
        _
      $region40: #{conv1_forward.1} parent=11 // pred_fallthru
        _
      // Predicated region
      $region41: #{conv1_forward.1} parent=11 // pred_check
        %p293 = pneg %p210
      $region42: #{conv1_forward.1} parent=11 // pred_check_branch
        %295 = sbr.rel (%p293) target = $region44
      $region43: #{conv1_forward.1} parent=11 // pred_region
        _
      $region44: #{conv1_forward.1} parent=11 // pred_fallthru
        _
      // Predicated region
      $region45: #{conv1_forward.1} parent=11 // pred_check
        %p296 = pneg %p231
      $region46: #{conv1_forward.1} parent=11 // pred_check_branch
        %298 = sbr.rel (%p296) target = $region48
      $region47: #{conv1_forward.1} parent=11 // pred_region
        _
      $region48: #{conv1_forward.1} parent=11 // pred_fallthru
        _
    $region12: #{conv1_forward.1} parent=5 // pred_fallthru
      _
    %p299 = scmp.lt.s32.totalorder %s16, 2
    // Predicated region
    $region49: #{conv1_forward.1} parent=5 // pred_check
      %p300 = pneg %p299
    $region50: #{conv1_forward.1} parent=5 // pred_check_branch
      %302 = sbr.rel (%p300) target = $region52
    $region51: #{conv1_forward.1} parent=5 // pred_region
      // Predicated region
      $region53: #{conv1_forward.1} parent=51 // pred_check
        %p303 = pneg %p36
      $region54: #{conv1_forward.1} parent=51 // pred_check_branch
        %305 = sbr.rel (%p303) target = $region56
      $region55: #{conv1_forward.1} parent=51 // pred_region
        %s306 = smul.u32 48, %s16
        %p307 = scmp.lt.s32.totalorder %s306, 95
        %s308 = scalar_select %p307, %s306, 95
        %s309 = smul.addr %s308, 8
        %s310 = scalar_lea.vmem %s0, %s309
        %s311 = smul.u32 48, %s16
      $region56: #{conv1_forward.1} parent=51 // pred_fallthru
        _
    $region52: #{conv1_forward.1} parent=5 // pred_fallthru
      _
    %p312 = scmp.le.s32.totalorder 1, %s16
    %p313 = scmp.lt.s32.totalorder %s16, 3
    %p314 = pnand %p312, %p313
    %p315 = pneg %p314
    // Predicated region
    $region57: #{conv1_forward.1} parent=5 // pred_check
      _
    $region58: #{conv1_forward.1} parent=5 // pred_check_branch
      %317 = sbr.rel (%p314) target = $region60
    $region59: #{conv1_forward.1} parent=5 // pred_region
      %s318 = ssub.s32 %s16, 1
      %s319 = smul.u32 48, %s21
      %p320 = scmp.lt.s32.totalorder %s319, 95
      %s321 = scalar_select %p320, %s319, 95
      %s322 = smul.addr %s321, 8
      %s323 = scalar_lea.vmem %s0, %s322
      %p324 = pneg %p42
      %p325 = pneg %p39
      %p326 = pneg %p63
      %p327 = pneg %p60
      %p328 = pneg %p84
      %p329 = pneg %p81
      %p330 = pneg %p105
      %p331 = pneg %p102
      %p332 = pneg %p126
      %p333 = pneg %p123
      %p334 = pneg %p147
      %p335 = pneg %p144
      %p336 = pneg %p168
      %p337 = pneg %p165
      %p338 = pneg %p189
      %p339 = pneg %p186
      %p340 = pneg %p210
      %p341 = pneg %p207
      %p342 = pneg %p231
      %p343 = pneg %p228
      %p344 = pneg %p257
      %p345 = pneg %p254
      %p346 = scmp.lt.s32.totalorder %s21, 1
      %s347 = scalar_select %p346, %s21, 1
      %s348 = smul.addr %s347, 8
      %s349 = scalar_lea.vmem %s10, %s348
      %s350 = smul.u32 48, %s21
      %p351 = scmp.lt.s32.totalorder %s350, 95
      %s352 = scalar_select %p351, %s350, 95
      %s353 = smul.addr %s352, 8
      %s354 = scalar_lea.vmem %s0, %s353
      %s355 = smul.u32 48, %s21
      %p356 = scmp.lt.s32.totalorder %s21, 1
      %s357 = scalar_select %p356, %s21, 1
      %s358 = smul.addr %s357, 8
      %s359 = scalar_lea.vmem %s10, %s358
      %v360 = vld [vmem:[%s354] sm:$0xff]
      %v361 = vld [vmem:[%s354 + $0x8] sm:$0xff]
      %v362 = vld [vmem:[%s354 + $0x10] sm:$0xff]
      %v363 = vld [vmem:[%s354 + $0x18] sm:$0xff]
      %v364 = vld [vmem:[%s354 + $0x20] sm:$0xff]
      %v365 = vld [vmem:[%s354 + $0x28] sm:$0xff]
      %v366 = vld [vmem:[%s354 + $0x30] sm:$0xff]
      %v367 = vld [vmem:[%s354 + $0x38] sm:$0xff]
      %v368 = vld [vmem:[%s354 + $0x40] sm:$0xff]
      %v369 = vld [vmem:[%s354 + $0x48] sm:$0xff]
      %v370 = vld [vmem:[%s354 + $0x50] sm:$0xff]
      %v371 = vld [vmem:[%s354 + $0x58] sm:$0xff]
      %v372 = vld [vmem:[%s354 + $0x60] sm:$0xff]
      %v373 = vld [vmem:[%s354 + $0x68] sm:$0xff]
      %v374 = vld [vmem:[%s354 + $0x70] sm:$0xff]
      %v375 = vld [vmem:[%s354 + $0x78] sm:$0xff]
      %v376 = vld [vmem:[%s354 + $0x80] sm:$0xff]
      %v377 = vld [vmem:[%s354 + $0x88] sm:$0xff]
      %v378 = vld [vmem:[%s354 + $0x90] sm:$0xff]
      %v379 = vld [vmem:[%s354 + $0x98] sm:$0xff]
      %v380 = vld [vmem:[%s354 + $0xa0] sm:$0xff]
      %v381 = vld [vmem:[%s354 + $0xa8] sm:$0xff]
      %v382 = vld [vmem:[%s354 + $0xb0] sm:$0xff]
      %v383 = vld [vmem:[%s354 + $0xb8] sm:$0xff]
      %v384 = vld [vmem:[%s354 + $0xc0] sm:$0xff]
      %v385 = vld [vmem:[%s354 + $0xc8] sm:$0xff]
      %v386 = vld [vmem:[%s354 + $0xd0] sm:$0xff]
      %v387 = vld [vmem:[%s354 + $0xd8] sm:$0xff]
      %v388 = vld [vmem:[%s354 + $0xe0] sm:$0xff]
      %v389 = vld [vmem:[%s354 + $0xe8] sm:$0xff]
      %v390 = vld [vmem:[%s354 + $0xf0] sm:$0xff]
      %v391 = vld [vmem:[%s354 + $0xf8] sm:$0xff]
      %v392 = vld [vmem:[%s354 + $0x100] sm:$0xff]
      %v393 = vld [vmem:[%s354 + $0x108] sm:$0xff]
      %v394 = vld [vmem:[%s354 + $0x110] sm:$0xff]
      %v395 = vld [vmem:[%s354 + $0x118] sm:$0xff]
      %v396 = vld [vmem:[%s354 + $0x120] sm:$0xff]
      %v397 = vld [vmem:[%s354 + $0x128] sm:$0xff]
      %v398 = vld [vmem:[%s354 + $0x130] sm:$0xff]
      %v399 = vld [vmem:[%s354 + $0x138] sm:$0xff]
      %v400 = vld [vmem:[%s354 + $0x140] sm:$0xff]
      %v401 = vld [vmem:[%s354 + $0x148] sm:$0xff]
      %v402 = vld [vmem:[%s354 + $0x150] sm:$0xff]
      %v403 = vld [vmem:[%s354 + $0x158] sm:$0xff]
      %v404 = vld [vmem:[%s354 + $0x160] sm:$0xff]
      %v405 = vld [vmem:[%s354 + $0x168] sm:$0xff]
      %v406 = vld [vmem:[%s354 + $0x170] sm:$0xff]
      %v407 = vld [vmem:[%s354 + $0x178] sm:$0xff]
      %v408 = vld [vmem:[%s1] sm:$0xff]
      %v409 = vld [vmem:[%s1 + $0x8] sm:$0xff]
      %v410 = vld [vmem:[%s1 + $0x10] sm:$0xff]
      %v411 = vld [vmem:[%s1 + $0x18] sm:$0xff]
      %v412 = vld [vmem:[%s1 + $0x20] sm:$0xff]
      %v413 = vld [vmem:[%s1 + $0x28] sm:$0xff]
      %v414 = vld [vmem:[%s1 + $0x30] sm:$0xff]
      %v415 = vld [vmem:[%s1 + $0x38] sm:$0xff]
      %v416 = vld [vmem:[%s1 + $0x40] sm:$0xff]
      %v417 = vld [vmem:[%s1 + $0x48] sm:$0xff]
      %v418 = vld [vmem:[%s1 + $0x50] sm:$0xff]
      %v419 = vld [vmem:[%s1 + $0x58] sm:$0xff]
      %vm420 = vcmask 392192
      %v422 = vsel %vm420, %v360, 0
      %v425 = vsel %vm420, %v361, 0
      %v428 = vsel %vm420, %v362, 0
      %v431 = vsel %vm420, %v363, 0
      %v434 = vsel %vm420, %v364, 0
      %v437 = vsel %vm420, %v365, 0
      %v440 = vsel %vm420, %v366, 0
      %v443 = vsel %vm420, %v367, 0
      %v446 = vsel %vm420, %v368, 0
      %v449 = vsel %vm420, %v369, 0
      %v452 = vsel %vm420, %v370, 0
      %v455 = vsel %vm420, %v371, 0
      %v458 = vsel %vm420, %v372, 0
      %v461 = vsel %vm420, %v373, 0
      %v464 = vsel %vm420, %v374, 0
      %v467 = vsel %vm420, %v375, 0
      %v470 = vsel %vm420, %v376, 0
      %v473 = vsel %vm420, %v377, 0
      %v476 = vsel %vm420, %v378, 0
      %v479 = vsel %vm420, %v379, 0
      %v482 = vsel %vm420, %v380, 0
      %v485 = vsel %vm420, %v381, 0
      %v488 = vsel %vm420, %v382, 0
      %v491 = vsel %vm420, %v383, 0
      %v494 = vsel %vm420, %v384, 0
      %v497 = vsel %vm420, %v385, 0
      %v500 = vsel %vm420, %v386, 0
      %v503 = vsel %vm420, %v387, 0
      %v506 = vsel %vm420, %v388, 0
      %v509 = vsel %vm420, %v389, 0
      %v512 = vsel %vm420, %v390, 0
      %v515 = vsel %vm420, %v391, 0
      %v518 = vsel %vm420, %v392, 0
      %v521 = vsel %vm420, %v393, 0
      %v524 = vsel %vm420, %v394, 0
      %v527 = vsel %vm420, %v395, 0
      %v530 = vsel %vm420, %v396, 0
      %v533 = vsel %vm420, %v397, 0
      %v536 = vsel %vm420, %v398, 0
      %v539 = vsel %vm420, %v399, 0
      %v542 = vsel %vm420, %v400, 0
      %v545 = vsel %vm420, %v401, 0
      %v548 = vsel %vm420, %v402, 0
      %v551 = vsel %vm420, %v403, 0
      %v554 = vsel %vm420, %v404, 0
      %v557 = vsel %vm420, %v405, 0
      %v560 = vsel %vm420, %v406, 0
      %v563 = vsel %vm420, %v407, 0
      %565 = vmatprep.subr.mxu0 %v409
      %566 = vmatpush1.msra.mxu0 %v408
      %567 = vmatprep.subr.mxu0 %v411
      %568 = vmatpush1.msra.mxu0 %v410
      %569 = vmatprep.subr.mxu0 %v413
      %570 = vmatpush1.msra.mxu0 %v412
      %571 = vmatprep.subr.mxu0 %v415
      %572 = vmatpush1.msra.mxu0 %v414
      %573 = vmatprep.subr.mxu0 %v417
      %574 = vmatpush1.msra.mxu0 %v416
      %575 = vmatprep.subr.mxu0 %v419
      %576 = vmatpush1.msra.mxu0 %v418
      %577 = vmatprep.subr.mxu0 0.0
      %578 = vmatpush1.msra.mxu0 0.0
      %579 = vmatprep.subr.mxu0 0.0
      %580 = vmatpush1.msra.mxu0 0.0
      %581 = vmatprep.subr.mxu0 0.0
      %582 = vmatpush1.msra.mxu0 0.0
      %583 = vmatprep.subr.mxu0 0.0
      %584 = vmatpush1.msra.mxu0 0.0
      %585 = vmatprep.subr.mxu0 0.0
      %586 = vmatpush1.msra.mxu0 0.0
      %587 = vmatprep.subr.mxu0 0.0
      %588 = vmatpush1.msra.mxu0 0.0
      %589 = vmatprep.subr.mxu0 0.0
      %590 = vmatpush1.msra.mxu0 0.0
      %591 = vmatprep.subr.mxu0 0.0
      %592 = vmatpush1.msra.mxu0 0.0
      %593 = vmatprep.subr.mxu0 0.0
      %594 = vmatpush1.msra.mxu0 0.0
      %595 = vmatprep.subr.mxu0 0.0
      %596 = vmatpush1.msra.mxu0 0.0
      %597 = vmatprep.subr.mxu0 0.0
      %598 = vmatpush1.msra.mxu0 0.0
      %599 = vmatprep.subr.mxu0 0.0
      %600 = vmatpush1.msra.mxu0 0.0
      %601 = vmatprep.subr.mxu0 0.0
      %602 = vmatpush1.msra.mxu0 0.0
      %603 = vmatprep.subr.mxu0 0.0
      %604 = vmatpush1.msra.mxu0 0.0
      %605 = vmatprep.subr.mxu0 0.0
      %606 = vmatpush1.msra.mxu0 0.0
      %607 = vmatprep.subr.mxu0 0.0
      %608 = vmatpush1.msra.mxu0 0.0
      %609 = vmatprep.subr.mxu0 0.0
      %610 = vmatpush1.msra.mxu0 0.0
      %611 = vmatprep.subr.mxu0 0.0
      %612 = vmatpush1.msra.mxu0 0.0
      %613 = vmatprep.subr.mxu0 0.0
      %614 = vmatpush1.msra.mxu0 0.0
      %615 = vmatprep.subr.mxu0 0.0
      %616 = vmatpush1.msra.mxu0 0.0
      %617 = vmatprep.subr.mxu0 0.0
      %618 = vmatpush1.msra.mxu0 0.0
      %619 = vmatprep.subr.mxu0 0.0
      %620 = vmatpush1.msra.mxu0 0.0
      %621 = vmatprep.subr.mxu0 0.0
      %622 = vmatpush1.msra.mxu0 0.0
      %623 = vmatprep.subr.mxu0 0.0
      %624 = vmatpush1.msra.mxu0 0.0
      %625 = vmatprep.subr.mxu0 0.0
      %626 = vmatpush1.msra.mxu0 0.0
      %627 = vmatprep.subr.mxu0 0.0
      %628 = vmatpush1.msra.mxu0 0.0
      %629 = vmatprep.mubr.f32.mxu0 0.0
      %630 = vmatmul.mubr.f32.gmra.mrb[0].mxu0 %v422
      %v631 = vpop.f32.mrb[0].mxu0
      %v632 = vadd.f32 0.0, %v631
      %v633 = vpop.f32.mrb[0].mxu0
      %v634 = vadd.f32 0.0, %v633
      %635 = vmatprep.mubr.f32.mxu0 0.0
      %636 = vmatmul.mubr.f32.gmra.mrb[0].mxu0 %v425
      %v637 = vpop.f32.mrb[0].mxu0
      %v638 = vadd.f32 0.0, %v637
      %v639 = vpop.f32.mrb[0].mxu0
      %v640 = vadd.f32 0.0, %v639
      %641 = vmatprep.mubr.f32.mxu0 0.0
      %642 = vmatmul.mubr.f32.gmra.mrb[0].mxu0 %v428
      %v643 = vpop.f32.mrb[0].mxu0
      %v644 = vadd.f32 0.0, %v643
      %v645 = vpop.f32.mrb[0].mxu0
      %v646 = vadd.f32 0.0, %v645
      %647 = vmatprep.mubr.f32.mxu0 0.0
      %648 = vmatmul.mubr.f32.gmra.mrb[0].mxu0 %v431
      %v649 = vpop.f32.mrb[0].mxu0
      %v650 = vadd.f32 0.0, %v649
      %v651 = vpop.f32.mrb[0].mxu0
      %v652 = vadd.f32 0.0, %v651
      %653 = vmatprep.mubr.f32.mxu0 0.0
      %654 = vmatmul.mubr.f32.gmra.mrb[0].mxu0 %v434
      %v655 = vpop.f32.mrb[0].mxu0
      %v656 = vadd.f32 0.0, %v655
      %v657 = vpop.f32.mrb[0].mxu0
      %v658 = vadd.f32 0.0, %v657
      %659 = vmatprep.mubr.f32.mxu0 0.0
      %660 = vmatmul.mubr.f32.gmra.mrb[0].mxu0 %v437
      %v661 = vpop.f32.mrb[0].mxu0
      %v662 = vadd.f32 0.0, %v661
      %v663 = vpop.f32.mrb[0].mxu0
      %v664 = vadd.f32 0.0, %v663
      %665 = vmatprep.mubr.f32.mxu0 0.0
      %666 = vmatmul.mubr.f32.gmra.mrb[0].mxu0 %v440
      %v667 = vpop.f32.mrb[0].mxu0
      %v668 = vadd.f32 0.0, %v667
      %v669 = vpop.f32.mrb[0].mxu0
      %v670 = vadd.f32 0.0, %v669
      %671 = vmatprep.mubr.f32.mxu0 0.0
      %672 = vmatmul.mubr.f32.gmra.mrb[0].mxu0 %v443
      %v673 = vpop.f32.mrb[0].mxu0
      %v674 = vadd.f32 0.0, %v673
      %v675 = vpop.f32.mrb[0].mxu0
      %v676 = vadd.f32 0.0, %v675
      %677 = vmatprep.mubr.f32.mxu0 0.0
      %678 = vmatmul.mubr.f32.gmra.mrb[0].mxu0 %v446
      %v679 = vpop.f32.mrb[0].mxu0
      %v680 = vadd.f32 0.0, %v679
      %v681 = vpop.f32.mrb[0].mxu0
      %v682 = vadd.f32 0.0, %v681
      %683 = vmatprep.mubr.f32.mxu0 0.0
      %684 = vmatmul.mubr.f32.gmra.mrb[0].mxu0 %v449
      %v685 = vpop.f32.mrb[0].mxu0
      %v686 = vadd.f32 0.0, %v685
      %v687 = vpop.f32.mrb[0].mxu0
      %v688 = vadd.f32 0.0, %v687
      %689 = vmatprep.mubr.f32.mxu0 0.0
      %690 = vmatmul.mubr.f32.gmra.mrb[0].mxu0 %v452
      %v691 = vpop.f32.mrb[0].mxu0
      %v692 = vadd.f32 0.0, %v691
      %v693 = vpop.f32.mrb[0].mxu0
      %v694 = vadd.f32 0.0, %v693
      %695 = vmatprep.mubr.f32.mxu0 0.0
      %696 = vmatmul.mubr.f32.gmra.mrb[0].mxu0 %v455
      %v697 = vpop.f32.mrb[0].mxu0
      %v698 = vadd.f32 0.0, %v697
      %v699 = vpop.f32.mrb[0].mxu0
      %v700 = vadd.f32 0.0, %v699
      %701 = vmatprep.mubr.f32.mxu0 0.0
      %702 = vmatmul.mubr.f32.gmra.mrb[0].mxu0 %v458
      %v703 = vpop.f32.mrb[0].mxu0
      %v704 = vadd.f32 0.0, %v703
      %v705 = vpop.f32.mrb[0].mxu0
      %v706 = vadd.f32 0.0, %v705
      %707 = vmatprep.mubr.f32.mxu0 0.0
      %708 = vmatmul.mubr.f32.gmra.mrb[0].mxu0 %v461
      %v709 = vpop.f32.mrb[0].mxu0
      %v710 = vadd.f32 0.0, %v709
      %v711 = vpop.f32.mrb[0].mxu0
      %v712 = vadd.f32 0.0, %v711
      %713 = vmatprep.mubr.f32.mxu0 0.0
      %714 = vmatmul.mubr.f32.gmra.mrb[0].mxu0 %v464
      %v715 = vpop.f32.mrb[0].mxu0
      %v716 = vadd.f32 0.0, %v715
      %v717 = vpop.f32.mrb[0].mxu0
      %v718 = vadd.f32 0.0, %v717
      %719 = vmatprep.mubr.f32.mxu0 0.0
      %720 = vmatmul.mubr.f32.gmra.mrb[0].mxu0 %v467
      %v721 = vpop.f32.mrb[0].mxu0
      %v722 = vadd.f32 0.0, %v721
      %v723 = vpop.f32.mrb[0].mxu0
      %v724 = vadd.f32 0.0, %v723
      %725 = vmatprep.mubr.f32.mxu0 0.0
      %726 = vmatmul.mubr.f32.gmra.mrb[0].mxu0 %v470
      %v727 = vpop.f32.mrb[0].mxu0
      %v728 = vadd.f32 0.0, %v727
      %v729 = vpop.f32.mrb[0].mxu0
      %v730 = vadd.f32 0.0, %v729
      %731 = vmatprep.mubr.f32.mxu0 0.0
      %732 = vmatmul.mubr.f32.gmra.mrb[0].mxu0 %v473
      %v733 = vpop.f32.mrb[0].mxu0
      %v734 = vadd.f32 0.0, %v733
      %v735 = vpop.f32.mrb[0].mxu0
      %v736 = vadd.f32 0.0, %v735
      %737 = vmatprep.mubr.f32.mxu0 0.0
      %738 = vmatmul.mubr.f32.gmra.mrb[0].mxu0 %v476
      %v739 = vpop.f32.mrb[0].mxu0
      %v740 = vadd.f32 0.0, %v739
      %v741 = vpop.f32.mrb[0].mxu0
      %v742 = vadd.f32 0.0, %v741
      %743 = vmatprep.mubr.f32.mxu0 0.0
      %744 = vmatmul.mubr.f32.gmra.mrb[0].mxu0 %v479
      %v745 = vpop.f32.mrb[0].mxu0
      %v746 = vadd.f32 0.0, %v745
      %v747 = vpop.f32.mrb[0].mxu0
      %v748 = vadd.f32 0.0, %v747
      %749 = vmatprep.mubr.f32.mxu0 0.0
      %750 = vmatmul.mubr.f32.gmra.mrb[0].mxu0 %v482
      %v751 = vpop.f32.mrb[0].mxu0
      %v752 = vadd.f32 0.0, %v751
      %v753 = vpop.f32.mrb[0].mxu0
      %v754 = vadd.f32 0.0, %v753
      %755 = vmatprep.mubr.f32.mxu0 0.0
      %756 = vmatmul.mubr.f32.gmra.mrb[0].mxu0 %v485
      %v757 = vpop.f32.mrb[0].mxu0
      %v758 = vadd.f32 0.0, %v757
      %v759 = vpop.f32.mrb[0].mxu0
      %v760 = vadd.f32 0.0, %v759
      %761 = vmatprep.mubr.f32.mxu0 0.0
      %762 = vmatmul.mubr.f32.gmra.mrb[0].mxu0 %v488
      %v763 = vpop.f32.mrb[0].mxu0
      %v764 = vadd.f32 0.0, %v763
      %v765 = vpop.f32.mrb[0].mxu0
      %v766 = vadd.f32 0.0, %v765
      %767 = vmatprep.mubr.f32.mxu0 0.0
      %768 = vmatmul.mubr.f32.gmra.mrb[0].mxu0 %v491
      %v769 = vpop.f32.mrb[0].mxu0
      %v770 = vadd.f32 0.0, %v769
      %v771 = vpop.f32.mrb[0].mxu0
      %v772 = vadd.f32 0.0, %v771
      %773 = vmatprep.mubr.f32.mxu0 0.0
      %774 = vmatmul.mubr.f32.gmra.mrb[0].mxu0 %v494
      %v775 = vpop.f32.mrb[0].mxu0
      %v776 = vadd.f32 0.0, %v775
      %v777 = vpop.f32.mrb[0].mxu0
      %v778 = vadd.f32 0.0, %v777
      %779 = vmatprep.mubr.f32.mxu0 0.0
      %780 = vmatmul.mubr.f32.gmra.mrb[0].mxu0 %v497
      %v781 = vpop.f32.mrb[0].mxu0
      %v782 = vadd.f32 0.0, %v781
      %v783 = vpop.f32.mrb[0].mxu0
      %v784 = vadd.f32 0.0, %v783
      %785 = vmatprep.mubr.f32.mxu0 0.0
      %786 = vmatmul.mubr.f32.gmra.mrb[0].mxu0 %v500
      %v787 = vpop.f32.mrb[0].mxu0
      %v788 = vadd.f32 0.0, %v787
      %v789 = vpop.f32.mrb[0].mxu0
      %v790 = vadd.f32 0.0, %v789
      %791 = vmatprep.mubr.f32.mxu0 0.0
      %792 = vmatmul.mubr.f32.gmra.mrb[0].mxu0 %v503
      %v793 = vpop.f32.mrb[0].mxu0
      %v794 = vadd.f32 0.0, %v793
      %v795 = vpop.f32.mrb[0].mxu0
      %v796 = vadd.f32 0.0, %v795
      %797 = vmatprep.mubr.f32.mxu0 0.0
      %798 = vmatmul.mubr.f32.gmra.mrb[0].mxu0 %v506
      %v799 = vpop.f32.mrb[0].mxu0
      %v800 = vadd.f32 0.0, %v799
      %v801 = vpop.f32.mrb[0].mxu0
      %v802 = vadd.f32 0.0, %v801
      %803 = vmatprep.mubr.f32.mxu0 0.0
      %804 = vmatmul.mubr.f32.gmra.mrb[0].mxu0 %v509
      %v805 = vpop.f32.mrb[0].mxu0
      %v806 = vadd.f32 0.0, %v805
      %v807 = vpop.f32.mrb[0].mxu0
      %v808 = vadd.f32 0.0, %v807
      %809 = vmatprep.mubr.f32.mxu0 0.0
      %810 = vmatmul.mubr.f32.gmra.mrb[0].mxu0 %v512
      %v811 = vpop.f32.mrb[0].mxu0
      %v812 = vadd.f32 0.0, %v811
      %v813 = vpop.f32.mrb[0].mxu0
      %v814 = vadd.f32 0.0, %v813
      %815 = vmatprep.mubr.f32.mxu0 0.0
      %816 = vmatmul.mubr.f32.gmra.mrb[0].mxu0 %v515
      %v817 = vpop.f32.mrb[0].mxu0
      %v818 = vadd.f32 0.0, %v817
      %v819 = vpop.f32.mrb[0].mxu0
      %v820 = vadd.f32 0.0, %v819
      %821 = vmatprep.mubr.f32.mxu0 0.0
      %822 = vmatmul.mubr.f32.gmra.mrb[0].mxu0 %v518
      %v823 = vpop.f32.mrb[0].mxu0
      %v824 = vadd.f32 0.0, %v823
      %v825 = vpop.f32.mrb[0].mxu0
      %v826 = vadd.f32 0.0, %v825
      %827 = vmatprep.mubr.f32.mxu0 0.0
      %828 = vmatmul.mubr.f32.gmra.mrb[0].mxu0 %v521
      %v829 = vpop.f32.mrb[0].mxu0
      %v830 = vadd.f32 0.0, %v829
      %v831 = vpop.f32.mrb[0].mxu0
      %v832 = vadd.f32 0.0, %v831
      %833 = vmatprep.mubr.f32.mxu0 0.0
      %834 = vmatmul.mubr.f32.gmra.mrb[0].mxu0 %v524
      %v835 = vpop.f32.mrb[0].mxu0
      %v836 = vadd.f32 0.0, %v835
      %v837 = vpop.f32.mrb[0].mxu0
      %v838 = vadd.f32 0.0, %v837
      %839 = vmatprep.mubr.f32.mxu0 0.0
      %840 = vmatmul.mubr.f32.gmra.mrb[0].mxu0 %v527
      %v841 = vpop.f32.mrb[0].mxu0
      %v842 = vadd.f32 0.0, %v841
      %v843 = vpop.f32.mrb[0].mxu0
      %v844 = vadd.f32 0.0, %v843
      %845 = vmatprep.mubr.f32.mxu0 0.0
      %846 = vmatmul.mubr.f32.gmra.mrb[0].mxu0 %v530
      %v847 = vpop.f32.mrb[0].mxu0
      %v848 = vadd.f32 0.0, %v847
      %v849 = vpop.f32.mrb[0].mxu0
      %v850 = vadd.f32 0.0, %v849
      %851 = vmatprep.mubr.f32.mxu0 0.0
      %852 = vmatmul.mubr.f32.gmra.mrb[0].mxu0 %v533
      %v853 = vpop.f32.mrb[0].mxu0
      %v854 = vadd.f32 0.0, %v853
      %v855 = vpop.f32.mrb[0].mxu0
      %v856 = vadd.f32 0.0, %v855
      %857 = vmatprep.mubr.f32.mxu0 0.0
      %858 = vmatmul.mubr.f32.gmra.mrb[0].mxu0 %v536
      %v859 = vpop.f32.mrb[0].mxu0
      %v860 = vadd.f32 0.0, %v859
      %v861 = vpop.f32.mrb[0].mxu0
      %v862 = vadd.f32 0.0, %v861
      %863 = vmatprep.mubr.f32.mxu0 0.0
      %864 = vmatmul.mubr.f32.gmra.mrb[0].mxu0 %v539
      %v865 = vpop.f32.mrb[0].mxu0
      %v866 = vadd.f32 0.0, %v865
      %v867 = vpop.f32.mrb[0].mxu0
      %v868 = vadd.f32 0.0, %v867
      %869 = vmatprep.mubr.f32.mxu0 0.0
      %870 = vmatmul.mubr.f32.gmra.mrb[0].mxu0 %v542
      %v871 = vpop.f32.mrb[0].mxu0
      %v872 = vadd.f32 0.0, %v871
      %v873 = vpop.f32.mrb[0].mxu0
      %v874 = vadd.f32 0.0, %v873
      %875 = vmatprep.mubr.f32.mxu0 0.0
      %876 = vmatmul.mubr.f32.gmra.mrb[0].mxu0 %v545
      %v877 = vpop.f32.mrb[0].mxu0
      %v878 = vadd.f32 0.0, %v877
      %v879 = vpop.f32.mrb[0].mxu0
      %v880 = vadd.f32 0.0, %v879
      %881 = vmatprep.mubr.f32.mxu0 0.0
      %882 = vmatmul.mubr.f32.gmra.mrb[0].mxu0 %v548
      %v883 = vpop.f32.mrb[0].mxu0
      %v884 = vadd.f32 0.0, %v883
      %v885 = vpop.f32.mrb[0].mxu0
      %v886 = vadd.f32 0.0, %v885
      %887 = vmatprep.mubr.f32.mxu0 0.0
      %888 = vmatmul.mubr.f32.gmra.mrb[0].mxu0 %v551
      %v889 = vpop.f32.mrb[0].mxu0
      %v890 = vadd.f32 0.0, %v889
      %v891 = vpop.f32.mrb[0].mxu0
      %v892 = vadd.f32 0.0, %v891
      %893 = vmatprep.mubr.f32.mxu0 0.0
      %894 = vmatmul.mubr.f32.gmra.mrb[0].mxu0 %v554
      %v895 = vpop.f32.mrb[0].mxu0
      %v896 = vadd.f32 0.0, %v895
      %v897 = vpop.f32.mrb[0].mxu0
      %v898 = vadd.f32 0.0, %v897
      %899 = vmatprep.mubr.f32.mxu0 0.0
      %900 = vmatmul.mubr.f32.gmra.mrb[0].mxu0 %v557
      %v901 = vpop.f32.mrb[0].mxu0
      %v902 = vadd.f32 0.0, %v901
      %v903 = vpop.f32.mrb[0].mxu0
      %v904 = vadd.f32 0.0, %v903
      %905 = vmatprep.mubr.f32.mxu0 0.0
      %906 = vmatmul.mubr.f32.gmra.mrb[0].mxu0 %v560
      %v907 = vpop.f32.mrb[0].mxu0
      %v908 = vadd.f32 0.0, %v907
      %v909 = vpop.f32.mrb[0].mxu0
      %v910 = vadd.f32 0.0, %v909
      %911 = vmatprep.mubr.f32.mxu0 0.0
      %912 = vmatmul.mubr.f32.gmra.mrb[0].mxu0 %v563
      %v913 = vpop.f32.mrb[0].mxu0
      %v914 = vadd.f32 0.0, %v913
      %v915 = vpop.f32.mrb[0].mxu0
      %v916 = vadd.f32 0.0, %v915
      %917 = vdwg.mxu0
      %v918 = vld [vmem:[%s2] sm:$0xff]
      %v919 = vld [vmem:[%s2 + $0x8] sm:$0xff]
      %v920 = vld [vmem:[%s2 + $0x10] sm:$0xff]
      %v921 = vld [vmem:[%s2 + $0x18] sm:$0xff]
      %v922 = vld [vmem:[%s2 + $0x20] sm:$0xff]
      %v923 = vld [vmem:[%s2 + $0x28] sm:$0xff]
      %v924 = vld [vmem:[%s2 + $0x30] sm:$0xff]
      %v925 = vld [vmem:[%s2 + $0x38] sm:$0xff]
      %v926 = vld [vmem:[%s2 + $0x40] sm:$0xff]
      %v927 = vld [vmem:[%s2 + $0x48] sm:$0xff]
      %v928 = vld [vmem:[%s2 + $0x50] sm:$0xff]
      %v929 = vld [vmem:[%s2 + $0x58] sm:$0xff]
      %v930 = vld [vmem:[%s2 + $0x60] sm:$0xff]
      %v931 = vld [vmem:[%s2 + $0x68] sm:$0xff]
      %v932 = vld [vmem:[%s2 + $0x70] sm:$0xff]
      %v933 = vld [vmem:[%s2 + $0x78] sm:$0xff]
      %v934 = vld [vmem:[%s2 + $0x80] sm:$0xff]
      %v935 = vld [vmem:[%s2 + $0x88] sm:$0xff]
      %v936 = vld [vmem:[%s2 + $0x90] sm:$0xff]
      %v937 = vld [vmem:[%s2 + $0x98] sm:$0xff]
      %v938 = vld [vmem:[%s2 + $0xa0] sm:$0xff]
      %v939 = vld [vmem:[%s2 + $0xa8] sm:$0xff]
      %v940 = vld [vmem:[%s2 + $0xb0] sm:$0xff]
      %v941 = vld [vmem:[%s2 + $0xb8] sm:$0xff]
      %v942 = vld [vmem:[%s2 + $0xc0] sm:$0xff]
      %v943 = vld [vmem:[%s2 + $0xc8] sm:$0xff]
      %v944 = vld [vmem:[%s2 + $0xd0] sm:$0xff]
      %v945 = vld [vmem:[%s2 + $0xd8] sm:$0xff]
      %v946 = vld [vmem:[%s2 + $0xe0] sm:$0xff]
      %v947 = vld [vmem:[%s2 + $0xe8] sm:$0xff]
      %v948 = vld [vmem:[%s2 + $0xf0] sm:$0xff]
      %v949 = vld [vmem:[%s2 + $0xf8] sm:$0xff]
      %v950 = vld [vmem:[%s2 + $0x100] sm:$0xff]
      %v951 = vld [vmem:[%s2 + $0x108] sm:$0xff]
      %v952 = vld [vmem:[%s2 + $0x110] sm:$0xff]
      %v953 = vld [vmem:[%s2 + $0x118] sm:$0xff]
      %v954 = vld [vmem:[%s2 + $0x120] sm:$0xff]
      %v955 = vld [vmem:[%s2 + $0x128] sm:$0xff]
      %v956 = vld [vmem:[%s2 + $0x130] sm:$0xff]
      %v957 = vld [vmem:[%s2 + $0x138] sm:$0xff]
      %v958 = vld [vmem:[%s2 + $0x140] sm:$0xff]
      %v959 = vld [vmem:[%s2 + $0x148] sm:$0xff]
      %v960 = vld [vmem:[%s2 + $0x150] sm:$0xff]
      %v961 = vld [vmem:[%s2 + $0x158] sm:$0xff]
      %v962 = vld [vmem:[%s2 + $0x160] sm:$0xff]
      %v963 = vld [vmem:[%s2 + $0x168] sm:$0xff]
      %v964 = vld [vmem:[%s2 + $0x170] sm:$0xff]
      %v965 = vld [vmem:[%s2 + $0x178] sm:$0xff]
      %v966 = vld [vmem:[%s2 + $0x180] sm:$0xff]
      %v967 = vld [vmem:[%s2 + $0x188] sm:$0xff]
      %v968 = vld [vmem:[%s2 + $0x190] sm:$0xff]
      %v969 = vld [vmem:[%s2 + $0x198] sm:$0xff]
      %v970 = vld [vmem:[%s2 + $0x1a0] sm:$0xff]
      %v971 = vld [vmem:[%s2 + $0x1a8] sm:$0xff]
      %v972 = vld [vmem:[%s2 + $0x1b0] sm:$0xff]
      %v973 = vld [vmem:[%s2 + $0x1b8] sm:$0xff]
      %v974 = vld [vmem:[%s2 + $0x1c0] sm:$0xff]
      %v975 = vld [vmem:[%s2 + $0x1c8] sm:$0xff]
      %v976 = vld [vmem:[%s2 + $0x1d0] sm:$0xff]
      %v977 = vld [vmem:[%s2 + $0x1d8] sm:$0xff]
      %v978 = vld [vmem:[%s2 + $0x1e0] sm:$0xff]
      %v979 = vld [vmem:[%s2 + $0x1e8] sm:$0xff]
      %v980 = vld [vmem:[%s2 + $0x1f0] sm:$0xff]
      %v981 = vld [vmem:[%s2 + $0x1f8] sm:$0xff]
      %v982 = vld [vmem:[%s2 + $0x200] sm:$0xff]
      %v983 = vld [vmem:[%s2 + $0x208] sm:$0xff]
      %v984 = vld [vmem:[%s2 + $0x210] sm:$0xff]
      %v985 = vld [vmem:[%s2 + $0x218] sm:$0xff]
      %v986 = vld [vmem:[%s2 + $0x220] sm:$0xff]
      %v987 = vld [vmem:[%s2 + $0x228] sm:$0xff]
      %v988 = vld [vmem:[%s2 + $0x230] sm:$0xff]
      %v989 = vld [vmem:[%s2 + $0x238] sm:$0xff]
      %v990 = vld [vmem:[%s2 + $0x240] sm:$0xff]
      %v991 = vld [vmem:[%s2 + $0x248] sm:$0xff]
      %v992 = vld [vmem:[%s2 + $0x250] sm:$0xff]
      %v993 = vld [vmem:[%s2 + $0x258] sm:$0xff]
      %v994 = vld [vmem:[%s2 + $0x260] sm:$0xff]
      %v995 = vld [vmem:[%s2 + $0x268] sm:$0xff]
      %v996 = vld [vmem:[%s2 + $0x270] sm:$0xff]
      %v997 = vld [vmem:[%s2 + $0x278] sm:$0xff]
      %v998 = vld [vmem:[%s2 + $0x280] sm:$0xff]
      %v999 = vld [vmem:[%s2 + $0x288] sm:$0xff]
      %v1000 = vld [vmem:[%s2 + $0x290] sm:$0xff]
      %v1001 = vld [vmem:[%s2 + $0x298] sm:$0xff]
      %v1002 = vld [vmem:[%s2 + $0x2a0] sm:$0xff]
      %v1003 = vld [vmem:[%s2 + $0x2a8] sm:$0xff]
      %v1004 = vld [vmem:[%s2 + $0x2b0] sm:$0xff]
      %v1005 = vld [vmem:[%s2 + $0x2b8] sm:$0xff]
      %v1006 = vld [vmem:[%s2 + $0x2c0] sm:$0xff]
      %v1007 = vld [vmem:[%s2 + $0x2c8] sm:$0xff]
      %v1008 = vld [vmem:[%s2 + $0x2d0] sm:$0xff]
      %v1009 = vld [vmem:[%s2 + $0x2d8] sm:$0xff]
      %v1010 = vld [vmem:[%s2 + $0x2e0] sm:$0xff]
      %v1011 = vld [vmem:[%s2 + $0x2e8] sm:$0xff]
      %v1012 = vld [vmem:[%s2 + $0x2f0] sm:$0xff]
      %v1013 = vld [vmem:[%s2 + $0x2f8] sm:$0xff]
      %s1014 = scalar_lea.vmem %s2, 768
      %v1015 = vld [vmem:[%s1014] sm:$0xff]
      %v1016 = vld [vmem:[%s1014 + $0x8] sm:$0xff]
      %v1017 = vld [vmem:[%s1014 + $0x10] sm:$0xff]
      %v1018 = vld [vmem:[%s1014 + $0x18] sm:$0xff]
      %v1019 = vld [vmem:[%s1014 + $0x20] sm:$0xff]
      %v1020 = vld [vmem:[%s1014 + $0x28] sm:$0xff]
      %v1021 = vld [vmem:[%s1014 + $0x30] sm:$0xff]
      %v1022 = vld [vmem:[%s1014 + $0x38] sm:$0xff]
      %v1023 = vld [vmem:[%s1014 + $0x40] sm:$0xff]
      %v1024 = vld [vmem:[%s1014 + $0x48] sm:$0xff]
      %v1025 = vld [vmem:[%s1014 + $0x50] sm:$0xff]
      %v1026 = vld [vmem:[%s1014 + $0x58] sm:$0xff]
      %v1027 = vld [vmem:[%s1014 + $0x60] sm:$0xff]
      %v1028 = vld [vmem:[%s1014 + $0x68] sm:$0xff]
      %v1029 = vld [vmem:[%s1014 + $0x70] sm:$0xff]
      %v1030 = vld [vmem:[%s1014 + $0x78] sm:$0xff]
      %v1031 = vld [vmem:[%s1014 + $0x80] sm:$0xff]
      %v1032 = vld [vmem:[%s1014 + $0x88] sm:$0xff]
      %v1033 = vld [vmem:[%s1014 + $0x90] sm:$0xff]
      %v1034 = vld [vmem:[%s1014 + $0x98] sm:$0xff]
      %v1035 = vld [vmem:[%s1014 + $0xa0] sm:$0xff]
      %v1036 = vld [vmem:[%s1014 + $0xa8] sm:$0xff]
      %v1037 = vld [vmem:[%s1014 + $0xb0] sm:$0xff]
      %v1038 = vld [vmem:[%s1014 + $0xb8] sm:$0xff]
      %v1039 = vld [vmem:[%s1014 + $0xc0] sm:$0xff]
      %v1040 = vld [vmem:[%s1014 + $0xc8] sm:$0xff]
      %v1041 = vld [vmem:[%s1014 + $0xd0] sm:$0xff]
      %v1042 = vld [vmem:[%s1014 + $0xd8] sm:$0xff]
      %v1043 = vld [vmem:[%s1014 + $0xe0] sm:$0xff]
      %v1044 = vld [vmem:[%s1014 + $0xe8] sm:$0xff]
      %v1045 = vld [vmem:[%s1014 + $0xf0] sm:$0xff]
      %v1046 = vld [vmem:[%s1014 + $0xf8] sm:$0xff]
      %v1047 = vld [vmem:[%s1014 + $0x100] sm:$0xff]
      %v1048 = vld [vmem:[%s1014 + $0x108] sm:$0xff]
      %v1049 = vld [vmem:[%s1014 + $0x110] sm:$0xff]
      %v1050 = vld [vmem:[%s1014 + $0x118] sm:$0xff]
      %v1051 = vld [vmem:[%s1014 + $0x120] sm:$0xff]
      %v1052 = vld [vmem:[%s1014 + $0x128] sm:$0xff]
      %v1053 = vld [vmem:[%s1014 + $0x130] sm:$0xff]
      %v1054 = vld [vmem:[%s1014 + $0x138] sm:$0xff]
      %v1055 = vld [vmem:[%s1014 + $0x140] sm:$0xff]
      %v1056 = vld [vmem:[%s1014 + $0x148] sm:$0xff]
      %v1057 = vld [vmem:[%s1014 + $0x150] sm:$0xff]
      %v1058 = vld [vmem:[%s1014 + $0x158] sm:$0xff]
      %v1059 = vld [vmem:[%s1014 + $0x160] sm:$0xff]
      %v1060 = vld [vmem:[%s1014 + $0x168] sm:$0xff]
      %v1061 = vld [vmem:[%s1014 + $0x170] sm:$0xff]
      %v1062 = vld [vmem:[%s1014 + $0x178] sm:$0xff]
      %v1063 = vld [vmem:[%s1014 + $0x180] sm:$0xff]
      %v1064 = vld [vmem:[%s1014 + $0x188] sm:$0xff]
      %v1065 = vld [vmem:[%s1014 + $0x190] sm:$0xff]
      %v1066 = vld [vmem:[%s1014 + $0x198] sm:$0xff]
      %v1067 = vld [vmem:[%s1014 + $0x1a0] sm:$0xff]
      %v1068 = vld [vmem:[%s1014 + $0x1a8] sm:$0xff]
      %v1069 = vld [vmem:[%s1014 + $0x1b0] sm:$0xff]
      %v1070 = vld [vmem:[%s1014 + $0x1b8] sm:$0xff]
      %v1071 = vld [vmem:[%s1014 + $0x1c0] sm:$0xff]
      %v1072 = vld [vmem:[%s1014 + $0x1c8] sm:$0xff]
      %v1073 = vld [vmem:[%s1014 + $0x1d0] sm:$0xff]
      %v1074 = vld [vmem:[%s1014 + $0x1d8] sm:$0xff]
      %v1075 = vld [vmem:[%s1014 + $0x1e0] sm:$0xff]
      %v1076 = vld [vmem:[%s1014 + $0x1e8] sm:$0xff]
      %v1077 = vld [vmem:[%s1014 + $0x1f0] sm:$0xff]
      %v1078 = vld [vmem:[%s1014 + $0x1f8] sm:$0xff]
      %v1079 = vld [vmem:[%s1014 + $0x200] sm:$0xff]
      %v1080 = vld [vmem:[%s1014 + $0x208] sm:$0xff]
      %v1081 = vld [vmem:[%s1014 + $0x210] sm:$0xff]
      %v1082 = vld [vmem:[%s1014 + $0x218] sm:$0xff]
      %v1083 = vld [vmem:[%s1014 + $0x220] sm:$0xff]
      %v1084 = vld [vmem:[%s1014 + $0x228] sm:$0xff]
      %v1085 = vld [vmem:[%s1014 + $0x230] sm:$0xff]
      %v1086 = vld [vmem:[%s1014 + $0x238] sm:$0xff]
      %v1087 = vld [vmem:[%s1014 + $0x240] sm:$0xff]
      %v1088 = vld [vmem:[%s1014 + $0x248] sm:$0xff]
      %v1089 = vld [vmem:[%s1014 + $0x250] sm:$0xff]
      %v1090 = vld [vmem:[%s1014 + $0x258] sm:$0xff]
      %v1091 = vld [vmem:[%s1014 + $0x260] sm:$0xff]
      %v1092 = vld [vmem:[%s1014 + $0x268] sm:$0xff]
      %v1093 = vld [vmem:[%s1014 + $0x270] sm:$0xff]
      %v1094 = vld [vmem:[%s1014 + $0x278] sm:$0xff]
      %v1095 = vld [vmem:[%s1014 + $0x280] sm:$0xff]
      %v1096 = vld [vmem:[%s1014 + $0x288] sm:$0xff]
      %v1097 = vld [vmem:[%s1014 + $0x290] sm:$0xff]
      %v1098 = vld [vmem:[%s1014 + $0x298] sm:$0xff]
      %v1099 = vld [vmem:[%s1014 + $0x2a0] sm:$0xff]
      %v1100 = vld [vmem:[%s1014 + $0x2a8] sm:$0xff]
      %v1101 = vld [vmem:[%s1014 + $0x2b0] sm:$0xff]
      %v1102 = vld [vmem:[%s1014 + $0x2b8] sm:$0xff]
      %v1103 = vld [vmem:[%s1014 + $0x2c0] sm:$0xff]
      %v1104 = vld [vmem:[%s1014 + $0x2c8] sm:$0xff]
      %v1105 = vld [vmem:[%s1014 + $0x2d0] sm:$0xff]
      %v1106 = vld [vmem:[%s1014 + $0x2d8] sm:$0xff]
      %v1107 = vld [vmem:[%s1014 + $0x2e0] sm:$0xff]
      %v1108 = vld [vmem:[%s1014 + $0x2e8] sm:$0xff]
      %v1109 = vld [vmem:[%s1014 + $0x2f0] sm:$0xff]
      %v1110 = vld [vmem:[%s1014 + $0x2f8] sm:$0xff]
      %1111 = vmatprep.subr.mxu0 0.0
      %1112 = vmatpush1.msra.mxu0 %v634
      %1113 = vmatprep.subr.mxu0 0.0
      %1114 = vmatpush1.msra.mxu0 %v640
      %1115 = vmatprep.subr.mxu0 0.0
      %1116 = vmatpush1.msra.mxu0 %v646
      %1117 = vmatprep.subr.mxu0 0.0
      %1118 = vmatpush1.msra.mxu0 %v652
      %1119 = vmatprep.subr.mxu0 0.0
      %1120 = vmatpush1.msra.mxu0 %v658
      %1121 = vmatprep.subr.mxu0 0.0
      %1122 = vmatpush1.msra.mxu0 %v664
      %1123 = vmatprep.subr.mxu0 0.0
      %1124 = vmatpush1.msra.mxu0 %v670
      %1125 = vmatprep.subr.mxu0 0.0
      %1126 = vmatpush1.msra.mxu0 %v676
      %1127 = vmatprep.subr.mxu0 0.0
      %1128 = vmatpush1.msra.mxu0 %v682
      %1129 = vmatprep.subr.mxu0 0.0
      %1130 = vmatpush1.msra.mxu0 %v688
      %1131 = vmatprep.subr.mxu0 0.0
      %1132 = vmatpush1.msra.mxu0 %v694
      %1133 = vmatprep.subr.mxu0 0.0
      %1134 = vmatpush1.msra.mxu0 %v700
      %1135 = vmatprep.subr.mxu0 0.0
      %1136 = vmatpush1.msra.mxu0 %v706
      %1137 = vmatprep.subr.mxu0 0.0
      %1138 = vmatpush1.msra.mxu0 %v712
      %1139 = vmatprep.subr.mxu0 0.0
      %1140 = vmatpush1.msra.mxu0 %v718
      %1141 = vmatprep.subr.mxu0 0.0
      %1142 = vmatpush1.msra.mxu0 %v724
      %1143 = vmatprep.subr.mxu0 0.0
      %1144 = vmatpush1.msra.mxu0 %v730
      %1145 = vmatprep.subr.mxu0 0.0
      %1146 = vmatpush1.msra.mxu0 %v736
      %1147 = vmatprep.subr.mxu0 0.0
      %1148 = vmatpush1.msra.mxu0 %v742
      %1149 = vmatprep.subr.mxu0 0.0
      %1150 = vmatpush1.msra.mxu0 %v748
      %1151 = vmatprep.subr.mxu0 0.0
      %1152 = vmatpush1.msra.mxu0 %v754
      %1153 = vmatprep.subr.mxu0 0.0
      %1154 = vmatpush1.msra.mxu0 %v760
      %1155 = vmatprep.subr.mxu0 0.0
      %1156 = vmatpush1.msra.mxu0 %v766
      %1157 = vmatprep.subr.mxu0 0.0
      %1158 = vmatpush1.msra.mxu0 %v772
      %1159 = vmatprep.subr.mxu0 0.0
      %1160 = vmatpush1.msra.mxu0 %v778
      %1161 = vmatprep.subr.mxu0 0.0
      %1162 = vmatpush1.msra.mxu0 %v784
      %1163 = vmatprep.subr.mxu0 0.0
      %1164 = vmatpush1.msra.mxu0 %v790
      %1165 = vmatprep.subr.mxu0 0.0
      %1166 = vmatpush1.msra.mxu0 %v796
      %1167 = vmatprep.subr.mxu0 0.0
      %1168 = vmatpush1.msra.mxu0 %v802
      %1169 = vmatprep.subr.mxu0 0.0
      %1170 = vmatpush1.msra.mxu0 %v808
      %1171 = vmatprep.subr.mxu0 0.0
      %1172 = vmatpush1.msra.mxu0 %v814
      %1173 = vmatprep.subr.mxu0 0.0
      %1174 = vmatpush1.msra.mxu0 %v820
      %1175 = vmatprep.mubr.f32.mxu0 %v1016
      %1176 = vmatmul.mubr.f32.gmra.mrb[0].mxu0 %v1015
      %v1177 = vpop.f32.mrb[0].mxu0
      %v1178 = vadd.f32 0.0, %v1177
      %v1179 = vpop.f32.mrb[0].mxu0
      %1180 = vmatprep.mubr.f32.mxu0 %v1019
      %1181 = vmatmul.mubr.f32.gmra.mrb[0].mxu0 %v1018
      %v1182 = vpop.f32.mrb[0].mxu0
      %v1183 = vadd.f32 0.0, %v1182
      %v1184 = vpop.f32.mrb[0].mxu0
      %1185 = vmatprep.mubr.f32.mxu0 %v1022
      %1186 = vmatmul.mubr.f32.gmra.mrb[0].mxu0 %v1021
      %v1187 = vpop.f32.mrb[0].mxu0
      %v1188 = vadd.f32 0.0, %v1187
      %v1189 = vpop.f32.mrb[0].mxu0
      %1190 = vmatprep.mubr.f32.mxu0 %v1025
      %1191 = vmatmul.mubr.f32.gmra.mrb[0].mxu0 %v1024
      %v1192 = vpop.f32.mrb[0].mxu0
      %v1193 = vadd.f32 0.0, %v1192
      %v1194 = vpop.f32.mrb[0].mxu0
      %1195 = vmatprep.mubr.f32.mxu0 %v1028
      %1196 = vmatmul.mubr.f32.gmra.mrb[0].mxu0 %v1027
      %v1197 = vpop.f32.mrb[0].mxu0
      %v1198 = vadd.f32 0.0, %v1197
      %v1199 = vpop.f32.mrb[0].mxu0
      %1200 = vmatprep.mubr.f32.mxu0 %v1031
      %1201 = vmatmul.mubr.f32.gmra.mrb[0].mxu0 %v1030
      %v1202 = vpop.f32.mrb[0].mxu0
      %v1203 = vadd.f32 0.0, %v1202
      %v1204 = vpop.f32.mrb[0].mxu0
      %1205 = vmatprep.mubr.f32.mxu0 %v1034
      %1206 = vmatmul.mubr.f32.gmra.mrb[0].mxu0 %v1033
      %v1207 = vpop.f32.mrb[0].mxu0
      %v1208 = vadd.f32 0.0, %v1207
      %v1209 = vpop.f32.mrb[0].mxu0
      %1210 = vmatprep.mubr.f32.mxu0 %v1037
      %1211 = vmatmul.mubr.f32.gmra.mrb[0].mxu0 %v1036
      %v1212 = vpop.f32.mrb[0].mxu0
      %v1213 = vadd.f32 0.0, %v1212
      %v1214 = vpop.f32.mrb[0].mxu0
      %1215 = vmatprep.mubr.f32.mxu0 %v1040
      %1216 = vmatmul.mubr.f32.gmra.mrb[0].mxu0 %v1039
      %v1217 = vpop.f32.mrb[0].mxu0
      %v1218 = vadd.f32 0.0, %v1217
      %v1219 = vpop.f32.mrb[0].mxu0
      %1220 = vmatprep.mubr.f32.mxu0 %v1043
      %1221 = vmatmul.mubr.f32.gmra.mrb[0].mxu0 %v1042
      %v1222 = vpop.f32.mrb[0].mxu0
      %v1223 = vadd.f32 0.0, %v1222
      %v1224 = vpop.f32.mrb[0].mxu0
      %1225 = vmatprep.mubr.f32.mxu0 %v1046
      %1226 = vmatmul.mubr.f32.gmra.mrb[0].mxu0 %v1045
      %v1227 = vpop.f32.mrb[0].mxu0
      %v1228 = vadd.f32 0.0, %v1227
      %v1229 = vpop.f32.mrb[0].mxu0
      %1230 = vmatprep.mubr.f32.mxu0 %v1049
      %1231 = vmatmul.mubr.f32.gmra.mrb[0].mxu0 %v1048
      %v1232 = vpop.f32.mrb[0].mxu0
      %v1233 = vadd.f32 0.0, %v1232
      %v1234 = vpop.f32.mrb[0].mxu0
      %1235 = vmatprep.mubr.f32.mxu0 %v1052
      %1236 = vmatmul.mubr.f32.gmra.mrb[0].mxu0 %v1051
      %v1237 = vpop.f32.mrb[0].mxu0
      %v1238 = vadd.f32 0.0, %v1237
      %v1239 = vpop.f32.mrb[0].mxu0
      %1240 = vmatprep.mubr.f32.mxu0 %v1055
      %1241 = vmatmul.mubr.f32.gmra.mrb[0].mxu0 %v1054
      %v1242 = vpop.f32.mrb[0].mxu0
      %v1243 = vadd.f32 0.0, %v1242
      %v1244 = vpop.f32.mrb[0].mxu0
      %1245 = vmatprep.mubr.f32.mxu0 %v1058
      %1246 = vmatmul.mubr.f32.gmra.mrb[0].mxu0 %v1057
      %v1247 = vpop.f32.mrb[0].mxu0
      %v1248 = vadd.f32 0.0, %v1247
      %v1249 = vpop.f32.mrb[0].mxu0
      %1250 = vmatprep.mubr.f32.mxu0 %v1061
      %1251 = vmatmul.mubr.f32.gmra.mrb[0].mxu0 %v1060
      %v1252 = vpop.f32.mrb[0].mxu0
      %v1253 = vadd.f32 0.0, %v1252
      %v1254 = vpop.f32.mrb[0].mxu0
      %1255 = vmatprep.mubr.f32.mxu0 %v1064
      %1256 = vmatmul.mubr.f32.gmra.mrb[0].mxu0 %v1063
      %v1257 = vpop.f32.mrb[0].mxu0
      %v1258 = vadd.f32 0.0, %v1257
      %v1259 = vpop.f32.mrb[0].mxu0
      %1260 = vmatprep.mubr.f32.mxu0 %v1067
      %1261 = vmatmul.mubr.f32.gmra.mrb[0].mxu0 %v1066
      %v1262 = vpop.f32.mrb[0].mxu0
      %v1263 = vadd.f32 0.0, %v1262
      %v1264 = vpop.f32.mrb[0].mxu0
      %1265 = vmatprep.mubr.f32.mxu0 %v1070
      %1266 = vmatmul.mubr.f32.gmra.mrb[0].mxu0 %v1069
      %v1267 = vpop.f32.mrb[0].mxu0
      %v1268 = vadd.f32 0.0, %v1267
      %v1269 = vpop.f32.mrb[0].mxu0
      %1270 = vmatprep.mubr.f32.mxu0 %v1073
      %1271 = vmatmul.mubr.f32.gmra.mrb[0].mxu0 %v1072
      %v1272 = vpop.f32.mrb[0].mxu0
      %v1273 = vadd.f32 0.0, %v1272
      %v1274 = vpop.f32.mrb[0].mxu0
      %1275 = vmatprep.mubr.f32.mxu0 %v1076
      %1276 = vmatmul.mubr.f32.gmra.mrb[0].mxu0 %v1075
      %v1277 = vpop.f32.mrb[0].mxu0
      %v1278 = vadd.f32 0.0, %v1277
      %v1279 = vpop.f32.mrb[0].mxu0
      %1280 = vmatprep.mubr.f32.mxu0 %v1079
      %1281 = vmatmul.mubr.f32.gmra.mrb[0].mxu0 %v1078
      %v1282 = vpop.f32.mrb[0].mxu0
      %v1283 = vadd.f32 0.0, %v1282
      %v1284 = vpop.f32.mrb[0].mxu0
      %1285 = vmatprep.mubr.f32.mxu0 %v1082
      %1286 = vmatmul.mubr.f32.gmra.mrb[0].mxu0 %v1081
      %v1287 = vpop.f32.mrb[0].mxu0
      %v1288 = vadd.f32 0.0, %v1287
      %v1289 = vpop.f32.mrb[0].mxu0
      %1290 = vmatprep.mubr.f32.mxu0 %v1085
      %1291 = vmatmul.mubr.f32.gmra.mrb[0].mxu0 %v1084
      %v1292 = vpop.f32.mrb[0].mxu0
      %v1293 = vadd.f32 0.0, %v1292
      %v1294 = vpop.f32.mrb[0].mxu0
      %1295 = vmatprep.mubr.f32.mxu0 %v1088
      %1296 = vmatmul.mubr.f32.gmra.mrb[0].mxu0 %v1087
      %v1297 = vpop.f32.mrb[0].mxu0
      %v1298 = vadd.f32 0.0, %v1297
      %v1299 = vpop.f32.mrb[0].mxu0
      %1300 = vmatprep.mubr.f32.mxu0 %v1091
      %1301 = vmatmul.mubr.f32.gmra.mrb[0].mxu0 %v1090
      %v1302 = vpop.f32.mrb[0].mxu0
      %v1303 = vadd.f32 0.0, %v1302
      %v1304 = vpop.f32.mrb[0].mxu0
      %1305 = vmatprep.mubr.f32.mxu0 %v1094
      %1306 = vmatmul.mubr.f32.gmra.mrb[0].mxu0 %v1093
      %v1307 = vpop.f32.mrb[0].mxu0
      %v1308 = vadd.f32 0.0, %v1307
      %v1309 = vpop.f32.mrb[0].mxu0
      %1310 = vmatprep.mubr.f32.mxu0 %v1097
      %1311 = vmatmul.mubr.f32.gmra.mrb[0].mxu0 %v1096
      %v1312 = vpop.f32.mrb[0].mxu0
      %v1313 = vadd.f32 0.0, %v1312
      %v1314 = vpop.f32.mrb[0].mxu0
      %1315 = vmatprep.mubr.f32.mxu0 %v1100
      %1316 = vmatmul.mubr.f32.gmra.mrb[0].mxu0 %v1099
      %v1317 = vpop.f32.mrb[0].mxu0
      %v1318 = vadd.f32 0.0, %v1317
      %v1319 = vpop.f32.mrb[0].mxu0
      %1320 = vmatprep.mubr.f32.mxu0 %v1103
      %1321 = vmatmul.mubr.f32.gmra.mrb[0].mxu0 %v1102
      %v1322 = vpop.f32.mrb[0].mxu0
      %v1323 = vadd.f32 0.0, %v1322
      %v1324 = vpop.f32.mrb[0].mxu0
      %1325 = vmatprep.mubr.f32.mxu0 %v1106
      %1326 = vmatmul.mubr.f32.gmra.mrb[0].mxu0 %v1105
      %v1327 = vpop.f32.mrb[0].mxu0
      %v1328 = vadd.f32 0.0, %v1327
      %v1329 = vpop.f32.mrb[0].mxu0
      %1330 = vmatprep.mubr.f32.mxu0 %v1109
      %1331 = vmatmul.mubr.f32.gmra.mrb[0].mxu0 %v1108
      %v1332 = vpop.f32.mrb[0].mxu0
      %v1333 = vadd.f32 0.0, %v1332
      %v1334 = vpop.f32.mrb[0].mxu0
      %1335 = vdwg.mxu0
      %1336 = vmatprep.subr.mxu0 0.0
      %1337 = vmatpush1.msra.mxu0 %v826
      %1338 = vmatprep.subr.mxu0 0.0
      %1339 = vmatpush1.msra.mxu0 %v832
      %1340 = vmatprep.subr.mxu0 0.0
      %1341 = vmatpush1.msra.mxu0 %v838
      %1342 = vmatprep.subr.mxu0 0.0
      %1343 = vmatpush1.msra.mxu0 %v844
      %1344 = vmatprep.subr.mxu0 0.0
      %1345 = vmatpush1.msra.mxu0 %v850
      %1346 = vmatprep.subr.mxu0 0.0
      %1347 = vmatpush1.msra.mxu0 %v856
      %1348 = vmatprep.subr.mxu0 0.0
      %1349 = vmatpush1.msra.mxu0 %v862
      %1350 = vmatprep.subr.mxu0 0.0
      %1351 = vmatpush1.msra.mxu0 %v868
      %1352 = vmatprep.subr.mxu0 0.0
      %1353 = vmatpush1.msra.mxu0 %v874
      %1354 = vmatprep.subr.mxu0 0.0
      %1355 = vmatpush1.msra.mxu0 %v880
      %1356 = vmatprep.subr.mxu0 0.0
      %1357 = vmatpush1.msra.mxu0 %v886
      %1358 = vmatprep.subr.mxu0 0.0
      %1359 = vmatpush1.msra.mxu0 %v892
      %1360 = vmatprep.subr.mxu0 0.0
      %1361 = vmatpush1.msra.mxu0 %v898
      %1362 = vmatprep.subr.mxu0 0.0
      %1363 = vmatpush1.msra.mxu0 %v904
      %1364 = vmatprep.subr.mxu0 0.0
      %1365 = vmatpush1.msra.mxu0 %v910
      %1366 = vmatprep.subr.mxu0 0.0
      %1367 = vmatpush1.msra.mxu0 %v916
      %1368 = vmatprep.subr.mxu0 0.0
      %1369 = vmatpush1.msra.mxu0 0.0
      %1370 = vmatprep.subr.mxu0 0.0
      %1371 = vmatpush1.msra.mxu0 0.0
      %1372 = vmatprep.subr.mxu0 0.0
      %1373 = vmatpush1.msra.mxu0 0.0
      %1374 = vmatprep.subr.mxu0 0.0
      %1375 = vmatpush1.msra.mxu0 0.0
      %1376 = vmatprep.subr.mxu0 0.0
      %1377 = vmatpush1.msra.mxu0 0.0
      %1378 = vmatprep.subr.mxu0 0.0
      %1379 = vmatpush1.msra.mxu0 0.0
      %1380 = vmatprep.subr.mxu0 0.0
      %1381 = vmatpush1.msra.mxu0 0.0
      %1382 = vmatprep.subr.mxu0 0.0
      %1383 = vmatpush1.msra.mxu0 0.0
      %1384 = vmatprep.subr.mxu0 0.0
      %1385 = vmatpush1.msra.mxu0 0.0
      %1386 = vmatprep.subr.mxu0 0.0
      %1387 = vmatpush1.msra.mxu0 0.0
      %1388 = vmatprep.subr.mxu0 0.0
      %1389 = vmatpush1.msra.mxu0 0.0
      %1390 = vmatprep.subr.mxu0 0.0
      %1391 = vmatpush1.msra.mxu0 0.0
      %1392 = vmatprep.subr.mxu0 0.0
      %1393 = vmatpush1.msra.mxu0 0.0
      %1394 = vmatprep.subr.mxu0 0.0
      %1395 = vmatpush1.msra.mxu0 0.0
      %1396 = vmatprep.subr.mxu0 0.0
      %1397 = vmatpush1.msra.mxu0 0.0
      %1398 = vmatprep.subr.mxu0 0.0
      %1399 = vmatpush1.msra.mxu0 0.0
      %1400 = vmatprep.mubr.f32.mxu0 0.0
      %1401 = vmatmul.mubr.f32.gmra.mrb[0].mxu0 %v1017
      %v1402 = vpop.f32.mrb[0].mxu0
      %v1403 = vadd.f32 %v1178, %v1402
      %v1404 = vpop.f32.mrb[0].mxu0
      %1405 = vmatprep.mubr.f32.mxu0 0.0
      %1406 = vmatmul.mubr.f32.gmra.mrb[0].mxu0 %v1020
      %v1407 = vpop.f32.mrb[0].mxu0
      %v1408 = vadd.f32 %v1183, %v1407
      %v1409 = vpop.f32.mrb[0].mxu0
      %1410 = vmatprep.mubr.f32.mxu0 0.0
      %1411 = vmatmul.mubr.f32.gmra.mrb[0].mxu0 %v1023
      %v1412 = vpop.f32.mrb[0].mxu0
      %v1413 = vadd.f32 %v1188, %v1412
      %v1414 = vpop.f32.mrb[0].mxu0
      %1415 = vmatprep.mubr.f32.mxu0 0.0
      %1416 = vmatmul.mubr.f32.gmra.mrb[0].mxu0 %v1026
      %v1417 = vpop.f32.mrb[0].mxu0
      %v1418 = vadd.f32 %v1193, %v1417
      %v1419 = vpop.f32.mrb[0].mxu0
      %1420 = vmatprep.mubr.f32.mxu0 0.0
      %1421 = vmatmul.mubr.f32.gmra.mrb[0].mxu0 %v1029
      %v1422 = vpop.f32.mrb[0].mxu0
      %v1423 = vadd.f32 %v1198, %v1422
      %v1424 = vpop.f32.mrb[0].mxu0
      %1425 = vmatprep.mubr.f32.mxu0 0.0
      %1426 = vmatmul.mubr.f32.gmra.mrb[0].mxu0 %v1032
      %v1427 = vpop.f32.mrb[0].mxu0
      %v1428 = vadd.f32 %v1203, %v1427
      %v1429 = vpop.f32.mrb[0].mxu0
      %1430 = vmatprep.mubr.f32.mxu0 0.0
      %1431 = vmatmul.mubr.f32.gmra.mrb[0].mxu0 %v1035
      %v1432 = vpop.f32.mrb[0].mxu0
      %v1433 = vadd.f32 %v1208, %v1432
      %v1434 = vpop.f32.mrb[0].mxu0
      %1435 = vmatprep.mubr.f32.mxu0 0.0
      %1436 = vmatmul.mubr.f32.gmra.mrb[0].mxu0 %v1038
      %v1437 = vpop.f32.mrb[0].mxu0
      %v1438 = vadd.f32 %v1213, %v1437
      %v1439 = vpop.f32.mrb[0].mxu0
      %1440 = vmatprep.mubr.f32.mxu0 0.0
      %1441 = vmatmul.mubr.f32.gmra.mrb[0].mxu0 %v1041
      %v1442 = vpop.f32.mrb[0].mxu0
      %v1443 = vadd.f32 %v1218, %v1442
      %v1444 = vpop.f32.mrb[0].mxu0
      %1445 = vmatprep.mubr.f32.mxu0 0.0
      %1446 = vmatmul.mubr.f32.gmra.mrb[0].mxu0 %v1044
      %v1447 = vpop.f32.mrb[0].mxu0
      %v1448 = vadd.f32 %v1223, %v1447
      %v1449 = vpop.f32.mrb[0].mxu0
      %1450 = vmatprep.mubr.f32.mxu0 0.0
      %1451 = vmatmul.mubr.f32.gmra.mrb[0].mxu0 %v1047
      %v1452 = vpop.f32.mrb[0].mxu0
      %v1453 = vadd.f32 %v1228, %v1452
      %v1454 = vpop.f32.mrb[0].mxu0
      %1455 = vmatprep.mubr.f32.mxu0 0.0
      %1456 = vmatmul.mubr.f32.gmra.mrb[0].mxu0 %v1050
      %v1457 = vpop.f32.mrb[0].mxu0
      %v1458 = vadd.f32 %v1233, %v1457
      %v1459 = vpop.f32.mrb[0].mxu0
      %1460 = vmatprep.mubr.f32.mxu0 0.0
      %1461 = vmatmul.mubr.f32.gmra.mrb[0].mxu0 %v1053
      %v1462 = vpop.f32.mrb[0].mxu0
      %v1463 = vadd.f32 %v1238, %v1462
      %v1464 = vpop.f32.mrb[0].mxu0
      %1465 = vmatprep.mubr.f32.mxu0 0.0
      %1466 = vmatmul.mubr.f32.gmra.mrb[0].mxu0 %v1056
      %v1467 = vpop.f32.mrb[0].mxu0
      %v1468 = vadd.f32 %v1243, %v1467
      %v1469 = vpop.f32.mrb[0].mxu0
      %1470 = vmatprep.mubr.f32.mxu0 0.0
      %1471 = vmatmul.mubr.f32.gmra.mrb[0].mxu0 %v1059
      %v1472 = vpop.f32.mrb[0].mxu0
      %v1473 = vadd.f32 %v1248, %v1472
      %v1474 = vpop.f32.mrb[0].mxu0
      %1475 = vmatprep.mubr.f32.mxu0 0.0
      %1476 = vmatmul.mubr.f32.gmra.mrb[0].mxu0 %v1062
      %v1477 = vpop.f32.mrb[0].mxu0
      %v1478 = vadd.f32 %v1253, %v1477
      %v1479 = vpop.f32.mrb[0].mxu0
      %1480 = vmatprep.mubr.f32.mxu0 0.0
      %1481 = vmatmul.mubr.f32.gmra.mrb[0].mxu0 %v1065
      %v1482 = vpop.f32.mrb[0].mxu0
      %v1483 = vadd.f32 %v1258, %v1482
      %v1484 = vpop.f32.mrb[0].mxu0
      %1485 = vmatprep.mubr.f32.mxu0 0.0
      %1486 = vmatmul.mubr.f32.gmra.mrb[0].mxu0 %v1068
      %v1487 = vpop.f32.mrb[0].mxu0
      %v1488 = vadd.f32 %v1263, %v1487
      %v1489 = vpop.f32.mrb[0].mxu0
      %1490 = vmatprep.mubr.f32.mxu0 0.0
      %1491 = vmatmul.mubr.f32.gmra.mrb[0].mxu0 %v1071
      %v1492 = vpop.f32.mrb[0].mxu0
      %v1493 = vadd.f32 %v1268, %v1492
      %v1494 = vpop.f32.mrb[0].mxu0
      %1495 = vmatprep.mubr.f32.mxu0 0.0
      %1496 = vmatmul.mubr.f32.gmra.mrb[0].mxu0 %v1074
      %v1497 = vpop.f32.mrb[0].mxu0
      %v1498 = vadd.f32 %v1273, %v1497
      %v1499 = vpop.f32.mrb[0].mxu0
      %1500 = vmatprep.mubr.f32.mxu0 0.0
      %1501 = vmatmul.mubr.f32.gmra.mrb[0].mxu0 %v1077
      %v1502 = vpop.f32.mrb[0].mxu0
      %v1503 = vadd.f32 %v1278, %v1502
      %v1504 = vpop.f32.mrb[0].mxu0
      %1505 = vmatprep.mubr.f32.mxu0 0.0
      %1506 = vmatmul.mubr.f32.gmra.mrb[0].mxu0 %v1080
      %v1507 = vpop.f32.mrb[0].mxu0
      %v1508 = vadd.f32 %v1283, %v1507
      %v1509 = vpop.f32.mrb[0].mxu0
      %1510 = vmatprep.mubr.f32.mxu0 0.0
      %1511 = vmatmul.mubr.f32.gmra.mrb[0].mxu0 %v1083
      %v1512 = vpop.f32.mrb[0].mxu0
      %v1513 = vadd.f32 %v1288, %v1512
      %v1514 = vpop.f32.mrb[0].mxu0
      %1515 = vmatprep.mubr.f32.mxu0 0.0
      %1516 = vmatmul.mubr.f32.gmra.mrb[0].mxu0 %v1086
      %v1517 = vpop.f32.mrb[0].mxu0
      %v1518 = vadd.f32 %v1293, %v1517
      %v1519 = vpop.f32.mrb[0].mxu0
      %1520 = vmatprep.mubr.f32.mxu0 0.0
      %1521 = vmatmul.mubr.f32.gmra.mrb[0].mxu0 %v1089
      %v1522 = vpop.f32.mrb[0].mxu0
      %v1523 = vadd.f32 %v1298, %v1522
      %v1524 = vpop.f32.mrb[0].mxu0
      %1525 = vmatprep.mubr.f32.mxu0 0.0
      %1526 = vmatmul.mubr.f32.gmra.mrb[0].mxu0 %v1092
      %v1527 = vpop.f32.mrb[0].mxu0
      %v1528 = vadd.f32 %v1303, %v1527
      %v1529 = vpop.f32.mrb[0].mxu0
      %1530 = vmatprep.mubr.f32.mxu0 0.0
      %1531 = vmatmul.mubr.f32.gmra.mrb[0].mxu0 %v1095
      %v1532 = vpop.f32.mrb[0].mxu0
      %v1533 = vadd.f32 %v1308, %v1532
      %v1534 = vpop.f32.mrb[0].mxu0
      %1535 = vmatprep.mubr.f32.mxu0 0.0
      %1536 = vmatmul.mubr.f32.gmra.mrb[0].mxu0 %v1098
      %v1537 = vpop.f32.mrb[0].mxu0
      %v1538 = vadd.f32 %v1313, %v1537
      %v1539 = vpop.f32.mrb[0].mxu0
      %1540 = vmatprep.mubr.f32.mxu0 0.0
      %1541 = vmatmul.mubr.f32.gmra.mrb[0].mxu0 %v1101
      %v1542 = vpop.f32.mrb[0].mxu0
      %v1543 = vadd.f32 %v1318, %v1542
      %v1544 = vpop.f32.mrb[0].mxu0
      %1545 = vmatprep.mubr.f32.mxu0 0.0
      %1546 = vmatmul.mubr.f32.gmra.mrb[0].mxu0 %v1104
      %v1547 = vpop.f32.mrb[0].mxu0
      %v1548 = vadd.f32 %v1323, %v1547
      %v1549 = vpop.f32.mrb[0].mxu0
      %1550 = vmatprep.mubr.f32.mxu0 0.0
      %1551 = vmatmul.mubr.f32.gmra.mrb[0].mxu0 %v1107
      %v1552 = vpop.f32.mrb[0].mxu0
      %v1553 = vadd.f32 %v1328, %v1552
      %v1554 = vpop.f32.mrb[0].mxu0
      %1555 = vmatprep.mubr.f32.mxu0 0.0
      %1556 = vmatmul.mubr.f32.gmra.mrb[0].mxu0 %v1110
      %v1557 = vpop.f32.mrb[0].mxu0
      %v1558 = vadd.f32 %v1333, %v1557
      %v1559 = vpop.f32.mrb[0].mxu0
      %1560 = vdwg.mxu0
      %1561 = vmatprep.subr.mxu0 0.0
      %1562 = vmatpush1.msra.mxu0 %v632
      %1563 = vmatprep.subr.mxu0 0.0
      %1564 = vmatpush1.msra.mxu0 %v638
      %1565 = vmatprep.subr.mxu0 0.0
      %1566 = vmatpush1.msra.mxu0 %v644
      %1567 = vmatprep.subr.mxu0 0.0
      %1568 = vmatpush1.msra.mxu0 %v650
      %1569 = vmatprep.subr.mxu0 0.0
      %1570 = vmatpush1.msra.mxu0 %v656
      %1571 = vmatprep.subr.mxu0 0.0
      %1572 = vmatpush1.msra.mxu0 %v662
      %1573 = vmatprep.subr.mxu0 0.0
      %1574 = vmatpush1.msra.mxu0 %v668
      %1575 = vmatprep.subr.mxu0 0.0
      %1576 = vmatpush1.msra.mxu0 %v674
      %1577 = vmatprep.subr.mxu0 0.0
      %1578 = vmatpush1.msra.mxu0 %v680
      %1579 = vmatprep.subr.mxu0 0.0
      %1580 = vmatpush1.msra.mxu0 %v686
      %1581 = vmatprep.subr.mxu0 0.0
      %1582 = vmatpush1.msra.mxu0 %v692
      %1583 = vmatprep.subr.mxu0 0.0
      %1584 = vmatpush1.msra.mxu0 %v698
      %1585 = vmatprep.subr.mxu0 0.0
      %1586 = vmatpush1.msra.mxu0 %v704
      %1587 = vmatprep.subr.mxu0 0.0
      %1588 = vmatpush1.msra.mxu0 %v710
      %1589 = vmatprep.subr.mxu0 0.0
      %1590 = vmatpush1.msra.mxu0 %v716
      %1591 = vmatprep.subr.mxu0 0.0
      %1592 = vmatpush1.msra.mxu0 %v722
      %1593 = vmatprep.subr.mxu0 0.0
      %1594 = vmatpush1.msra.mxu0 %v728
      %1595 = vmatprep.subr.mxu0 0.0
      %1596 = vmatpush1.msra.mxu0 %v734
      %1597 = vmatprep.subr.mxu0 0.0
      %1598 = vmatpush1.msra.mxu0 %v740
      %1599 = vmatprep.subr.mxu0 0.0
      %1600 = vmatpush1.msra.mxu0 %v746
      %1601 = vmatprep.subr.mxu0 0.0
      %1602 = vmatpush1.msra.mxu0 %v752
      %1603 = vmatprep.subr.mxu0 0.0
      %1604 = vmatpush1.msra.mxu0 %v758
      %1605 = vmatprep.subr.mxu0 0.0
      %1606 = vmatpush1.msra.mxu0 %v764
      %1607 = vmatprep.subr.mxu0 0.0
      %1608 = vmatpush1.msra.mxu0 %v770
      %1609 = vmatprep.subr.mxu0 0.0
      %1610 = vmatpush1.msra.mxu0 %v776
      %1611 = vmatprep.subr.mxu0 0.0
      %1612 = vmatpush1.msra.mxu0 %v782
      %1613 = vmatprep.subr.mxu0 0.0
      %1614 = vmatpush1.msra.mxu0 %v788
      %1615 = vmatprep.subr.mxu0 0.0
      %1616 = vmatpush1.msra.mxu0 %v794
      %1617 = vmatprep.subr.mxu0 0.0
      %1618 = vmatpush1.msra.mxu0 %v800
      %1619 = vmatprep.subr.mxu0 0.0
      %1620 = vmatpush1.msra.mxu0 %v806
      %1621 = vmatprep.subr.mxu0 0.0
      %1622 = vmatpush1.msra.mxu0 %v812
      %1623 = vmatprep.subr.mxu0 0.0
      %1624 = vmatpush1.msra.mxu0 %v818
      %1625 = vmatprep.mubr.f32.mxu0 %v919
      %1626 = vmatmul.mubr.f32.gmra.mrb[0].mxu0 %v918
      %v1627 = vpop.f32.mrb[0].mxu0
      %v1628 = vadd.f32 %v1403, %v1627
      %v1629 = vpop.f32.mrb[0].mxu0
      %1630 = vmatprep.mubr.f32.mxu0 %v922
      %1631 = vmatmul.mubr.f32.gmra.mrb[0].mxu0 %v921
      %v1632 = vpop.f32.mrb[0].mxu0
      %v1633 = vadd.f32 %v1408, %v1632
      %v1634 = vpop.f32.mrb[0].mxu0
      %1635 = vmatprep.mubr.f32.mxu0 %v925
      %1636 = vmatmul.mubr.f32.gmra.mrb[0].mxu0 %v924
      %v1637 = vpop.f32.mrb[0].mxu0
      %v1638 = vadd.f32 %v1413, %v1637
      %v1639 = vpop.f32.mrb[0].mxu0
      %1640 = vmatprep.mubr.f32.mxu0 %v928
      %1641 = vmatmul.mubr.f32.gmra.mrb[0].mxu0 %v927
      %v1642 = vpop.f32.mrb[0].mxu0
      %v1643 = vadd.f32 %v1418, %v1642
      %v1644 = vpop.f32.mrb[0].mxu0
      %1645 = vmatprep.mubr.f32.mxu0 %v931
      %1646 = vmatmul.mubr.f32.gmra.mrb[0].mxu0 %v930
      %v1647 = vpop.f32.mrb[0].mxu0
      %v1648 = vadd.f32 %v1423, %v1647
      %v1649 = vpop.f32.mrb[0].mxu0
      %1650 = vmatprep.mubr.f32.mxu0 %v934
      %1651 = vmatmul.mubr.f32.gmra.mrb[0].mxu0 %v933
      %v1652 = vpop.f32.mrb[0].mxu0
      %v1653 = vadd.f32 %v1428, %v1652
      %v1654 = vpop.f32.mrb[0].mxu0
      %1655 = vmatprep.mubr.f32.mxu0 %v937
      %1656 = vmatmul.mubr.f32.gmra.mrb[0].mxu0 %v936
      %v1657 = vpop.f32.mrb[0].mxu0
      %v1658 = vadd.f32 %v1433, %v1657
      %v1659 = vpop.f32.mrb[0].mxu0
      %1660 = vmatprep.mubr.f32.mxu0 %v940
      %1661 = vmatmul.mubr.f32.gmra.mrb[0].mxu0 %v939
      %v1662 = vpop.f32.mrb[0].mxu0
      %v1663 = vadd.f32 %v1438, %v1662
      %v1664 = vpop.f32.mrb[0].mxu0
      %1665 = vmatprep.mubr.f32.mxu0 %v943
      %1666 = vmatmul.mubr.f32.gmra.mrb[0].mxu0 %v942
      %v1667 = vpop.f32.mrb[0].mxu0
      %v1668 = vadd.f32 %v1443, %v1667
      %v1669 = vpop.f32.mrb[0].mxu0
      %1670 = vmatprep.mubr.f32.mxu0 %v946
      %1671 = vmatmul.mubr.f32.gmra.mrb[0].mxu0 %v945
      %v1672 = vpop.f32.mrb[0].mxu0
      %v1673 = vadd.f32 %v1448, %v1672
      %v1674 = vpop.f32.mrb[0].mxu0
      %1675 = vmatprep.mubr.f32.mxu0 %v949
      %1676 = vmatmul.mubr.f32.gmra.mrb[0].mxu0 %v948
      %v1677 = vpop.f32.mrb[0].mxu0
      %v1678 = vadd.f32 %v1453, %v1677
      %v1679 = vpop.f32.mrb[0].mxu0
      %1680 = vmatprep.mubr.f32.mxu0 %v952
      %1681 = vmatmul.mubr.f32.gmra.mrb[0].mxu0 %v951
      %v1682 = vpop.f32.mrb[0].mxu0
      %v1683 = vadd.f32 %v1458, %v1682
      %v1684 = vpop.f32.mrb[0].mxu0
      %1685 = vmatprep.mubr.f32.mxu0 %v955
      %1686 = vmatmul.mubr.f32.gmra.mrb[0].mxu0 %v954
      %v1687 = vpop.f32.mrb[0].mxu0
      %v1688 = vadd.f32 %v1463, %v1687
      %v1689 = vpop.f32.mrb[0].mxu0
      %1690 = vmatprep.mubr.f32.mxu0 %v958
      %1691 = vmatmul.mubr.f32.gmra.mrb[0].mxu0 %v957
      %v1692 = vpop.f32.mrb[0].mxu0
      %v1693 = vadd.f32 %v1468, %v1692
      %v1694 = vpop.f32.mrb[0].mxu0
      %1695 = vmatprep.mubr.f32.mxu0 %v961
      %1696 = vmatmul.mubr.f32.gmra.mrb[0].mxu0 %v960
      %v1697 = vpop.f32.mrb[0].mxu0
      %v1698 = vadd.f32 %v1473, %v1697
      %v1699 = vpop.f32.mrb[0].mxu0
      %1700 = vmatprep.mubr.f32.mxu0 %v964
      %1701 = vmatmul.mubr.f32.gmra.mrb[0].mxu0 %v963
      %v1702 = vpop.f32.mrb[0].mxu0
      %v1703 = vadd.f32 %v1478, %v1702
      %v1704 = vpop.f32.mrb[0].mxu0
      %1705 = vmatprep.mubr.f32.mxu0 %v967
      %1706 = vmatmul.mubr.f32.gmra.mrb[0].mxu0 %v966
      %v1707 = vpop.f32.mrb[0].mxu0
      %v1708 = vadd.f32 %v1483, %v1707
      %v1709 = vpop.f32.mrb[0].mxu0
      %1710 = vmatprep.mubr.f32.mxu0 %v970
      %1711 = vmatmul.mubr.f32.gmra.mrb[0].mxu0 %v969
      %v1712 = vpop.f32.mrb[0].mxu0
      %v1713 = vadd.f32 %v1488, %v1712
      %v1714 = vpop.f32.mrb[0].mxu0
      %1715 = vmatprep.mubr.f32.mxu0 %v973
      %1716 = vmatmul.mubr.f32.gmra.mrb[0].mxu0 %v972
      %v1717 = vpop.f32.mrb[0].mxu0
      %v1718 = vadd.f32 %v1493, %v1717
      %v1719 = vpop.f32.mrb[0].mxu0
      %1720 = vmatprep.mubr.f32.mxu0 %v976
      %1721 = vmatmul.mubr.f32.gmra.mrb[0].mxu0 %v975
      %v1722 = vpop.f32.mrb[0].mxu0
      %v1723 = vadd.f32 %v1498, %v1722
      %v1724 = vpop.f32.mrb[0].mxu0
      %1725 = vmatprep.mubr.f32.mxu0 %v979
      %1726 = vmatmul.mubr.f32.gmra.mrb[0].mxu0 %v978
      %v1727 = vpop.f32.mrb[0].mxu0
      %v1728 = vadd.f32 %v1503, %v1727
      %v1729 = vpop.f32.mrb[0].mxu0
      %1730 = vmatprep.mubr.f32.mxu0 %v982
      %1731 = vmatmul.mubr.f32.gmra.mrb[0].mxu0 %v981
      %v1732 = vpop.f32.mrb[0].mxu0
      %v1733 = vadd.f32 %v1508, %v1732
      %v1734 = vpop.f32.mrb[0].mxu0
      %1735 = vmatprep.mubr.f32.mxu0 %v985
      %1736 = vmatmul.mubr.f32.gmra.mrb[0].mxu0 %v984
      %v1737 = vpop.f32.mrb[0].mxu0
      %v1738 = vadd.f32 %v1513, %v1737
      %v1739 = vpop.f32.mrb[0].mxu0
      %1740 = vmatprep.mubr.f32.mxu0 %v988
      %1741 = vmatmul.mubr.f32.gmra.mrb[0].mxu0 %v987
      %v1742 = vpop.f32.mrb[0].mxu0
      %v1743 = vadd.f32 %v1518, %v1742
      %v1744 = vpop.f32.mrb[0].mxu0
      %1745 = vmatprep.mubr.f32.mxu0 %v991
      %1746 = vmatmul.mubr.f32.gmra.mrb[0].mxu0 %v990
      %v1747 = vpop.f32.mrb[0].mxu0
      %v1748 = vadd.f32 %v1523, %v1747
      %v1749 = vpop.f32.mrb[0].mxu0
      %1750 = vmatprep.mubr.f32.mxu0 %v994
      %1751 = vmatmul.mubr.f32.gmra.mrb[0].mxu0 %v993
      %v1752 = vpop.f32.mrb[0].mxu0
      %v1753 = vadd.f32 %v1528, %v1752
      %v1754 = vpop.f32.mrb[0].mxu0
      %1755 = vmatprep.mubr.f32.mxu0 %v997
      %1756 = vmatmul.mubr.f32.gmra.mrb[0].mxu0 %v996
      %v1757 = vpop.f32.mrb[0].mxu0
      %v1758 = vadd.f32 %v1533, %v1757
      %v1759 = vpop.f32.mrb[0].mxu0
      %1760 = vmatprep.mubr.f32.mxu0 %v1000
      %1761 = vmatmul.mubr.f32.gmra.mrb[0].mxu0 %v999
      %v1762 = vpop.f32.mrb[0].mxu0
      %v1763 = vadd.f32 %v1538, %v1762
      %v1764 = vpop.f32.mrb[0].mxu0
      %1765 = vmatprep.mubr.f32.mxu0 %v1003
      %1766 = vmatmul.mubr.f32.gmra.mrb[0].mxu0 %v1002
      %v1767 = vpop.f32.mrb[0].mxu0
      %v1768 = vadd.f32 %v1543, %v1767
      %v1769 = vpop.f32.mrb[0].mxu0
      %1770 = vmatprep.mubr.f32.mxu0 %v1006
      %1771 = vmatmul.mubr.f32.gmra.mrb[0].mxu0 %v1005
      %v1772 = vpop.f32.mrb[0].mxu0
      %v1773 = vadd.f32 %v1548, %v1772
      %v1774 = vpop.f32.mrb[0].mxu0
      %1775 = vmatprep.mubr.f32.mxu0 %v1009
      %1776 = vmatmul.mubr.f32.gmra.mrb[0].mxu0 %v1008
      %v1777 = vpop.f32.mrb[0].mxu0
      %v1778 = vadd.f32 %v1553, %v1777
      %v1779 = vpop.f32.mrb[0].mxu0
      %1780 = vmatprep.mubr.f32.mxu0 %v1012
      %1781 = vmatmul.mubr.f32.gmra.mrb[0].mxu0 %v1011
      %v1782 = vpop.f32.mrb[0].mxu0
      %v1783 = vadd.f32 %v1558, %v1782
      %v1784 = vpop.f32.mrb[0].mxu0
      %1785 = vdwg.mxu0
      %1786 = vmatprep.subr.mxu0 0.0
      %1787 = vmatpush1.msra.mxu0 %v824
      %1788 = vmatprep.subr.mxu0 0.0
      %1789 = vmatpush1.msra.mxu0 %v830
      %1790 = vmatprep.subr.mxu0 0.0
      %1791 = vmatpush1.msra.mxu0 %v836
      %1792 = vmatprep.subr.mxu0 0.0
      %1793 = vmatpush1.msra.mxu0 %v842
      %1794 = vmatprep.subr.mxu0 0.0
      %1795 = vmatpush1.msra.mxu0 %v848
      %1796 = vmatprep.subr.mxu0 0.0
      %1797 = vmatpush1.msra.mxu0 %v854
      %1798 = vmatprep.subr.mxu0 0.0
      %1799 = vmatpush1.msra.mxu0 %v860
      %1800 = vmatprep.subr.mxu0 0.0
      %1801 = vmatpush1.msra.mxu0 %v866
      %1802 = vmatprep.subr.mxu0 0.0
      %1803 = vmatpush1.msra.mxu0 %v872
      %1804 = vmatprep.subr.mxu0 0.0
      %1805 = vmatpush1.msra.mxu0 %v878
      %1806 = vmatprep.subr.mxu0 0.0
      %1807 = vmatpush1.msra.mxu0 %v884
      %1808 = vmatprep.subr.mxu0 0.0
      %1809 = vmatpush1.msra.mxu0 %v890
      %1810 = vmatprep.subr.mxu0 0.0
      %1811 = vmatpush1.msra.mxu0 %v896
      %1812 = vmatprep.subr.mxu0 0.0
      %1813 = vmatpush1.msra.mxu0 %v902
      %1814 = vmatprep.subr.mxu0 0.0
      %1815 = vmatpush1.msra.mxu0 %v908
      %1816 = vmatprep.subr.mxu0 0.0
      %1817 = vmatpush1.msra.mxu0 %v914
      %1818 = vmatprep.subr.mxu0 0.0
      %1819 = vmatpush1.msra.mxu0 0.0
      %1820 = vmatprep.subr.mxu0 0.0
      %1821 = vmatpush1.msra.mxu0 0.0
      %1822 = vmatprep.subr.mxu0 0.0
      %1823 = vmatpush1.msra.mxu0 0.0
      %1824 = vmatprep.subr.mxu0 0.0
      %1825 = vmatpush1.msra.mxu0 0.0
      %1826 = vmatprep.subr.mxu0 0.0
      %1827 = vmatpush1.msra.mxu0 0.0
      %1828 = vmatprep.subr.mxu0 0.0
      %1829 = vmatpush1.msra.mxu0 0.0
      %1830 = vmatprep.subr.mxu0 0.0
      %1831 = vmatpush1.msra.mxu0 0.0
      %1832 = vmatprep.subr.mxu0 0.0
      %1833 = vmatpush1.msra.mxu0 0.0
      %1834 = vmatprep.subr.mxu0 0.0
      %1835 = vmatpush1.msra.mxu0 0.0
      %1836 = vmatprep.subr.mxu0 0.0
      %1837 = vmatpush1.msra.mxu0 0.0
      %1838 = vmatprep.subr.mxu0 0.0
      %1839 = vmatpush1.msra.mxu0 0.0
      %1840 = vmatprep.subr.mxu0 0.0
      %1841 = vmatpush1.msra.mxu0 0.0
      %1842 = vmatprep.subr.mxu0 0.0
      %1843 = vmatpush1.msra.mxu0 0.0
      %1844 = vmatprep.subr.mxu0 0.0
      %1845 = vmatpush1.msra.mxu0 0.0
      %1846 = vmatprep.subr.mxu0 0.0
      %1847 = vmatpush1.msra.mxu0 0.0
      %1848 = vmatprep.subr.mxu0 0.0
      %1849 = vmatpush1.msra.mxu0 0.0
      %1850 = vmatprep.mubr.f32.mxu0 0.0
      %1851 = vmatmul.mubr.f32.gmra.mrb[0].mxu0 %v920
      %v1852 = vpop.f32.mrb[0].mxu0
      %v1853 = vadd.f32 %v1628, %v1852
      %v1854 = vpop.f32.mrb[0].mxu0
      %1855 = vmatprep.mubr.f32.mxu0 0.0
      %1856 = vmatmul.mubr.f32.gmra.mrb[0].mxu0 %v923
      %v1857 = vpop.f32.mrb[0].mxu0
      %v1858 = vadd.f32 %v1633, %v1857
      %v1859 = vpop.f32.mrb[0].mxu0
      %1860 = vmatprep.mubr.f32.mxu0 0.0
      %1861 = vmatmul.mubr.f32.gmra.mrb[0].mxu0 %v926
      %v1862 = vpop.f32.mrb[0].mxu0
      %v1863 = vadd.f32 %v1638, %v1862
      %v1864 = vpop.f32.mrb[0].mxu0
      %1865 = vmatprep.mubr.f32.mxu0 0.0
      %1866 = vmatmul.mubr.f32.gmra.mrb[0].mxu0 %v929
      %v1867 = vpop.f32.mrb[0].mxu0
      %v1868 = vadd.f32 %v1643, %v1867
      %v1869 = vpop.f32.mrb[0].mxu0
      %1870 = vmatprep.mubr.f32.mxu0 0.0
      %1871 = vmatmul.mubr.f32.gmra.mrb[0].mxu0 %v932
      %v1872 = vpop.f32.mrb[0].mxu0
      %v1873 = vadd.f32 %v1648, %v1872
      %v1874 = vpop.f32.mrb[0].mxu0
      %1875 = vmatprep.mubr.f32.mxu0 0.0
      %1876 = vmatmul.mubr.f32.gmra.mrb[0].mxu0 %v935
      %v1877 = vpop.f32.mrb[0].mxu0
      %v1878 = vadd.f32 %v1653, %v1877
      %v1879 = vpop.f32.mrb[0].mxu0
      %1880 = vmatprep.mubr.f32.mxu0 0.0
      %1881 = vmatmul.mubr.f32.gmra.mrb[0].mxu0 %v938
      %v1882 = vpop.f32.mrb[0].mxu0
      %v1883 = vadd.f32 %v1658, %v1882
      %v1884 = vpop.f32.mrb[0].mxu0
      %1885 = vmatprep.mubr.f32.mxu0 0.0
      %1886 = vmatmul.mubr.f32.gmra.mrb[0].mxu0 %v941
      %v1887 = vpop.f32.mrb[0].mxu0
      %v1888 = vadd.f32 %v1663, %v1887
      %v1889 = vpop.f32.mrb[0].mxu0
      %1890 = vmatprep.mubr.f32.mxu0 0.0
      %1891 = vmatmul.mubr.f32.gmra.mrb[0].mxu0 %v944
      %v1892 = vpop.f32.mrb[0].mxu0
      %v1893 = vadd.f32 %v1668, %v1892
      %v1894 = vpop.f32.mrb[0].mxu0
      %1895 = vmatprep.mubr.f32.mxu0 0.0
      %1896 = vmatmul.mubr.f32.gmra.mrb[0].mxu0 %v947
      %v1897 = vpop.f32.mrb[0].mxu0
      %v1898 = vadd.f32 %v1673, %v1897
      %v1899 = vpop.f32.mrb[0].mxu0
      %1900 = vmatprep.mubr.f32.mxu0 0.0
      %1901 = vmatmul.mubr.f32.gmra.mrb[0].mxu0 %v950
      %v1902 = vpop.f32.mrb[0].mxu0
      %v1903 = vadd.f32 %v1678, %v1902
      %v1904 = vpop.f32.mrb[0].mxu0
      %1905 = vmatprep.mubr.f32.mxu0 0.0
      %1906 = vmatmul.mubr.f32.gmra.mrb[0].mxu0 %v953
      %v1907 = vpop.f32.mrb[0].mxu0
      %v1908 = vadd.f32 %v1683, %v1907
      %v1909 = vpop.f32.mrb[0].mxu0
      %1910 = vmatprep.mubr.f32.mxu0 0.0
      %1911 = vmatmul.mubr.f32.gmra.mrb[0].mxu0 %v956
      %v1912 = vpop.f32.mrb[0].mxu0
      %v1913 = vadd.f32 %v1688, %v1912
      %v1914 = vpop.f32.mrb[0].mxu0
      %1915 = vmatprep.mubr.f32.mxu0 0.0
      %1916 = vmatmul.mubr.f32.gmra.mrb[0].mxu0 %v959
      %v1917 = vpop.f32.mrb[0].mxu0
      %v1918 = vadd.f32 %v1693, %v1917
      %v1919 = vpop.f32.mrb[0].mxu0
      %1920 = vmatprep.mubr.f32.mxu0 0.0
      %1921 = vmatmul.mubr.f32.gmra.mrb[0].mxu0 %v962
      %v1922 = vpop.f32.mrb[0].mxu0
      %v1923 = vadd.f32 %v1698, %v1922
      %v1924 = vpop.f32.mrb[0].mxu0
      %1925 = vmatprep.mubr.f32.mxu0 0.0
      %1926 = vmatmul.mubr.f32.gmra.mrb[0].mxu0 %v965
      %v1927 = vpop.f32.mrb[0].mxu0
      %v1928 = vadd.f32 %v1703, %v1927
      %v1929 = vpop.f32.mrb[0].mxu0
      %1930 = vmatprep.mubr.f32.mxu0 0.0
      %1931 = vmatmul.mubr.f32.gmra.mrb[0].mxu0 %v968
      %v1932 = vpop.f32.mrb[0].mxu0
      %v1933 = vadd.f32 %v1708, %v1932
      %v1934 = vpop.f32.mrb[0].mxu0
      %1935 = vmatprep.mubr.f32.mxu0 0.0
      %1936 = vmatmul.mubr.f32.gmra.mrb[0].mxu0 %v971
      %v1937 = vpop.f32.mrb[0].mxu0
      %v1938 = vadd.f32 %v1713, %v1937
      %v1939 = vpop.f32.mrb[0].mxu0
      %1940 = vmatprep.mubr.f32.mxu0 0.0
      %1941 = vmatmul.mubr.f32.gmra.mrb[0].mxu0 %v974
      %v1942 = vpop.f32.mrb[0].mxu0
      %v1943 = vadd.f32 %v1718, %v1942
      %v1944 = vpop.f32.mrb[0].mxu0
      %1945 = vmatprep.mubr.f32.mxu0 0.0
      %1946 = vmatmul.mubr.f32.gmra.mrb[0].mxu0 %v977
      %v1947 = vpop.f32.mrb[0].mxu0
      %v1948 = vadd.f32 %v1723, %v1947
      %v1949 = vpop.f32.mrb[0].mxu0
      %1950 = vmatprep.mubr.f32.mxu0 0.0
      %1951 = vmatmul.mubr.f32.gmra.mrb[0].mxu0 %v980
      %v1952 = vpop.f32.mrb[0].mxu0
      %v1953 = vadd.f32 %v1728, %v1952
      %v1954 = vpop.f32.mrb[0].mxu0
      %1955 = vmatprep.mubr.f32.mxu0 0.0
      %1956 = vmatmul.mubr.f32.gmra.mrb[0].mxu0 %v983
      %v1957 = vpop.f32.mrb[0].mxu0
      %v1958 = vadd.f32 %v1733, %v1957
      %v1959 = vpop.f32.mrb[0].mxu0
      %1960 = vmatprep.mubr.f32.mxu0 0.0
      %1961 = vmatmul.mubr.f32.gmra.mrb[0].mxu0 %v986
      %v1962 = vpop.f32.mrb[0].mxu0
      %v1963 = vadd.f32 %v1738, %v1962
      %v1964 = vpop.f32.mrb[0].mxu0
      %1965 = vmatprep.mubr.f32.mxu0 0.0
      %1966 = vmatmul.mubr.f32.gmra.mrb[0].mxu0 %v989
      %v1967 = vpop.f32.mrb[0].mxu0
      %v1968 = vadd.f32 %v1743, %v1967
      %v1969 = vpop.f32.mrb[0].mxu0
      %1970 = vmatprep.mubr.f32.mxu0 0.0
      %1971 = vmatmul.mubr.f32.gmra.mrb[0].mxu0 %v992
      %v1972 = vpop.f32.mrb[0].mxu0
      %v1973 = vadd.f32 %v1748, %v1972
      %v1974 = vpop.f32.mrb[0].mxu0
      %1975 = vmatprep.mubr.f32.mxu0 0.0
      %1976 = vmatmul.mubr.f32.gmra.mrb[0].mxu0 %v995
      %v1977 = vpop.f32.mrb[0].mxu0
      %v1978 = vadd.f32 %v1753, %v1977
      %v1979 = vpop.f32.mrb[0].mxu0
      %1980 = vmatprep.mubr.f32.mxu0 0.0
      %1981 = vmatmul.mubr.f32.gmra.mrb[0].mxu0 %v998
      %v1982 = vpop.f32.mrb[0].mxu0
      %v1983 = vadd.f32 %v1758, %v1982
      %v1984 = vpop.f32.mrb[0].mxu0
      %1985 = vmatprep.mubr.f32.mxu0 0.0
      %1986 = vmatmul.mubr.f32.gmra.mrb[0].mxu0 %v1001
      %v1987 = vpop.f32.mrb[0].mxu0
      %v1988 = vadd.f32 %v1763, %v1987
      %v1989 = vpop.f32.mrb[0].mxu0
      %1990 = vmatprep.mubr.f32.mxu0 0.0
      %1991 = vmatmul.mubr.f32.gmra.mrb[0].mxu0 %v1004
      %v1992 = vpop.f32.mrb[0].mxu0
      %v1993 = vadd.f32 %v1768, %v1992
      %v1994 = vpop.f32.mrb[0].mxu0
      %1995 = vmatprep.mubr.f32.mxu0 0.0
      %1996 = vmatmul.mubr.f32.gmra.mrb[0].mxu0 %v1007
      %v1997 = vpop.f32.mrb[0].mxu0
      %v1998 = vadd.f32 %v1773, %v1997
      %v1999 = vpop.f32.mrb[0].mxu0
      %2000 = vmatprep.mubr.f32.mxu0 0.0
      %2001 = vmatmul.mubr.f32.gmra.mrb[0].mxu0 %v1010
      %v2002 = vpop.f32.mrb[0].mxu0
      %v2003 = vadd.f32 %v1778, %v2002
      %v2004 = vpop.f32.mrb[0].mxu0
      %2005 = vmatprep.mubr.f32.mxu0 0.0
      %2006 = vmatmul.mubr.f32.gmra.mrb[0].mxu0 %v1013
      %v2007 = vpop.f32.mrb[0].mxu0
      %v2008 = vadd.f32 %v1783, %v2007
      %v2009 = vpop.f32.mrb[0].mxu0
      %2010 = vdwg.mxu0
      %v2011 = vld [vmem:[%s9] sm:$0x1]
      %v2012 = vlaneseq
      %v2013 = vshrl.u32 %v2012, 7
      %v2014 = vsub.s32 0, %v2013
      %v2015 = vrot.slane %v2011, %v2014
      %v2016 = vadd.f32 %v1853, %v2015
      %v2017 = vadd.f32 %v1858, %v2015
      %v2018 = vadd.f32 %v1863, %v2015
      %v2019 = vadd.f32 %v1868, %v2015
      %v2020 = vadd.f32 %v1873, %v2015
      %v2021 = vadd.f32 %v1878, %v2015
      %v2022 = vadd.f32 %v1883, %v2015
      %v2023 = vadd.f32 %v1888, %v2015
      %v2024 = vadd.f32 %v1893, %v2015
      %v2025 = vadd.f32 %v1898, %v2015
      %v2026 = vadd.f32 %v1903, %v2015
      %v2027 = vadd.f32 %v1908, %v2015
      %v2028 = vadd.f32 %v1913, %v2015
      %v2029 = vadd.f32 %v1918, %v2015
      %v2030 = vadd.f32 %v1923, %v2015
      %v2031 = vadd.f32 %v1928, %v2015
      %v2032 = vadd.f32 %v1933, %v2015
      %v2033 = vadd.f32 %v1938, %v2015
      %v2034 = vadd.f32 %v1943, %v2015
      %v2035 = vadd.f32 %v1948, %v2015
      %v2036 = vadd.f32 %v1953, %v2015
      %v2037 = vadd.f32 %v1958, %v2015
      %v2038 = vadd.f32 %v1963, %v2015
      %v2039 = vadd.f32 %v1968, %v2015
      %v2040 = vadd.f32 %v1973, %v2015
      %v2041 = vadd.f32 %v1978, %v2015
      %v2042 = vadd.f32 %v1983, %v2015
      %v2043 = vadd.f32 %v1988, %v2015
      %v2044 = vadd.f32 %v1993, %v2015
      %v2045 = vadd.f32 %v1998, %v2015
      %v2046 = vadd.f32 %v2003, %v2015
      %v2047 = vadd.f32 %v2008, %v2015
      %v2048 = vmax.f32 %v2016, 0.0
      %v2049 = vmax.f32 %v2017, 0.0
      %v2050 = vmax.f32 %v2018, 0.0
      %v2051 = vmax.f32 %v2019, 0.0
      %v2052 = vmax.f32 %v2020, 0.0
      %v2053 = vmax.f32 %v2021, 0.0
      %v2054 = vmax.f32 %v2022, 0.0
      %v2055 = vmax.f32 %v2023, 0.0
      %v2056 = vmax.f32 %v2024, 0.0
      %v2057 = vmax.f32 %v2025, 0.0
      %v2058 = vmax.f32 %v2026, 0.0
      %v2059 = vmax.f32 %v2027, 0.0
      %v2060 = vmax.f32 %v2028, 0.0
      %v2061 = vmax.f32 %v2029, 0.0
      %v2062 = vmax.f32 %v2030, 0.0
      %v2063 = vmax.f32 %v2031, 0.0
      %v2064 = vmax.f32 %v2032, 0.0
      %v2065 = vmax.f32 %v2033, 0.0
      %v2066 = vmax.f32 %v2034, 0.0
      %v2067 = vmax.f32 %v2035, 0.0
      %v2068 = vmax.f32 %v2036, 0.0
      %v2069 = vmax.f32 %v2037, 0.0
      %v2070 = vmax.f32 %v2038, 0.0
      %v2071 = vmax.f32 %v2039, 0.0
      %v2072 = vmax.f32 %v2040, 0.0
      %v2073 = vmax.f32 %v2041, 0.0
      %v2074 = vmax.f32 %v2042, 0.0
      %v2075 = vmax.f32 %v2043, 0.0
      %v2076 = vmax.f32 %v2044, 0.0
      %v2077 = vmax.f32 %v2045, 0.0
      %v2078 = vmax.f32 %v2046, 0.0
      %v2079 = vmax.f32 %v2047, 0.0
      %v2080 = vld [vmem:[%s3] sm:$0xff]
      %v2081 = vld [vmem:[%s3 + $0x8] sm:$0xff]
      %v2082 = vld [vmem:[%s3 + $0x10] sm:$0xff]
      %v2083 = vld [vmem:[%s3 + $0x18] sm:$0xff]
      %v2084 = vld [vmem:[%s3 + $0x20] sm:$0xff]
      %v2085 = vld [vmem:[%s3 + $0x28] sm:$0xff]
      %v2086 = vld [vmem:[%s3 + $0x30] sm:$0xff]
      %v2087 = vld [vmem:[%s3 + $0x38] sm:$0xff]
      %v2088 = vld [vmem:[%s3 + $0x40] sm:$0xff]
      %v2089 = vld [vmem:[%s3 + $0x48] sm:$0xff]
      %v2090 = vld [vmem:[%s3 + $0x50] sm:$0xff]
      %v2091 = vld [vmem:[%s3 + $0x58] sm:$0xff]
      %v2092 = vld [vmem:[%s3 + $0x60] sm:$0xff]
      %v2093 = vld [vmem:[%s3 + $0x68] sm:$0xff]
      %v2094 = vld [vmem:[%s3 + $0x70] sm:$0xff]
      %v2095 = vld [vmem:[%s3 + $0x78] sm:$0xff]
      %v2096 = vld [vmem:[%s3 + $0x80] sm:$0xff]
      %v2097 = vld [vmem:[%s3 + $0x88] sm:$0xff]
      %v2098 = vld [vmem:[%s3 + $0x90] sm:$0xff]
      %v2099 = vld [vmem:[%s3 + $0x98] sm:$0xff]
      %v2100 = vld [vmem:[%s3 + $0xa0] sm:$0xff]
      %v2101 = vld [vmem:[%s3 + $0xa8] sm:$0xff]
      %v2102 = vld [vmem:[%s3 + $0xb0] sm:$0xff]
      %v2103 = vld [vmem:[%s3 + $0xb8] sm:$0xff]
      %v2104 = vld [vmem:[%s3 + $0xc0] sm:$0xff]
      %v2105 = vld [vmem:[%s3 + $0xc8] sm:$0xff]
      %v2106 = vld [vmem:[%s3 + $0xd0] sm:$0xff]
      %v2107 = vld [vmem:[%s3 + $0xd8] sm:$0xff]
      %v2108 = vld [vmem:[%s3 + $0xe0] sm:$0xff]
      %v2109 = vld [vmem:[%s3 + $0xe8] sm:$0xff]
      %v2110 = vld [vmem:[%s3 + $0xf0] sm:$0xff]
      %v2111 = vld [vmem:[%s3 + $0xf8] sm:$0xff]
      %v2112 = vld [vmem:[%s3 + $0x100] sm:$0xff]
      %v2113 = vld [vmem:[%s3 + $0x108] sm:$0xff]
      %v2114 = vld [vmem:[%s3 + $0x110] sm:$0xff]
      %v2115 = vld [vmem:[%s3 + $0x118] sm:$0xff]
      %v2116 = vld [vmem:[%s3 + $0x120] sm:$0xff]
      %v2117 = vld [vmem:[%s3 + $0x128] sm:$0xff]
      %v2118 = vld [vmem:[%s3 + $0x130] sm:$0xff]
      %v2119 = vld [vmem:[%s3 + $0x138] sm:$0xff]
      %v2120 = vld [vmem:[%s3 + $0x140] sm:$0xff]
      %v2121 = vld [vmem:[%s3 + $0x148] sm:$0xff]
      %v2122 = vld [vmem:[%s3 + $0x150] sm:$0xff]
      %v2123 = vld [vmem:[%s3 + $0x158] sm:$0xff]
      %v2124 = vld [vmem:[%s3 + $0x160] sm:$0xff]
      %v2125 = vld [vmem:[%s3 + $0x168] sm:$0xff]
      %v2126 = vld [vmem:[%s3 + $0x170] sm:$0xff]
      %v2127 = vld [vmem:[%s3 + $0x178] sm:$0xff]
      %2128 = vmatprep.subr.mxu0 %v2081
      %2129 = vmatpush1.msra.mxu0 %v2080
      %2130 = vmatprep.subr.mxu0 %v2084
      %2131 = vmatpush1.msra.mxu0 %v2083
      %2132 = vmatprep.subr.mxu0 %v2087
      %2133 = vmatpush1.msra.mxu0 %v2086
      %2134 = vmatprep.subr.mxu0 %v2090
      %2135 = vmatpush1.msra.mxu0 %v2089
      %2136 = vmatprep.subr.mxu0 %v2093
      %2137 = vmatpush1.msra.mxu0 %v2092
      %2138 = vmatprep.subr.mxu0 %v2096
      %2139 = vmatpush1.msra.mxu0 %v2095
      %2140 = vmatprep.subr.mxu0 %v2099
      %2141 = vmatpush1.msra.mxu0 %v2098
      %2142 = vmatprep.subr.mxu0 %v2102
      %2143 = vmatpush1.msra.mxu0 %v2101
      %2144 = vmatprep.subr.mxu0 %v2105
      %2145 = vmatpush1.msra.mxu0 %v2104
      %2146 = vmatprep.subr.mxu0 %v2108
      %2147 = vmatpush1.msra.mxu0 %v2107
      %2148 = vmatprep.subr.mxu0 %v2111
      %2149 = vmatpush1.msra.mxu0 %v2110
      %2150 = vmatprep.subr.mxu0 %v2114
      %2151 = vmatpush1.msra.mxu0 %v2113
      %2152 = vmatprep.subr.mxu0 %v2117
      %2153 = vmatpush1.msra.mxu0 %v2116
      %2154 = vmatprep.subr.mxu0 %v2120
      %2155 = vmatpush1.msra.mxu0 %v2119
      %2156 = vmatprep.subr.mxu0 %v2123
      %2157 = vmatpush1.msra.mxu0 %v2122
      %2158 = vmatprep.subr.mxu0 %v2126
      %2159 = vmatpush1.msra.mxu0 %v2125
      %2160 = vmatprep.subr.mxu0 0.0
      %2161 = vmatpush1.msra.mxu0 0.0
      %2162 = vmatprep.subr.mxu0 0.0
      %2163 = vmatpush1.msra.mxu0 0.0
      %2164 = vmatprep.subr.mxu0 0.0
      %2165 = vmatpush1.msra.mxu0 0.0
      %2166 = vmatprep.subr.mxu0 0.0
      %2167 = vmatpush1.msra.mxu0 0.0
      %2168 = vmatprep.subr.mxu0 0.0
      %2169 = vmatpush1.msra.mxu0 0.0
      %2170 = vmatprep.subr.mxu0 0.0
      %2171 = vmatpush1.msra.mxu0 0.0
      %2172 = vmatprep.subr.mxu0 0.0
      %2173 = vmatpush1.msra.mxu0 0.0
      %2174 = vmatprep.subr.mxu0 0.0
      %2175 = vmatpush1.msra.mxu0 0.0
      %2176 = vmatprep.subr.mxu0 0.0
      %2177 = vmatpush1.msra.mxu0 0.0
      %2178 = vmatprep.subr.mxu0 0.0
      %2179 = vmatpush1.msra.mxu0 0.0
      %2180 = vmatprep.subr.mxu0 0.0
      %2181 = vmatpush1.msra.mxu0 0.0
      %2182 = vmatprep.subr.mxu0 0.0
      %2183 = vmatpush1.msra.mxu0 0.0
      %2184 = vmatprep.subr.mxu0 0.0
      %2185 = vmatpush1.msra.mxu0 0.0
      %2186 = vmatprep.subr.mxu0 0.0
      %2187 = vmatpush1.msra.mxu0 0.0
      %2188 = vmatprep.subr.mxu0 0.0
      %2189 = vmatpush1.msra.mxu0 0.0
      %2190 = vmatprep.subr.mxu0 0.0
      %2191 = vmatpush1.msra.mxu0 0.0
      %2192 = vmatprep.mubr.f32.mxu0 0.0
      %2193 = vmatmul.mubr.f32.gmra.mrb[0].mxu0 %v2048
      %v2194 = vpop.f32.mrb[0].mxu0
      %v2195 = vadd.f32 0.0, %v2194
      %v2196 = vpop.f32.mrb[0].mxu0
      %v2197 = vadd.f32 0.0, %v2196
      %2198 = vmatprep.mubr.f32.mxu0 0.0
      %2199 = vmatmul.mubr.f32.gmra.mrb[0].mxu0 %v2049
      %v2200 = vpop.f32.mrb[0].mxu0
      %v2201 = vadd.f32 0.0, %v2200
      %v2202 = vpop.f32.mrb[0].mxu0
      %v2203 = vadd.f32 0.0, %v2202
      %2204 = vmatprep.mubr.f32.mxu0 0.0
      %2205 = vmatmul.mubr.f32.gmra.mrb[0].mxu0 %v2050
      %v2206 = vpop.f32.mrb[0].mxu0
      %v2207 = vadd.f32 0.0, %v2206
      %v2208 = vpop.f32.mrb[0].mxu0
      %v2209 = vadd.f32 0.0, %v2208
      %2210 = vmatprep.mubr.f32.mxu0 0.0
      %2211 = vmatmul.mubr.f32.gmra.mrb[0].mxu0 %v2051
      %v2212 = vpop.f32.mrb[0].mxu0
      %v2213 = vadd.f32 0.0, %v2212
      %v2214 = vpop.f32.mrb[0].mxu0
      %v2215 = vadd.f32 0.0, %v2214
      %2216 = vmatprep.mubr.f32.mxu0 0.0
      %2217 = vmatmul.mubr.f32.gmra.mrb[0].mxu0 %v2052
      %v2218 = vpop.f32.mrb[0].mxu0
      %v2219 = vadd.f32 0.0, %v2218
      %v2220 = vpop.f32.mrb[0].mxu0
      %v2221 = vadd.f32 0.0, %v2220
      %2222 = vmatprep.mubr.f32.mxu0 0.0
      %2223 = vmatmul.mubr.f32.gmra.mrb[0].mxu0 %v2053
      %v2224 = vpop.f32.mrb[0].mxu0
      %v2225 = vadd.f32 0.0, %v2224
      %v2226 = vpop.f32.mrb[0].mxu0
      %v2227 = vadd.f32 0.0, %v2226
      %2228 = vmatprep.mubr.f32.mxu0 0.0
      %2229 = vmatmul.mubr.f32.gmra.mrb[0].mxu0 %v2054
      %v2230 = vpop.f32.mrb[0].mxu0
      %v2231 = vadd.f32 0.0, %v2230
      %v2232 = vpop.f32.mrb[0].mxu0
      %v2233 = vadd.f32 0.0, %v2232
      %2234 = vmatprep.mubr.f32.mxu0 0.0
      %2235 = vmatmul.mubr.f32.gmra.mrb[0].mxu0 %v2055
      %v2236 = vpop.f32.mrb[0].mxu0
      %v2237 = vadd.f32 0.0, %v2236
      %v2238 = vpop.f32.mrb[0].mxu0
      %v2239 = vadd.f32 0.0, %v2238
      %2240 = vmatprep.mubr.f32.mxu0 0.0
      %2241 = vmatmul.mubr.f32.gmra.mrb[0].mxu0 %v2056
      %v2242 = vpop.f32.mrb[0].mxu0
      %v2243 = vadd.f32 0.0, %v2242
      %v2244 = vpop.f32.mrb[0].mxu0
      %v2245 = vadd.f32 0.0, %v2244
      %2246 = vmatprep.mubr.f32.mxu0 0.0
      %2247 = vmatmul.mubr.f32.gmra.mrb[0].mxu0 %v2057
      %v2248 = vpop.f32.mrb[0].mxu0
      %v2249 = vadd.f32 0.0, %v2248
      %v2250 = vpop.f32.mrb[0].mxu0
      %v2251 = vadd.f32 0.0, %v2250
      %2252 = vmatprep.mubr.f32.mxu0 0.0
      %2253 = vmatmul.mubr.f32.gmra.mrb[0].mxu0 %v2058
      %v2254 = vpop.f32.mrb[0].mxu0
      %v2255 = vadd.f32 0.0, %v2254
      %v2256 = vpop.f32.mrb[0].mxu0
      %v2257 = vadd.f32 0.0, %v2256
      %2258 = vmatprep.mubr.f32.mxu0 0.0
      %2259 = vmatmul.mubr.f32.gmra.mrb[0].mxu0 %v2059
      %v2260 = vpop.f32.mrb[0].mxu0
      %v2261 = vadd.f32 0.0, %v2260
      %v2262 = vpop.f32.mrb[0].mxu0
      %v2263 = vadd.f32 0.0, %v2262
      %2264 = vmatprep.mubr.f32.mxu0 0.0
      %2265 = vmatmul.mubr.f32.gmra.mrb[0].mxu0 %v2060
      %v2266 = vpop.f32.mrb[0].mxu0
      %v2267 = vadd.f32 0.0, %v2266
      %v2268 = vpop.f32.mrb[0].mxu0
      %v2269 = vadd.f32 0.0, %v2268
      %2270 = vmatprep.mubr.f32.mxu0 0.0
      %2271 = vmatmul.mubr.f32.gmra.mrb[0].mxu0 %v2061
      %v2272 = vpop.f32.mrb[0].mxu0
      %v2273 = vadd.f32 0.0, %v2272
      %v2274 = vpop.f32.mrb[0].mxu0
      %v2275 = vadd.f32 0.0, %v2274
      %2276 = vmatprep.mubr.f32.mxu0 0.0
      %2277 = vmatmul.mubr.f32.gmra.mrb[0].mxu0 %v2062
      %v2278 = vpop.f32.mrb[0].mxu0
      %v2279 = vadd.f32 0.0, %v2278
      %v2280 = vpop.f32.mrb[0].mxu0
      %v2281 = vadd.f32 0.0, %v2280
      %2282 = vmatprep.mubr.f32.mxu0 0.0
      %2283 = vmatmul.mubr.f32.gmra.mrb[0].mxu0 %v2063
      %v2284 = vpop.f32.mrb[0].mxu0
      %v2285 = vadd.f32 0.0, %v2284
      %v2286 = vpop.f32.mrb[0].mxu0
      %v2287 = vadd.f32 0.0, %v2286
      %2288 = vmatprep.mubr.f32.mxu0 0.0
      %2289 = vmatmul.mubr.f32.gmra.mrb[0].mxu0 %v2064
      %v2290 = vpop.f32.mrb[0].mxu0
      %v2291 = vadd.f32 0.0, %v2290
      %v2292 = vpop.f32.mrb[0].mxu0
      %v2293 = vadd.f32 0.0, %v2292
      %2294 = vmatprep.mubr.f32.mxu0 0.0
      %2295 = vmatmul.mubr.f32.gmra.mrb[0].mxu0 %v2065
      %v2296 = vpop.f32.mrb[0].mxu0
      %v2297 = vadd.f32 0.0, %v2296
      %v2298 = vpop.f32.mrb[0].mxu0
      %v2299 = vadd.f32 0.0, %v2298
      %2300 = vmatprep.mubr.f32.mxu0 0.0
      %2301 = vmatmul.mubr.f32.gmra.mrb[0].mxu0 %v2066
      %v2302 = vpop.f32.mrb[0].mxu0
      %v2303 = vadd.f32 0.0, %v2302
      %v2304 = vpop.f32.mrb[0].mxu0
      %v2305 = vadd.f32 0.0, %v2304
      %2306 = vmatprep.mubr.f32.mxu0 0.0
      %2307 = vmatmul.mubr.f32.gmra.mrb[0].mxu0 %v2067
      %v2308 = vpop.f32.mrb[0].mxu0
      %v2309 = vadd.f32 0.0, %v2308
      %v2310 = vpop.f32.mrb[0].mxu0
      %v2311 = vadd.f32 0.0, %v2310
      %2312 = vmatprep.mubr.f32.mxu0 0.0
      %2313 = vmatmul.mubr.f32.gmra.mrb[0].mxu0 %v2068
      %v2314 = vpop.f32.mrb[0].mxu0
      %v2315 = vadd.f32 0.0, %v2314
      %v2316 = vpop.f32.mrb[0].mxu0
      %v2317 = vadd.f32 0.0, %v2316
      %2318 = vmatprep.mubr.f32.mxu0 0.0
      %2319 = vmatmul.mubr.f32.gmra.mrb[0].mxu0 %v2069
      %v2320 = vpop.f32.mrb[0].mxu0
      %v2321 = vadd.f32 0.0, %v2320
      %v2322 = vpop.f32.mrb[0].mxu0
      %v2323 = vadd.f32 0.0, %v2322
      %2324 = vmatprep.mubr.f32.mxu0 0.0
      %2325 = vmatmul.mubr.f32.gmra.mrb[0].mxu0 %v2070
      %v2326 = vpop.f32.mrb[0].mxu0
      %v2327 = vadd.f32 0.0, %v2326
      %v2328 = vpop.f32.mrb[0].mxu0
      %v2329 = vadd.f32 0.0, %v2328
      %2330 = vmatprep.mubr.f32.mxu0 0.0
      %2331 = vmatmul.mubr.f32.gmra.mrb[0].mxu0 %v2071
      %v2332 = vpop.f32.mrb[0].mxu0
      %v2333 = vadd.f32 0.0, %v2332
      %v2334 = vpop.f32.mrb[0].mxu0
      %v2335 = vadd.f32 0.0, %v2334
      %2336 = vmatprep.mubr.f32.mxu0 0.0
      %2337 = vmatmul.mubr.f32.gmra.mrb[0].mxu0 %v2072
      %v2338 = vpop.f32.mrb[0].mxu0
      %v2339 = vadd.f32 0.0, %v2338
      %v2340 = vpop.f32.mrb[0].mxu0
      %v2341 = vadd.f32 0.0, %v2340
      %2342 = vmatprep.mubr.f32.mxu0 0.0
      %2343 = vmatmul.mubr.f32.gmra.mrb[0].mxu0 %v2073
      %v2344 = vpop.f32.mrb[0].mxu0
      %v2345 = vadd.f32 0.0, %v2344
      %v2346 = vpop.f32.mrb[0].mxu0
      %v2347 = vadd.f32 0.0, %v2346
      %2348 = vmatprep.mubr.f32.mxu0 0.0
      %2349 = vmatmul.mubr.f32.gmra.mrb[0].mxu0 %v2074
      %v2350 = vpop.f32.mrb[0].mxu0
      %v2351 = vadd.f32 0.0, %v2350
      %v2352 = vpop.f32.mrb[0].mxu0
      %v2353 = vadd.f32 0.0, %v2352
      %2354 = vmatprep.mubr.f32.mxu0 0.0
      %2355 = vmatmul.mubr.f32.gmra.mrb[0].mxu0 %v2075
      %v2356 = vpop.f32.mrb[0].mxu0
      %v2357 = vadd.f32 0.0, %v2356
      %v2358 = vpop.f32.mrb[0].mxu0
      %v2359 = vadd.f32 0.0, %v2358
      %2360 = vmatprep.mubr.f32.mxu0 0.0
      %2361 = vmatmul.mubr.f32.gmra.mrb[0].mxu0 %v2076
      %v2362 = vpop.f32.mrb[0].mxu0
      %v2363 = vadd.f32 0.0, %v2362
      %v2364 = vpop.f32.mrb[0].mxu0
      %v2365 = vadd.f32 0.0, %v2364
      %2366 = vmatprep.mubr.f32.mxu0 0.0
      %2367 = vmatmul.mubr.f32.gmra.mrb[0].mxu0 %v2077
      %v2368 = vpop.f32.mrb[0].mxu0
      %v2369 = vadd.f32 0.0, %v2368
      %v2370 = vpop.f32.mrb[0].mxu0
      %v2371 = vadd.f32 0.0, %v2370
      %2372 = vmatprep.mubr.f32.mxu0 0.0
      %2373 = vmatmul.mubr.f32.gmra.mrb[0].mxu0 %v2078
      %v2374 = vpop.f32.mrb[0].mxu0
      %v2375 = vadd.f32 0.0, %v2374
      %v2376 = vpop.f32.mrb[0].mxu0
      %v2377 = vadd.f32 0.0, %v2376
      %2378 = vmatprep.mubr.f32.mxu0 0.0
      %2379 = vmatmul.mubr.f32.gmra.mrb[0].mxu0 %v2079
      %v2380 = vpop.f32.mrb[0].mxu0
      %v2381 = vadd.f32 0.0, %v2380
      %v2382 = vpop.f32.mrb[0].mxu0
      %v2383 = vadd.f32 0.0, %v2382
      %2384 = vdwg.mxu0
      %2385 = vmatprep.subr.mxu0 0.0
      %2386 = vmatpush1.msra.mxu0 %v2082
      %2387 = vmatprep.subr.mxu0 0.0
      %2388 = vmatpush1.msra.mxu0 %v2085
      %2389 = vmatprep.subr.mxu0 0.0
      %2390 = vmatpush1.msra.mxu0 %v2088
      %2391 = vmatprep.subr.mxu0 0.0
      %2392 = vmatpush1.msra.mxu0 %v2091
      %2393 = vmatprep.subr.mxu0 0.0
      %2394 = vmatpush1.msra.mxu0 %v2094
      %2395 = vmatprep.subr.mxu0 0.0
      %2396 = vmatpush1.msra.mxu0 %v2097
      %2397 = vmatprep.subr.mxu0 0.0
      %2398 = vmatpush1.msra.mxu0 %v2100
      %2399 = vmatprep.subr.mxu0 0.0
      %2400 = vmatpush1.msra.mxu0 %v2103
      %2401 = vmatprep.subr.mxu0 0.0
      %2402 = vmatpush1.msra.mxu0 %v2106
      %2403 = vmatprep.subr.mxu0 0.0
      %2404 = vmatpush1.msra.mxu0 %v2109
      %2405 = vmatprep.subr.mxu0 0.0
      %2406 = vmatpush1.msra.mxu0 %v2112
      %2407 = vmatprep.subr.mxu0 0.0
      %2408 = vmatpush1.msra.mxu0 %v2115
      %2409 = vmatprep.subr.mxu0 0.0
      %2410 = vmatpush1.msra.mxu0 %v2118
      %2411 = vmatprep.subr.mxu0 0.0
      %2412 = vmatpush1.msra.mxu0 %v2121
      %2413 = vmatprep.subr.mxu0 0.0
      %2414 = vmatpush1.msra.mxu0 %v2124
      %2415 = vmatprep.subr.mxu0 0.0
      %2416 = vmatpush1.msra.mxu0 %v2127
      %2417 = vmatprep.subr.mxu0 0.0
      %2418 = vmatpush1.msra.mxu0 0.0
      %2419 = vmatprep.subr.mxu0 0.0
      %2420 = vmatpush1.msra.mxu0 0.0
      %2421 = vmatprep.subr.mxu0 0.0
      %2422 = vmatpush1.msra.mxu0 0.0
      %2423 = vmatprep.subr.mxu0 0.0
      %2424 = vmatpush1.msra.mxu0 0.0
      %2425 = vmatprep.subr.mxu0 0.0
      %2426 = vmatpush1.msra.mxu0 0.0
      %2427 = vmatprep.subr.mxu0 0.0
      %2428 = vmatpush1.msra.mxu0 0.0
      %2429 = vmatprep.subr.mxu0 0.0
      %2430 = vmatpush1.msra.mxu0 0.0
      %2431 = vmatprep.subr.mxu0 0.0
      %2432 = vmatpush1.msra.mxu0 0.0
      %2433 = vmatprep.subr.mxu0 0.0
      %2434 = vmatpush1.msra.mxu0 0.0
      %2435 = vmatprep.subr.mxu0 0.0
      %2436 = vmatpush1.msra.mxu0 0.0
      %2437 = vmatprep.subr.mxu0 0.0
      %2438 = vmatpush1.msra.mxu0 0.0
      %2439 = vmatprep.subr.mxu0 0.0
      %2440 = vmatpush1.msra.mxu0 0.0
      %2441 = vmatprep.subr.mxu0 0.0
      %2442 = vmatpush1.msra.mxu0 0.0
      %2443 = vmatprep.subr.mxu0 0.0
      %2444 = vmatpush1.msra.mxu0 0.0
      %2445 = vmatprep.subr.mxu0 0.0
      %2446 = vmatpush1.msra.mxu0 0.0
      %2447 = vmatprep.subr.mxu0 0.0
      %2448 = vmatpush1.msra.mxu0 0.0
      %2449 = vmatprep.mubr.f32.mxu0 0.0
      %2450 = vmatmul.mubr.f32.gmra.mrb[0].mxu0 %v2048
      %v2451 = vpop.f32.mrb[0].mxu0
      %v2452 = vadd.f32 0.0, %v2451
      %v2453 = vpop.f32.mrb[0].mxu0
      %2454 = vmatprep.mubr.f32.mxu0 0.0
      %2455 = vmatmul.mubr.f32.gmra.mrb[0].mxu0 %v2049
      %v2456 = vpop.f32.mrb[0].mxu0
      %v2457 = vadd.f32 0.0, %v2456
      %v2458 = vpop.f32.mrb[0].mxu0
      %2459 = vmatprep.mubr.f32.mxu0 0.0
      %2460 = vmatmul.mubr.f32.gmra.mrb[0].mxu0 %v2050
      %v2461 = vpop.f32.mrb[0].mxu0
      %v2462 = vadd.f32 0.0, %v2461
      %v2463 = vpop.f32.mrb[0].mxu0
      %2464 = vmatprep.mubr.f32.mxu0 0.0
      %2465 = vmatmul.mubr.f32.gmra.mrb[0].mxu0 %v2051
      %v2466 = vpop.f32.mrb[0].mxu0
      %v2467 = vadd.f32 0.0, %v2466
      %v2468 = vpop.f32.mrb[0].mxu0
      %2469 = vmatprep.mubr.f32.mxu0 0.0
      %2470 = vmatmul.mubr.f32.gmra.mrb[0].mxu0 %v2052
      %v2471 = vpop.f32.mrb[0].mxu0
      %v2472 = vadd.f32 0.0, %v2471
      %v2473 = vpop.f32.mrb[0].mxu0
      %2474 = vmatprep.mubr.f32.mxu0 0.0
      %2475 = vmatmul.mubr.f32.gmra.mrb[0].mxu0 %v2053
      %v2476 = vpop.f32.mrb[0].mxu0
      %v2477 = vadd.f32 0.0, %v2476
      %v2478 = vpop.f32.mrb[0].mxu0
      %2479 = vmatprep.mubr.f32.mxu0 0.0
      %2480 = vmatmul.mubr.f32.gmra.mrb[0].mxu0 %v2054
      %v2481 = vpop.f32.mrb[0].mxu0
      %v2482 = vadd.f32 0.0, %v2481
      %v2483 = vpop.f32.mrb[0].mxu0
      %2484 = vmatprep.mubr.f32.mxu0 0.0
      %2485 = vmatmul.mubr.f32.gmra.mrb[0].mxu0 %v2055
      %v2486 = vpop.f32.mrb[0].mxu0
      %v2487 = vadd.f32 0.0, %v2486
      %v2488 = vpop.f32.mrb[0].mxu0
      %2489 = vmatprep.mubr.f32.mxu0 0.0
      %2490 = vmatmul.mubr.f32.gmra.mrb[0].mxu0 %v2056
      %v2491 = vpop.f32.mrb[0].mxu0
      %v2492 = vadd.f32 0.0, %v2491
      %v2493 = vpop.f32.mrb[0].mxu0
      %2494 = vmatprep.mubr.f32.mxu0 0.0
      %2495 = vmatmul.mubr.f32.gmra.mrb[0].mxu0 %v2057
      %v2496 = vpop.f32.mrb[0].mxu0
      %v2497 = vadd.f32 0.0, %v2496
      %v2498 = vpop.f32.mrb[0].mxu0
      %2499 = vmatprep.mubr.f32.mxu0 0.0
      %2500 = vmatmul.mubr.f32.gmra.mrb[0].mxu0 %v2058
      %v2501 = vpop.f32.mrb[0].mxu0
      %v2502 = vadd.f32 0.0, %v2501
      %v2503 = vpop.f32.mrb[0].mxu0
      %2504 = vmatprep.mubr.f32.mxu0 0.0
      %2505 = vmatmul.mubr.f32.gmra.mrb[0].mxu0 %v2059
      %v2506 = vpop.f32.mrb[0].mxu0
      %v2507 = vadd.f32 0.0, %v2506
      %v2508 = vpop.f32.mrb[0].mxu0
      %2509 = vmatprep.mubr.f32.mxu0 0.0
      %2510 = vmatmul.mubr.f32.gmra.mrb[0].mxu0 %v2060
      %v2511 = vpop.f32.mrb[0].mxu0
      %v2512 = vadd.f32 0.0, %v2511
      %v2513 = vpop.f32.mrb[0].mxu0
      %2514 = vmatprep.mubr.f32.mxu0 0.0
      %2515 = vmatmul.mubr.f32.gmra.mrb[0].mxu0 %v2061
      %v2516 = vpop.f32.mrb[0].mxu0
      %v2517 = vadd.f32 0.0, %v2516
      %v2518 = vpop.f32.mrb[0].mxu0
      %2519 = vmatprep.mubr.f32.mxu0 0.0
      %2520 = vmatmul.mubr.f32.gmra.mrb[0].mxu0 %v2062
      %v2521 = vpop.f32.mrb[0].mxu0
      %v2522 = vadd.f32 0.0, %v2521
      %v2523 = vpop.f32.mrb[0].mxu0
      %2524 = vmatprep.mubr.f32.mxu0 0.0
      %2525 = vmatmul.mubr.f32.gmra.mrb[0].mxu0 %v2063
      %v2526 = vpop.f32.mrb[0].mxu0
      %v2527 = vadd.f32 0.0, %v2526
      %v2528 = vpop.f32.mrb[0].mxu0
      %2529 = vmatprep.mubr.f32.mxu0 0.0
      %2530 = vmatmul.mubr.f32.gmra.mrb[0].mxu0 %v2064
      %v2531 = vpop.f32.mrb[0].mxu0
      %v2532 = vadd.f32 0.0, %v2531
      %v2533 = vpop.f32.mrb[0].mxu0
      %2534 = vmatprep.mubr.f32.mxu0 0.0
      %2535 = vmatmul.mubr.f32.gmra.mrb[0].mxu0 %v2065
      %v2536 = vpop.f32.mrb[0].mxu0
      %v2537 = vadd.f32 0.0, %v2536
      %v2538 = vpop.f32.mrb[0].mxu0
      %2539 = vmatprep.mubr.f32.mxu0 0.0
      %2540 = vmatmul.mubr.f32.gmra.mrb[0].mxu0 %v2066
      %v2541 = vpop.f32.mrb[0].mxu0
      %v2542 = vadd.f32 0.0, %v2541
      %v2543 = vpop.f32.mrb[0].mxu0
      %2544 = vmatprep.mubr.f32.mxu0 0.0
      %2545 = vmatmul.mubr.f32.gmra.mrb[0].mxu0 %v2067
      %v2546 = vpop.f32.mrb[0].mxu0
      %v2547 = vadd.f32 0.0, %v2546
      %v2548 = vpop.f32.mrb[0].mxu0
      %2549 = vmatprep.mubr.f32.mxu0 0.0
      %2550 = vmatmul.mubr.f32.gmra.mrb[0].mxu0 %v2068
      %v2551 = vpop.f32.mrb[0].mxu0
      %v2552 = vadd.f32 0.0, %v2551
      %v2553 = vpop.f32.mrb[0].mxu0
      %2554 = vmatprep.mubr.f32.mxu0 0.0
      %2555 = vmatmul.mubr.f32.gmra.mrb[0].mxu0 %v2069
      %v2556 = vpop.f32.mrb[0].mxu0
      %v2557 = vadd.f32 0.0, %v2556
      %v2558 = vpop.f32.mrb[0].mxu0
      %2559 = vmatprep.mubr.f32.mxu0 0.0
      %2560 = vmatmul.mubr.f32.gmra.mrb[0].mxu0 %v2070
      %v2561 = vpop.f32.mrb[0].mxu0
      %v2562 = vadd.f32 0.0, %v2561
      %v2563 = vpop.f32.mrb[0].mxu0
      %2564 = vmatprep.mubr.f32.mxu0 0.0
      %2565 = vmatmul.mubr.f32.gmra.mrb[0].mxu0 %v2071
      %v2566 = vpop.f32.mrb[0].mxu0
      %v2567 = vadd.f32 0.0, %v2566
      %v2568 = vpop.f32.mrb[0].mxu0
      %2569 = vmatprep.mubr.f32.mxu0 0.0
      %2570 = vmatmul.mubr.f32.gmra.mrb[0].mxu0 %v2072
      %v2571 = vpop.f32.mrb[0].mxu0
      %v2572 = vadd.f32 0.0, %v2571
      %v2573 = vpop.f32.mrb[0].mxu0
      %2574 = vmatprep.mubr.f32.mxu0 0.0
      %2575 = vmatmul.mubr.f32.gmra.mrb[0].mxu0 %v2073
      %v2576 = vpop.f32.mrb[0].mxu0
      %v2577 = vadd.f32 0.0, %v2576
      %v2578 = vpop.f32.mrb[0].mxu0
      %2579 = vmatprep.mubr.f32.mxu0 0.0
      %2580 = vmatmul.mubr.f32.gmra.mrb[0].mxu0 %v2074
      %v2581 = vpop.f32.mrb[0].mxu0
      %v2582 = vadd.f32 0.0, %v2581
      %v2583 = vpop.f32.mrb[0].mxu0
      %2584 = vmatprep.mubr.f32.mxu0 0.0
      %2585 = vmatmul.mubr.f32.gmra.mrb[0].mxu0 %v2075
      %v2586 = vpop.f32.mrb[0].mxu0
      %v2587 = vadd.f32 0.0, %v2586
      %v2588 = vpop.f32.mrb[0].mxu0
      %2589 = vmatprep.mubr.f32.mxu0 0.0
      %2590 = vmatmul.mubr.f32.gmra.mrb[0].mxu0 %v2076
      %v2591 = vpop.f32.mrb[0].mxu0
      %v2592 = vadd.f32 0.0, %v2591
      %v2593 = vpop.f32.mrb[0].mxu0
      %2594 = vmatprep.mubr.f32.mxu0 0.0
      %2595 = vmatmul.mubr.f32.gmra.mrb[0].mxu0 %v2077
      %v2596 = vpop.f32.mrb[0].mxu0
      %v2597 = vadd.f32 0.0, %v2596
      %v2598 = vpop.f32.mrb[0].mxu0
      %2599 = vmatprep.mubr.f32.mxu0 0.0
      %2600 = vmatmul.mubr.f32.gmra.mrb[0].mxu0 %v2078
      %v2601 = vpop.f32.mrb[0].mxu0
      %v2602 = vadd.f32 0.0, %v2601
      %v2603 = vpop.f32.mrb[0].mxu0
      %2604 = vmatprep.mubr.f32.mxu0 0.0
      %2605 = vmatmul.mubr.f32.gmra.mrb[0].mxu0 %v2079
      %v2606 = vpop.f32.mrb[0].mxu0
      %v2607 = vadd.f32 0.0, %v2606
      %v2608 = vpop.f32.mrb[0].mxu0
      %2609 = vdwg.mxu0
      %v2610 = vmax.f32 %v2195, %v2197
      %v2611 = vmax.f32 %v2201, %v2203
      %v2612 = vmax.f32 %v2207, %v2209
      %v2613 = vmax.f32 %v2213, %v2215
      %v2614 = vmax.f32 %v2219, %v2221
      %v2615 = vmax.f32 %v2225, %v2227
      %v2616 = vmax.f32 %v2231, %v2233
      %v2617 = vmax.f32 %v2237, %v2239
      %v2618 = vmax.f32 %v2243, %v2245
      %v2619 = vmax.f32 %v2249, %v2251
      %v2620 = vmax.f32 %v2255, %v2257
      %v2621 = vmax.f32 %v2261, %v2263
      %v2622 = vmax.f32 %v2267, %v2269
      %v2623 = vmax.f32 %v2273, %v2275
      %v2624 = vmax.f32 %v2279, %v2281
      %v2625 = vmax.f32 %v2285, %v2287
      %v2626 = vmax.f32 %v2291, %v2293
      %v2627 = vmax.f32 %v2297, %v2299
      %v2628 = vmax.f32 %v2303, %v2305
      %v2629 = vmax.f32 %v2309, %v2311
      %v2630 = vmax.f32 %v2315, %v2317
      %v2631 = vmax.f32 %v2321, %v2323
      %v2632 = vmax.f32 %v2327, %v2329
      %v2633 = vmax.f32 %v2333, %v2335
      %v2634 = vmax.f32 %v2339, %v2341
      %v2635 = vmax.f32 %v2345, %v2347
      %v2636 = vmax.f32 %v2351, %v2353
      %v2637 = vmax.f32 %v2357, %v2359
      %v2638 = vmax.f32 %v2363, %v2365
      %v2639 = vmax.f32 %v2369, %v2371
      %v2640 = vmax.f32 %v2375, %v2377
      %v2641 = vmax.f32 %v2381, %v2383
      %v2642 = vmax.f32 %v2610, %v2452
      %v2643 = vmax.f32 %v2611, %v2457
      %v2644 = vmax.f32 %v2612, %v2462
      %v2645 = vmax.f32 %v2613, %v2467
      %v2646 = vmax.f32 %v2614, %v2472
      %v2647 = vmax.f32 %v2615, %v2477
      %v2648 = vmax.f32 %v2616, %v2482
      %v2649 = vmax.f32 %v2617, %v2487
      %v2650 = vmax.f32 %v2618, %v2492
      %v2651 = vmax.f32 %v2619, %v2497
      %v2652 = vmax.f32 %v2620, %v2502
      %v2653 = vmax.f32 %v2621, %v2507
      %v2654 = vmax.f32 %v2622, %v2512
      %v2655 = vmax.f32 %v2623, %v2517
      %v2656 = vmax.f32 %v2624, %v2522
      %v2657 = vmax.f32 %v2625, %v2527
      %v2658 = vmax.f32 %v2626, %v2532
      %v2659 = vmax.f32 %v2627, %v2537
      %v2660 = vmax.f32 %v2628, %v2542
      %v2661 = vmax.f32 %v2629, %v2547
      %v2662 = vmax.f32 %v2630, %v2552
      %v2663 = vmax.f32 %v2631, %v2557
      %v2664 = vmax.f32 %v2632, %v2562
      %v2665 = vmax.f32 %v2633, %v2567
      %v2666 = vmax.f32 %v2634, %v2572
      %v2667 = vmax.f32 %v2635, %v2577
      %v2668 = vmax.f32 %v2636, %v2582
      %v2669 = vmax.f32 %v2637, %v2587
      %v2670 = vmax.f32 %v2638, %v2592
      %v2671 = vmax.f32 %v2639, %v2597
      %v2672 = vmax.f32 %v2640, %v2602
      %v2673 = vmax.f32 %v2641, %v2607
      %v2674 = vld [vmem:[%s4] sm:$0xff]
      %v2675 = vld [vmem:[%s4 + $0x8] sm:$0xff]
      %v2676 = vld [vmem:[%s4 + $0x10] sm:$0xff]
      %v2677 = vld [vmem:[%s4 + $0x18] sm:$0xff]
      %v2678 = vld [vmem:[%s4 + $0x20] sm:$0xff]
      %v2679 = vld [vmem:[%s4 + $0x28] sm:$0xff]
      %v2680 = vld [vmem:[%s4 + $0x30] sm:$0xff]
      %v2681 = vld [vmem:[%s4 + $0x38] sm:$0xff]
      %v2682 = vld [vmem:[%s4 + $0x40] sm:$0xff]
      %v2683 = vld [vmem:[%s4 + $0x48] sm:$0xff]
      %v2684 = vld [vmem:[%s4 + $0x50] sm:$0xff]
      %v2685 = vld [vmem:[%s4 + $0x58] sm:$0xff]
      %v2686 = vld [vmem:[%s4 + $0x60] sm:$0xff]
      %v2687 = vld [vmem:[%s4 + $0x68] sm:$0xff]
      %v2688 = vld [vmem:[%s4 + $0x70] sm:$0xff]
      %v2689 = vld [vmem:[%s4 + $0x78] sm:$0xff]
      %v2690 = vld [vmem:[%s4 + $0x80] sm:$0xff]
      %v2691 = vld [vmem:[%s4 + $0x88] sm:$0xff]
      %v2692 = vld [vmem:[%s4 + $0x90] sm:$0xff]
      %v2693 = vld [vmem:[%s4 + $0x98] sm:$0xff]
      %v2694 = vld [vmem:[%s4 + $0xa0] sm:$0xff]
      %v2695 = vld [vmem:[%s4 + $0xa8] sm:$0xff]
      %v2696 = vld [vmem:[%s4 + $0xb0] sm:$0xff]
      %v2697 = vld [vmem:[%s4 + $0xb8] sm:$0xff]
      %v2698 = vld [vmem:[%s4 + $0xc0] sm:$0xff]
      %v2699 = vld [vmem:[%s4 + $0xc8] sm:$0xff]
      %v2700 = vld [vmem:[%s4 + $0xd0] sm:$0xff]
      %v2701 = vld [vmem:[%s4 + $0xd8] sm:$0xff]
      %v2702 = vld [vmem:[%s4 + $0xe0] sm:$0xff]
      %v2703 = vld [vmem:[%s4 + $0xe8] sm:$0xff]
      %v2704 = vld [vmem:[%s4 + $0xf0] sm:$0xff]
      %v2705 = vld [vmem:[%s4 + $0xf8] sm:$0xff]
      %v2706 = vld [vmem:[%s4 + $0x100] sm:$0xff]
      %v2707 = vld [vmem:[%s4 + $0x108] sm:$0xff]
      %v2708 = vld [vmem:[%s4 + $0x110] sm:$0xff]
      %v2709 = vld [vmem:[%s4 + $0x118] sm:$0xff]
      %v2710 = vld [vmem:[%s4 + $0x120] sm:$0xff]
      %v2711 = vld [vmem:[%s4 + $0x128] sm:$0xff]
      %v2712 = vld [vmem:[%s4 + $0x130] sm:$0xff]
      %v2713 = vld [vmem:[%s4 + $0x138] sm:$0xff]
      %v2714 = vld [vmem:[%s4 + $0x140] sm:$0xff]
      %v2715 = vld [vmem:[%s4 + $0x148] sm:$0xff]
      %v2716 = vld [vmem:[%s4 + $0x150] sm:$0xff]
      %v2717 = vld [vmem:[%s4 + $0x158] sm:$0xff]
      %v2718 = vld [vmem:[%s4 + $0x160] sm:$0xff]
      %v2719 = vld [vmem:[%s4 + $0x168] sm:$0xff]
      %v2720 = vld [vmem:[%s4 + $0x170] sm:$0xff]
      %v2721 = vld [vmem:[%s4 + $0x178] sm:$0xff]
      %v2722 = vld [vmem:[%s4 + $0x180] sm:$0xff]
      %v2723 = vld [vmem:[%s4 + $0x188] sm:$0xff]
      %v2724 = vld [vmem:[%s4 + $0x190] sm:$0xff]
      %v2725 = vld [vmem:[%s4 + $0x198] sm:$0xff]
      %v2726 = vld [vmem:[%s4 + $0x1a0] sm:$0xff]
      %v2727 = vld [vmem:[%s4 + $0x1a8] sm:$0xff]
      %v2728 = vld [vmem:[%s4 + $0x1b0] sm:$0xff]
      %v2729 = vld [vmem:[%s4 + $0x1b8] sm:$0xff]
      %v2730 = vld [vmem:[%s4 + $0x1c0] sm:$0xff]
      %v2731 = vld [vmem:[%s4 + $0x1c8] sm:$0xff]
      %v2732 = vld [vmem:[%s4 + $0x1d0] sm:$0xff]
      %v2733 = vld [vmem:[%s4 + $0x1d8] sm:$0xff]
      %v2734 = vld [vmem:[%s4 + $0x1e0] sm:$0xff]
      %v2735 = vld [vmem:[%s4 + $0x1e8] sm:$0xff]
      %v2736 = vld [vmem:[%s4 + $0x1f0] sm:$0xff]
      %v2737 = vld [vmem:[%s4 + $0x1f8] sm:$0xff]
      %v2738 = vld [vmem:[%s4 + $0x200] sm:$0xff]
      %v2739 = vld [vmem:[%s4 + $0x208] sm:$0xff]
      %v2740 = vld [vmem:[%s4 + $0x210] sm:$0xff]
      %v2741 = vld [vmem:[%s4 + $0x218] sm:$0xff]
      %v2742 = vld [vmem:[%s4 + $0x220] sm:$0xff]
      %v2743 = vld [vmem:[%s4 + $0x228] sm:$0xff]
      %v2744 = vld [vmem:[%s4 + $0x230] sm:$0xff]
      %v2745 = vld [vmem:[%s4 + $0x238] sm:$0xff]
      %2746 = vmatprep.subr.mxu0 0.0
      %2747 = vmatpush1.msra.mxu0 %v2642
      %2748 = vmatprep.subr.mxu0 0.0
      %2749 = vmatpush1.msra.mxu0 %v2643
      %2750 = vmatprep.subr.mxu0 0.0
      %2751 = vmatpush1.msra.mxu0 %v2644
      %2752 = vmatprep.subr.mxu0 0.0
      %2753 = vmatpush1.msra.mxu0 %v2645
      %2754 = vmatprep.subr.mxu0 0.0
      %2755 = vmatpush1.msra.mxu0 %v2646
      %2756 = vmatprep.subr.mxu0 0.0
      %2757 = vmatpush1.msra.mxu0 %v2647
      %2758 = vmatprep.subr.mxu0 0.0
      %2759 = vmatpush1.msra.mxu0 %v2648
      %2760 = vmatprep.subr.mxu0 0.0
      %2761 = vmatpush1.msra.mxu0 %v2649
      %2762 = vmatprep.subr.mxu0 0.0
      %2763 = vmatpush1.msra.mxu0 %v2650
      %2764 = vmatprep.subr.mxu0 0.0
      %2765 = vmatpush1.msra.mxu0 %v2651
      %2766 = vmatprep.subr.mxu0 0.0
      %2767 = vmatpush1.msra.mxu0 %v2652
      %2768 = vmatprep.subr.mxu0 0.0
      %2769 = vmatpush1.msra.mxu0 %v2653
      %2770 = vmatprep.subr.mxu0 0.0
      %2771 = vmatpush1.msra.mxu0 %v2654
      %2772 = vmatprep.subr.mxu0 0.0
      %2773 = vmatpush1.msra.mxu0 %v2655
      %2774 = vmatprep.subr.mxu0 0.0
      %2775 = vmatpush1.msra.mxu0 %v2656
      %2776 = vmatprep.subr.mxu0 0.0
      %2777 = vmatpush1.msra.mxu0 %v2657
      %2778 = vmatprep.subr.mxu0 0.0
      %2779 = vmatpush1.msra.mxu0 %v2658
      %2780 = vmatprep.subr.mxu0 0.0
      %2781 = vmatpush1.msra.mxu0 %v2659
      %2782 = vmatprep.subr.mxu0 0.0
      %2783 = vmatpush1.msra.mxu0 %v2660
      %2784 = vmatprep.subr.mxu0 0.0
      %2785 = vmatpush1.msra.mxu0 %v2661
      %2786 = vmatprep.subr.mxu0 0.0
      %2787 = vmatpush1.msra.mxu0 %v2662
      %2788 = vmatprep.subr.mxu0 0.0
      %2789 = vmatpush1.msra.mxu0 %v2663
      %2790 = vmatprep.subr.mxu0 0.0
      %2791 = vmatpush1.msra.mxu0 %v2664
      %2792 = vmatprep.subr.mxu0 0.0
      %2793 = vmatpush1.msra.mxu0 %v2665
      %2794 = vmatprep.subr.mxu0 0.0
      %2795 = vmatpush1.msra.mxu0 %v2666
      %2796 = vmatprep.subr.mxu0 0.0
      %2797 = vmatpush1.msra.mxu0 %v2667
      %2798 = vmatprep.subr.mxu0 0.0
      %2799 = vmatpush1.msra.mxu0 %v2668
      %2800 = vmatprep.subr.mxu0 0.0
      %2801 = vmatpush1.msra.mxu0 %v2669
      %2802 = vmatprep.subr.mxu0 0.0
      %2803 = vmatpush1.msra.mxu0 %v2670
      %2804 = vmatprep.subr.mxu0 0.0
      %2805 = vmatpush1.msra.mxu0 %v2671
      %2806 = vmatprep.subr.mxu0 0.0
      %2807 = vmatpush1.msra.mxu0 %v2672
      %2808 = vmatprep.subr.mxu0 0.0
      %2809 = vmatpush1.msra.mxu0 %v2673
      %2810 = vmatprep.mubr.f32.mxu0 %v2675
      %2811 = vmatmul.mubr.f32.gmra.mrb[0].mxu0 %v2674
      %v2812 = vpop.f32.mrb[0].mxu0
      %v2813 = vadd.f32 0.0, %v2812
      %v2814 = vpop.f32.mrb[0].mxu0
      %2815 = vmatprep.mubr.f32.mxu0 %v2677
      %2816 = vmatmul.mubr.f32.gmra.mrb[0].mxu0 %v2676
      %v2817 = vpop.f32.mrb[0].mxu0
      %v2818 = vadd.f32 0.0, %v2817
      %v2819 = vpop.f32.mrb[0].mxu0
      %2820 = vmatprep.mubr.f32.mxu0 %v2679
      %2821 = vmatmul.mubr.f32.gmra.mrb[0].mxu0 %v2678
      %v2822 = vpop.f32.mrb[0].mxu0
      %v2823 = vadd.f32 0.0, %v2822
      %v2824 = vpop.f32.mrb[0].mxu0
      %2825 = vmatprep.mubr.f32.mxu0 %v2681
      %2826 = vmatmul.mubr.f32.gmra.mrb[0].mxu0 %v2680
      %v2827 = vpop.f32.mrb[0].mxu0
      %v2828 = vadd.f32 0.0, %v2827
      %v2829 = vpop.f32.mrb[0].mxu0
      %2830 = vmatprep.mubr.f32.mxu0 %v2683
      %2831 = vmatmul.mubr.f32.gmra.mrb[0].mxu0 %v2682
      %v2832 = vpop.f32.mrb[0].mxu0
      %v2833 = vadd.f32 0.0, %v2832
      %v2834 = vpop.f32.mrb[0].mxu0
      %2835 = vmatprep.mubr.f32.mxu0 %v2685
      %2836 = vmatmul.mubr.f32.gmra.mrb[0].mxu0 %v2684
      %v2837 = vpop.f32.mrb[0].mxu0
      %v2838 = vadd.f32 0.0, %v2837
      %v2839 = vpop.f32.mrb[0].mxu0
      %2840 = vmatprep.mubr.f32.mxu0 %v2687
      %2841 = vmatmul.mubr.f32.gmra.mrb[0].mxu0 %v2686
      %v2842 = vpop.f32.mrb[0].mxu0
      %v2843 = vadd.f32 0.0, %v2842
      %v2844 = vpop.f32.mrb[0].mxu0
      %2845 = vmatprep.mubr.f32.mxu0 %v2689
      %2846 = vmatmul.mubr.f32.gmra.mrb[0].mxu0 %v2688
      %v2847 = vpop.f32.mrb[0].mxu0
      %v2848 = vadd.f32 0.0, %v2847
      %v2849 = vpop.f32.mrb[0].mxu0
      %2850 = vmatprep.mubr.f32.mxu0 %v2691
      %2851 = vmatmul.mubr.f32.gmra.mrb[0].mxu0 %v2690
      %v2852 = vpop.f32.mrb[0].mxu0
      %v2853 = vadd.f32 0.0, %v2852
      %v2854 = vpop.f32.mrb[0].mxu0
      %2855 = vmatprep.mubr.f32.mxu0 %v2693
      %2856 = vmatmul.mubr.f32.gmra.mrb[0].mxu0 %v2692
      %v2857 = vpop.f32.mrb[0].mxu0
      %v2858 = vadd.f32 0.0, %v2857
      %v2859 = vpop.f32.mrb[0].mxu0
      %2860 = vmatprep.mubr.f32.mxu0 %v2695
      %2861 = vmatmul.mubr.f32.gmra.mrb[0].mxu0 %v2694
      %v2862 = vpop.f32.mrb[0].mxu0
      %v2863 = vadd.f32 0.0, %v2862
      %v2864 = vpop.f32.mrb[0].mxu0
      %2865 = vmatprep.mubr.f32.mxu0 %v2697
      %2866 = vmatmul.mubr.f32.gmra.mrb[0].mxu0 %v2696
      %v2867 = vpop.f32.mrb[0].mxu0
      %v2868 = vadd.f32 0.0, %v2867
      %v2869 = vpop.f32.mrb[0].mxu0
      %2870 = vmatprep.mubr.f32.mxu0 %v2699
      %2871 = vmatmul.mubr.f32.gmra.mrb[0].mxu0 %v2698
      %v2872 = vpop.f32.mrb[0].mxu0
      %v2873 = vadd.f32 0.0, %v2872
      %v2874 = vpop.f32.mrb[0].mxu0
      %2875 = vmatprep.mubr.f32.mxu0 %v2701
      %2876 = vmatmul.mubr.f32.gmra.mrb[0].mxu0 %v2700
      %v2877 = vpop.f32.mrb[0].mxu0
      %v2878 = vadd.f32 0.0, %v2877
      %v2879 = vpop.f32.mrb[0].mxu0
      %2880 = vmatprep.mubr.f32.mxu0 %v2703
      %2881 = vmatmul.mubr.f32.gmra.mrb[0].mxu0 %v2702
      %v2882 = vpop.f32.mrb[0].mxu0
      %v2883 = vadd.f32 0.0, %v2882
      %v2884 = vpop.f32.mrb[0].mxu0
      %2885 = vmatprep.mubr.f32.mxu0 %v2705
      %2886 = vmatmul.mubr.f32.gmra.mrb[0].mxu0 %v2704
      %v2887 = vpop.f32.mrb[0].mxu0
      %v2888 = vadd.f32 0.0, %v2887
      %v2889 = vpop.f32.mrb[0].mxu0
      %2890 = vmatprep.mubr.f32.mxu0 %v2707
      %2891 = vmatmul.mubr.f32.gmra.mrb[0].mxu0 %v2706
      %v2892 = vpop.f32.mrb[0].mxu0
      %v2893 = vadd.f32 0.0, %v2892
      %v2894 = vpop.f32.mrb[0].mxu0
      %2895 = vmatprep.mubr.f32.mxu0 %v2709
      %2896 = vmatmul.mubr.f32.gmra.mrb[0].mxu0 %v2708
      %v2897 = vpop.f32.mrb[0].mxu0
      %v2898 = vadd.f32 0.0, %v2897
      %v2899 = vpop.f32.mrb[0].mxu0
      %2900 = vmatprep.mubr.f32.mxu0 %v2711
      %2901 = vmatmul.mubr.f32.gmra.mrb[0].mxu0 %v2710
      %v2902 = vpop.f32.mrb[0].mxu0
      %v2903 = vadd.f32 0.0, %v2902
      %v2904 = vpop.f32.mrb[0].mxu0
      %2905 = vmatprep.mubr.f32.mxu0 %v2713
      %2906 = vmatmul.mubr.f32.gmra.mrb[0].mxu0 %v2712
      %v2907 = vpop.f32.mrb[0].mxu0
      %v2908 = vadd.f32 0.0, %v2907
      %v2909 = vpop.f32.mrb[0].mxu0
      %2910 = vmatprep.mubr.f32.mxu0 %v2715
      %2911 = vmatmul.mubr.f32.gmra.mrb[0].mxu0 %v2714
      %v2912 = vpop.f32.mrb[0].mxu0
      %v2913 = vadd.f32 0.0, %v2912
      %v2914 = vpop.f32.mrb[0].mxu0
      %2915 = vmatprep.mubr.f32.mxu0 %v2717
      %2916 = vmatmul.mubr.f32.gmra.mrb[0].mxu0 %v2716
      %v2917 = vpop.f32.mrb[0].mxu0
      %v2918 = vadd.f32 0.0, %v2917
      %v2919 = vpop.f32.mrb[0].mxu0
      %2920 = vmatprep.mubr.f32.mxu0 %v2719
      %2921 = vmatmul.mubr.f32.gmra.mrb[0].mxu0 %v2718
      %v2922 = vpop.f32.mrb[0].mxu0
      %v2923 = vadd.f32 0.0, %v2922
      %v2924 = vpop.f32.mrb[0].mxu0
      %2925 = vmatprep.mubr.f32.mxu0 %v2721
      %2926 = vmatmul.mubr.f32.gmra.mrb[0].mxu0 %v2720
      %v2927 = vpop.f32.mrb[0].mxu0
      %v2928 = vadd.f32 0.0, %v2927
      %v2929 = vpop.f32.mrb[0].mxu0
      %2930 = vmatprep.mubr.f32.mxu0 %v2723
      %2931 = vmatmul.mubr.f32.gmra.mrb[0].mxu0 %v2722
      %v2932 = vpop.f32.mrb[0].mxu0
      %v2933 = vadd.f32 0.0, %v2932
      %v2934 = vpop.f32.mrb[0].mxu0
      %2935 = vmatprep.mubr.f32.mxu0 %v2725
      %2936 = vmatmul.mubr.f32.gmra.mrb[0].mxu0 %v2724
      %v2937 = vpop.f32.mrb[0].mxu0
      %v2938 = vadd.f32 0.0, %v2937
      %v2939 = vpop.f32.mrb[0].mxu0
      %2940 = vmatprep.mubr.f32.mxu0 %v2727
      %2941 = vmatmul.mubr.f32.gmra.mrb[0].mxu0 %v2726
      %v2942 = vpop.f32.mrb[0].mxu0
      %v2943 = vadd.f32 0.0, %v2942
      %v2944 = vpop.f32.mrb[0].mxu0
      %2945 = vmatprep.mubr.f32.mxu0 %v2729
      %2946 = vmatmul.mubr.f32.gmra.mrb[0].mxu0 %v2728
      %v2947 = vpop.f32.mrb[0].mxu0
      %v2948 = vadd.f32 0.0, %v2947
      %v2949 = vpop.f32.mrb[0].mxu0
      %2950 = vmatprep.mubr.f32.mxu0 %v2731
      %2951 = vmatmul.mubr.f32.gmra.mrb[0].mxu0 %v2730
      %v2952 = vpop.f32.mrb[0].mxu0
      %v2953 = vadd.f32 0.0, %v2952
      %v2954 = vpop.f32.mrb[0].mxu0
      %2955 = vmatprep.mubr.f32.mxu0 %v2733
      %2956 = vmatmul.mubr.f32.gmra.mrb[0].mxu0 %v2732
      %v2957 = vpop.f32.mrb[0].mxu0
      %v2958 = vadd.f32 0.0, %v2957
      %v2959 = vpop.f32.mrb[0].mxu0
      %2960 = vmatprep.mubr.f32.mxu0 %v2735
      %2961 = vmatmul.mubr.f32.gmra.mrb[0].mxu0 %v2734
      %v2962 = vpop.f32.mrb[0].mxu0
      %v2963 = vadd.f32 0.0, %v2962
      %v2964 = vpop.f32.mrb[0].mxu0
      %2965 = vmatprep.mubr.f32.mxu0 %v2737
      %2966 = vmatmul.mubr.f32.gmra.mrb[0].mxu0 %v2736
      %v2967 = vpop.f32.mrb[0].mxu0
      %v2968 = vadd.f32 0.0, %v2967
      %v2969 = vpop.f32.mrb[0].mxu0
      %2970 = vmatprep.mubr.f32.mxu0 %v2739
      %2971 = vmatmul.mubr.f32.gmra.mrb[0].mxu0 %v2738
      %v2972 = vpop.f32.mrb[0].mxu0
      %v2973 = vadd.f32 0.0, %v2972
      %v2974 = vpop.f32.mrb[0].mxu0
      %2975 = vmatprep.mubr.f32.mxu0 %v2741
      %2976 = vmatmul.mubr.f32.gmra.mrb[0].mxu0 %v2740
      %v2977 = vpop.f32.mrb[0].mxu0
      %v2978 = vadd.f32 0.0, %v2977
      %v2979 = vpop.f32.mrb[0].mxu0
      %2980 = vmatprep.mubr.f32.mxu0 %v2743
      %2981 = vmatmul.mubr.f32.gmra.mrb[0].mxu0 %v2742
      %v2982 = vpop.f32.mrb[0].mxu0
      %v2983 = vadd.f32 0.0, %v2982
      %v2984 = vpop.f32.mrb[0].mxu0
      %2985 = vmatprep.mubr.f32.mxu0 %v2745
      %2986 = vmatmul.mubr.f32.gmra.mrb[0].mxu0 %v2744
      %v2987 = vpop.f32.mrb[0].mxu0
      %v2988 = vadd.f32 0.0, %v2987
      %v2989 = vpop.f32.mrb[0].mxu0
      %2990 = vdwg.mxu0
      %v2991 = vmax.f32 %v2813, %v2873
      %v2992 = vmax.f32 %v2818, %v2878
      %v2993 = vmax.f32 %v2823, %v2883
      %v2994 = vmax.f32 %v2828, %v2888
      %v2995 = vmax.f32 %v2833, %v2893
      %v2996 = vmax.f32 %v2838, %v2898
      %v2997 = vmax.f32 %v2843, %v2903
      %v2998 = vmax.f32 %v2848, %v2908
      %v2999 = vmax.f32 %v2853, %v2913
      %v3000 = vmax.f32 %v2858, %v2918
      %v3001 = vmax.f32 %v2863, %v2923
      %v3002 = vmax.f32 %v2868, %v2928
      %v3003 = vmax.f32 %v2991, %v2933
      %v3004 = vmax.f32 %v2992, %v2938
      %v3005 = vmax.f32 %v2993, %v2943
      %v3006 = vmax.f32 %v2994, %v2948
      %v3007 = vmax.f32 %v2995, %v2953
      %v3008 = vmax.f32 %v2996, %v2958
      %v3009 = vmax.f32 %v2997, %v2963
      %v3010 = vmax.f32 %v2998, %v2968
      %v3011 = vmax.f32 %v2999, %v2973
      %v3012 = vmax.f32 %v3000, %v2978
      %v3013 = vmax.f32 %v3001, %v2983
      %v3014 = vmax.f32 %v3002, %v2988
      %v3015 = vld [vmem:[%s5] sm:$0xff]
      %v3016 = vld [vmem:[%s5 + $0x8] sm:$0xff]
      %v3017 = vld [vmem:[%s5 + $0x10] sm:$0xff]
      %v3018 = vld [vmem:[%s5 + $0x18] sm:$0xff]
      %v3019 = vld [vmem:[%s5 + $0x20] sm:$0xff]
      %v3020 = vld [vmem:[%s5 + $0x28] sm:$0xff]
      %vm3021 = vcmask 785408
      %v3023 = vsel %vm3021, %v3015, 0
      %v3026 = vsel %vm3021, %v3016, 0
      %v3029 = vsel %vm3021, %v3017, 0
      %v3032 = vsel %vm3021, %v3018, 0
      %v3035 = vsel %vm3021, %v3019, 0
      %v3038 = vsel %vm3021, %v3020, 0
      %3040 = vmatprep.subr.mxu0 0.0
      %3041 = vmatpush1.msra.mxu0 %v3003
      %3042 = vmatprep.subr.mxu0 0.0
      %3043 = vmatpush1.msra.mxu0 %v3004
      %3044 = vmatprep.subr.mxu0 0.0
      %3045 = vmatpush1.msra.mxu0 %v3005
      %3046 = vmatprep.subr.mxu0 0.0
      %3047 = vmatpush1.msra.mxu0 %v3006
      %3048 = vmatprep.subr.mxu0 0.0
      %3049 = vmatpush1.msra.mxu0 %v3007
      %3050 = vmatprep.subr.mxu0 0.0
      %3051 = vmatpush1.msra.mxu0 %v3008
      %3052 = vmatprep.subr.mxu0 0.0
      %3053 = vmatpush1.msra.mxu0 %v3009
      %3054 = vmatprep.subr.mxu0 0.0
      %3055 = vmatpush1.msra.mxu0 %v3010
      %3056 = vmatprep.subr.mxu0 0.0
      %3057 = vmatpush1.msra.mxu0 %v3011
      %3058 = vmatprep.subr.mxu0 0.0
      %3059 = vmatpush1.msra.mxu0 %v3012
      %3060 = vmatprep.subr.mxu0 0.0
      %3061 = vmatpush1.msra.mxu0 %v3013
      %3062 = vmatprep.subr.mxu0 0.0
      %3063 = vmatpush1.msra.mxu0 %v3014
      %3064 = vmatprep.subr.mxu0 0.0
      %3065 = vmatpush1.msra.mxu0 0.0
      %3066 = vmatprep.subr.mxu0 0.0
      %3067 = vmatpush1.msra.mxu0 0.0
      %3068 = vmatprep.subr.mxu0 0.0
      %3069 = vmatpush1.msra.mxu0 0.0
      %3070 = vmatprep.subr.mxu0 0.0
      %3071 = vmatpush1.msra.mxu0 0.0
      %3072 = vmatprep.subr.mxu0 0.0
      %3073 = vmatpush1.msra.mxu0 0.0
      %3074 = vmatprep.subr.mxu0 0.0
      %3075 = vmatpush1.msra.mxu0 0.0
      %3076 = vmatprep.subr.mxu0 0.0
      %3077 = vmatpush1.msra.mxu0 0.0
      %3078 = vmatprep.subr.mxu0 0.0
      %3079 = vmatpush1.msra.mxu0 0.0
      %3080 = vmatprep.subr.mxu0 0.0
      %3081 = vmatpush1.msra.mxu0 0.0
      %3082 = vmatprep.subr.mxu0 0.0
      %3083 = vmatpush1.msra.mxu0 0.0
      %3084 = vmatprep.subr.mxu0 0.0
      %3085 = vmatpush1.msra.mxu0 0.0
      %3086 = vmatprep.subr.mxu0 0.0
      %3087 = vmatpush1.msra.mxu0 0.0
      %3088 = vmatprep.subr.mxu0 0.0
      %3089 = vmatpush1.msra.mxu0 0.0
      %3090 = vmatprep.subr.mxu0 0.0
      %3091 = vmatpush1.msra.mxu0 0.0
      %3092 = vmatprep.subr.mxu0 0.0
      %3093 = vmatpush1.msra.mxu0 0.0
      %3094 = vmatprep.subr.mxu0 0.0
      %3095 = vmatpush1.msra.mxu0 0.0
      %3096 = vmatprep.subr.mxu0 0.0
      %3097 = vmatpush1.msra.mxu0 0.0
      %3098 = vmatprep.subr.mxu0 0.0
      %3099 = vmatpush1.msra.mxu0 0.0
      %3100 = vmatprep.subr.mxu0 0.0
      %3101 = vmatpush1.msra.mxu0 0.0
      %3102 = vmatprep.subr.mxu0 0.0
      %3103 = vmatpush1.msra.mxu0 0.0
      %3104 = vmatprep.mubr.f32.mxu0 0.0
      %3105 = vmatmul.mubr.f32.gmra.mrb[0].mxu0 %v3023
      %v3106 = vpop.f32.mrb[0].mxu0
      %v3107 = vadd.f32 0.0, %v3106
      %v3108 = vpop.f32.mrb[0].mxu0
      %3109 = vmatprep.mubr.f32.mxu0 0.0
      %3110 = vmatmul.mubr.f32.gmra.mrb[0].mxu0 %v3026
      %v3111 = vpop.f32.mrb[0].mxu0
      %v3112 = vadd.f32 0.0, %v3111
      %v3113 = vpop.f32.mrb[0].mxu0
      %3114 = vmatprep.mubr.f32.mxu0 0.0
      %3115 = vmatmul.mubr.f32.gmra.mrb[0].mxu0 %v3029
      %v3116 = vpop.f32.mrb[0].mxu0
      %v3117 = vadd.f32 0.0, %v3116
      %v3118 = vpop.f32.mrb[0].mxu0
      %3119 = vmatprep.mubr.f32.mxu0 0.0
      %3120 = vmatmul.mubr.f32.gmra.mrb[0].mxu0 %v3032
      %v3121 = vpop.f32.mrb[0].mxu0
      %v3122 = vadd.f32 0.0, %v3121
      %v3123 = vpop.f32.mrb[0].mxu0
      %3124 = vmatprep.mubr.f32.mxu0 0.0
      %3125 = vmatmul.mubr.f32.gmra.mrb[0].mxu0 %v3035
      %v3126 = vpop.f32.mrb[0].mxu0
      %v3127 = vadd.f32 0.0, %v3126
      %v3128 = vpop.f32.mrb[0].mxu0
      %3129 = vmatprep.mubr.f32.mxu0 0.0
      %3130 = vmatmul.mubr.f32.gmra.mrb[0].mxu0 %v3038
      %v3131 = vpop.f32.mrb[0].mxu0
      %v3132 = vadd.f32 0.0, %v3131
      %v3133 = vpop.f32.mrb[0].mxu0
      %3134 = vdwg.mxu0
      %s3135 = scalar_lea.vmem %s9, 1
      %v3136 = vld [vmem:[%s3135] ss:$4 sm:$0x3]
      %v3137 = vld [vmem:[%s6] sm:$0xff]
      %v3138 = vld [vmem:[%s6 + $0x8] sm:$0xff]
      %v3139 = vld [vmem:[%s6 + $0x10] sm:$0xff]
      %v3140 = vld [vmem:[%s6 + $0x18] sm:$0xff]
      %v3141 = vld [vmem:[%s6 + $0x20] sm:$0xff]
      %v3142 = vld [vmem:[%s6 + $0x28] sm:$0xff]
      %v3143 = vld [vmem:[%s6 + $0x30] sm:$0xff]
      %v3144 = vld [vmem:[%s6 + $0x38] sm:$0xff]
      %v3145 = vld [vmem:[%s6 + $0x40] sm:$0xff]
      %v3146 = vld [vmem:[%s6 + $0x48] sm:$0xff]
      %v3147 = vld [vmem:[%s6 + $0x50] sm:$0xff]
      %v3148 = vld [vmem:[%s6 + $0x58] sm:$0xff]
      %v3149 = vld [vmem:[%s6 + $0x60] sm:$0xff]
      %v3150 = vld [vmem:[%s6 + $0x68] sm:$0xff]
      %v3151 = vld [vmem:[%s6 + $0x70] sm:$0xff]
      %v3152 = vld [vmem:[%s6 + $0x78] sm:$0xff]
      %v3153 = vld [vmem:[%s6 + $0x80] sm:$0xff]
      %v3154 = vld [vmem:[%s6 + $0x88] sm:$0xff]
      %v3155 = vld [vmem:[%s6 + $0x90] sm:$0xff]
      %v3156 = vld [vmem:[%s6 + $0x98] sm:$0xff]
      %v3157 = vld [vmem:[%s6 + $0xa0] sm:$0xff]
      %v3158 = vld [vmem:[%s6 + $0xa8] sm:$0xff]
      %v3159 = vld [vmem:[%s6 + $0xb0] sm:$0xff]
      %v3160 = vld [vmem:[%s6 + $0xb8] sm:$0xff]
      %v3161 = vld [vmem:[%s6 + $0xc0] sm:$0xff]
      %v3162 = vld [vmem:[%s6 + $0xc8] sm:$0xff]
      %v3163 = vld [vmem:[%s6 + $0xd0] sm:$0xff]
      %v3164 = vld [vmem:[%s6 + $0xd8] sm:$0xff]
      %v3165 = vld [vmem:[%s6 + $0xe0] sm:$0xff]
      %v3166 = vld [vmem:[%s6 + $0xe8] sm:$0xff]
      %v3167 = vld [vmem:[%s6 + $0xf0] sm:$0xff]
      %v3168 = vld [vmem:[%s6 + $0xf8] sm:$0xff]
      %3169 = vmatprep.subr.mxu0 %v3138
      %3170 = vmatpush1.msra.mxu0 %v3137
      %3171 = vmatprep.subr.mxu0 %v3140
      %3172 = vmatpush1.msra.mxu0 %v3139
      %3173 = vmatprep.subr.mxu0 %v3142
      %3174 = vmatpush1.msra.mxu0 %v3141
      %3175 = vmatprep.subr.mxu0 %v3144
      %3176 = vmatpush1.msra.mxu0 %v3143
      %3177 = vmatprep.subr.mxu0 %v3146
      %3178 = vmatpush1.msra.mxu0 %v3145
      %3179 = vmatprep.subr.mxu0 %v3148
      %3180 = vmatpush1.msra.mxu0 %v3147
      %3181 = vmatprep.subr.mxu0 %v3150
      %3182 = vmatpush1.msra.mxu0 %v3149
      %3183 = vmatprep.subr.mxu0 %v3152
      %3184 = vmatpush1.msra.mxu0 %v3151
      %3185 = vmatprep.subr.mxu0 %v3154
      %3186 = vmatpush1.msra.mxu0 %v3153
      %3187 = vmatprep.subr.mxu0 %v3156
      %3188 = vmatpush1.msra.mxu0 %v3155
      %3189 = vmatprep.subr.mxu0 %v3158
      %3190 = vmatpush1.msra.mxu0 %v3157
      %3191 = vmatprep.subr.mxu0 %v3160
      %3192 = vmatpush1.msra.mxu0 %v3159
      %3193 = vmatprep.subr.mxu0 %v3162
      %3194 = vmatpush1.msra.mxu0 %v3161
      %3195 = vmatprep.subr.mxu0 %v3164
      %3196 = vmatpush1.msra.mxu0 %v3163
      %3197 = vmatprep.subr.mxu0 %v3166
      %3198 = vmatpush1.msra.mxu0 %v3165
      %3199 = vmatprep.subr.mxu0 %v3168
      %3200 = vmatpush1.msra.mxu0 %v3167
      %3201 = vmatprep.subr.mxu0 0.0
      %3202 = vmatpush1.msra.mxu0 0.0
      %3203 = vmatprep.subr.mxu0 0.0
      %3204 = vmatpush1.msra.mxu0 0.0
      %3205 = vmatprep.subr.mxu0 0.0
      %3206 = vmatpush1.msra.mxu0 0.0
      %3207 = vmatprep.subr.mxu0 0.0
      %3208 = vmatpush1.msra.mxu0 0.0
      %3209 = vmatprep.subr.mxu0 0.0
      %3210 = vmatpush1.msra.mxu0 0.0
      %3211 = vmatprep.subr.mxu0 0.0
      %3212 = vmatpush1.msra.mxu0 0.0
      %3213 = vmatprep.subr.mxu0 0.0
      %3214 = vmatpush1.msra.mxu0 0.0
      %3215 = vmatprep.subr.mxu0 0.0
      %3216 = vmatpush1.msra.mxu0 0.0
      %3217 = vmatprep.subr.mxu0 0.0
      %3218 = vmatpush1.msra.mxu0 0.0
      %3219 = vmatprep.subr.mxu0 0.0
      %3220 = vmatpush1.msra.mxu0 0.0
      %3221 = vmatprep.subr.mxu0 0.0
      %3222 = vmatpush1.msra.mxu0 0.0
      %3223 = vmatprep.subr.mxu0 0.0
      %3224 = vmatpush1.msra.mxu0 0.0
      %3225 = vmatprep.subr.mxu0 0.0
      %3226 = vmatpush1.msra.mxu0 0.0
      %3227 = vmatprep.subr.mxu0 0.0
      %3228 = vmatpush1.msra.mxu0 0.0
      %3229 = vmatprep.subr.mxu0 0.0
      %3230 = vmatpush1.msra.mxu0 0.0
      %3231 = vmatprep.subr.mxu0 0.0
      %3232 = vmatpush1.msra.mxu0 0.0
      %3233 = vmatprep.mubr.f32.mxu0 0.0
      %3234 = vmatmul.mubr.f32.gmra.mrb[0].mxu0 %v3107
      %v3235 = vpop.f32.mrb[0].mxu0
      %v3236 = vadd.f32 0.0, %v3235
      %v3237 = vpop.f32.mrb[0].mxu0
      %v3238 = vadd.f32 0.0, %v3237
      %3239 = vdwg.mxu0
      %v3241 = vlaneseq
      %v3242 = vshrl.u32 %v3241, 7
      %v3243 = vsub.s32 0, %v3242
      %v3244 = vrot.slane %v3136, %v3243
      %v3245 = vlaneseq
      %v3246 = vshrl.u32 %v3245, 7
      %v3247 = vsub.s32 1, %v3246
      %v3248 = vrot.slane %v3136, %v3247
      %v3251 = vadd.f32 %v3244, %v3236
      %v3252 = vadd.f32 %v3248, %v3238
      %s3253 = scalar_lea.vmem %s6, 256
      %v3254 = vld [vmem:[%s3253] sm:$0xff]
      %v3255 = vld [vmem:[%s3253 + $0x8] sm:$0xff]
      %v3256 = vld [vmem:[%s3253 + $0x10] sm:$0xff]
      %v3257 = vld [vmem:[%s3253 + $0x18] sm:$0xff]
      %v3258 = vld [vmem:[%s3253 + $0x20] sm:$0xff]
      %v3259 = vld [vmem:[%s3253 + $0x28] sm:$0xff]
      %v3260 = vld [vmem:[%s3253 + $0x30] sm:$0xff]
      %v3261 = vld [vmem:[%s3253 + $0x38] sm:$0xff]
      %v3262 = vld [vmem:[%s3253 + $0x40] sm:$0xff]
      %v3263 = vld [vmem:[%s3253 + $0x48] sm:$0xff]
      %v3264 = vld [vmem:[%s3253 + $0x50] sm:$0xff]
      %v3265 = vld [vmem:[%s3253 + $0x58] sm:$0xff]
      %v3266 = vld [vmem:[%s3253 + $0x60] sm:$0xff]
      %v3267 = vld [vmem:[%s3253 + $0x68] sm:$0xff]
      %v3268 = vld [vmem:[%s3253 + $0x70] sm:$0xff]
      %v3269 = vld [vmem:[%s3253 + $0x78] sm:$0xff]
      %v3270 = vld [vmem:[%s3253 + $0x80] sm:$0xff]
      %v3271 = vld [vmem:[%s3253 + $0x88] sm:$0xff]
      %v3272 = vld [vmem:[%s3253 + $0x90] sm:$0xff]
      %v3273 = vld [vmem:[%s3253 + $0x98] sm:$0xff]
      %v3274 = vld [vmem:[%s3253 + $0xa0] sm:$0xff]
      %v3275 = vld [vmem:[%s3253 + $0xa8] sm:$0xff]
      %v3276 = vld [vmem:[%s3253 + $0xb0] sm:$0xff]
      %v3277 = vld [vmem:[%s3253 + $0xb8] sm:$0xff]
      %v3278 = vld [vmem:[%s3253 + $0xc0] sm:$0xff]
      %v3279 = vld [vmem:[%s3253 + $0xc8] sm:$0xff]
      %v3280 = vld [vmem:[%s3253 + $0xd0] sm:$0xff]
      %v3281 = vld [vmem:[%s3253 + $0xd8] sm:$0xff]
      %v3282 = vld [vmem:[%s3253 + $0xe0] sm:$0xff]
      %v3283 = vld [vmem:[%s3253 + $0xe8] sm:$0xff]
      %v3284 = vld [vmem:[%s3253 + $0xf0] sm:$0xff]
      %v3285 = vld [vmem:[%s3253 + $0xf8] sm:$0xff]
      %3286 = vmatprep.subr.mxu0 %v3255
      %3287 = vmatpush1.msra.mxu0 %v3254
      %3288 = vmatprep.subr.mxu0 %v3257
      %3289 = vmatpush1.msra.mxu0 %v3256
      %3290 = vmatprep.subr.mxu0 %v3259
      %3291 = vmatpush1.msra.mxu0 %v3258
      %3292 = vmatprep.subr.mxu0 %v3261
      %3293 = vmatpush1.msra.mxu0 %v3260
      %3294 = vmatprep.subr.mxu0 %v3263
      %3295 = vmatpush1.msra.mxu0 %v3262
      %3296 = vmatprep.subr.mxu0 %v3265
      %3297 = vmatpush1.msra.mxu0 %v3264
      %3298 = vmatprep.subr.mxu0 %v3267
      %3299 = vmatpush1.msra.mxu0 %v3266
      %3300 = vmatprep.subr.mxu0 %v3269
      %3301 = vmatpush1.msra.mxu0 %v3268
      %3302 = vmatprep.subr.mxu0 %v3271
      %3303 = vmatpush1.msra.mxu0 %v3270
      %3304 = vmatprep.subr.mxu0 %v3273
      %3305 = vmatpush1.msra.mxu0 %v3272
      %3306 = vmatprep.subr.mxu0 %v3275
      %3307 = vmatpush1.msra.mxu0 %v3274
      %3308 = vmatprep.subr.mxu0 %v3277
      %3309 = vmatpush1.msra.mxu0 %v3276
      %3310 = vmatprep.subr.mxu0 %v3279
      %3311 = vmatpush1.msra.mxu0 %v3278
      %3312 = vmatprep.subr.mxu0 %v3281
      %3313 = vmatpush1.msra.mxu0 %v3280
      %3314 = vmatprep.subr.mxu0 %v3283
      %3315 = vmatpush1.msra.mxu0 %v3282
      %3316 = vmatprep.subr.mxu0 %v3285
      %3317 = vmatpush1.msra.mxu0 %v3284
      %3318 = vmatprep.subr.mxu0 0.0
      %3319 = vmatpush1.msra.mxu0 0.0
      %3320 = vmatprep.subr.mxu0 0.0
      %3321 = vmatpush1.msra.mxu0 0.0
      %3322 = vmatprep.subr.mxu0 0.0
      %3323 = vmatpush1.msra.mxu0 0.0
      %3324 = vmatprep.subr.mxu0 0.0
      %3325 = vmatpush1.msra.mxu0 0.0
      %3326 = vmatprep.subr.mxu0 0.0
      %3327 = vmatpush1.msra.mxu0 0.0
      %3328 = vmatprep.subr.mxu0 0.0
      %3329 = vmatpush1.msra.mxu0 0.0
      %3330 = vmatprep.subr.mxu0 0.0
      %3331 = vmatpush1.msra.mxu0 0.0
      %3332 = vmatprep.subr.mxu0 0.0
      %3333 = vmatpush1.msra.mxu0 0.0
      %3334 = vmatprep.subr.mxu0 0.0
      %3335 = vmatpush1.msra.mxu0 0.0
      %3336 = vmatprep.subr.mxu0 0.0
      %3337 = vmatpush1.msra.mxu0 0.0
      %3338 = vmatprep.subr.mxu0 0.0
      %3339 = vmatpush1.msra.mxu0 0.0
      %3340 = vmatprep.subr.mxu0 0.0
      %3341 = vmatpush1.msra.mxu0 0.0
      %3342 = vmatprep.subr.mxu0 0.0
      %3343 = vmatpush1.msra.mxu0 0.0
      %3344 = vmatprep.subr.mxu0 0.0
      %3345 = vmatpush1.msra.mxu0 0.0
      %3346 = vmatprep.subr.mxu0 0.0
      %3347 = vmatpush1.msra.mxu0 0.0
      %3348 = vmatprep.subr.mxu0 0.0
      %3349 = vmatpush1.msra.mxu0 0.0
      %3350 = vmatprep.mubr.f32.mxu0 0.0
      %3351 = vmatmul.mubr.f32.gmra.mrb[0].mxu0 %v3112
      %v3352 = vpop.f32.mrb[0].mxu0
      %v3353 = vadd.f32 0.0, %v3352
      %v3354 = vpop.f32.mrb[0].mxu0
      %v3355 = vadd.f32 0.0, %v3354
      %3356 = vdwg.mxu0
      %v3357 = vadd.f32 %v3251, %v3353
      %v3358 = vadd.f32 %v3252, %v3355
      %s3359 = scalar_lea.vmem %s6, 512
      %v3360 = vld [vmem:[%s3359] sm:$0xff]
      %v3361 = vld [vmem:[%s3359 + $0x8] sm:$0xff]
      %v3362 = vld [vmem:[%s3359 + $0x10] sm:$0xff]
      %v3363 = vld [vmem:[%s3359 + $0x18] sm:$0xff]
      %v3364 = vld [vmem:[%s3359 + $0x20] sm:$0xff]
      %v3365 = vld [vmem:[%s3359 + $0x28] sm:$0xff]
      %v3366 = vld [vmem:[%s3359 + $0x30] sm:$0xff]
      %v3367 = vld [vmem:[%s3359 + $0x38] sm:$0xff]
      %v3368 = vld [vmem:[%s3359 + $0x40] sm:$0xff]
      %v3369 = vld [vmem:[%s3359 + $0x48] sm:$0xff]
      %v3370 = vld [vmem:[%s3359 + $0x50] sm:$0xff]
      %v3371 = vld [vmem:[%s3359 + $0x58] sm:$0xff]
      %v3372 = vld [vmem:[%s3359 + $0x60] sm:$0xff]
      %v3373 = vld [vmem:[%s3359 + $0x68] sm:$0xff]
      %v3374 = vld [vmem:[%s3359 + $0x70] sm:$0xff]
      %v3375 = vld [vmem:[%s3359 + $0x78] sm:$0xff]
      %v3376 = vld [vmem:[%s3359 + $0x80] sm:$0xff]
      %v3377 = vld [vmem:[%s3359 + $0x88] sm:$0xff]
      %v3378 = vld [vmem:[%s3359 + $0x90] sm:$0xff]
      %v3379 = vld [vmem:[%s3359 + $0x98] sm:$0xff]
      %v3380 = vld [vmem:[%s3359 + $0xa0] sm:$0xff]
      %v3381 = vld [vmem:[%s3359 + $0xa8] sm:$0xff]
      %v3382 = vld [vmem:[%s3359 + $0xb0] sm:$0xff]
      %v3383 = vld [vmem:[%s3359 + $0xb8] sm:$0xff]
      %v3384 = vld [vmem:[%s3359 + $0xc0] sm:$0xff]
      %v3385 = vld [vmem:[%s3359 + $0xc8] sm:$0xff]
      %v3386 = vld [vmem:[%s3359 + $0xd0] sm:$0xff]
      %v3387 = vld [vmem:[%s3359 + $0xd8] sm:$0xff]
      %v3388 = vld [vmem:[%s3359 + $0xe0] sm:$0xff]
      %v3389 = vld [vmem:[%s3359 + $0xe8] sm:$0xff]
      %v3390 = vld [vmem:[%s3359 + $0xf0] sm:$0xff]
      %v3391 = vld [vmem:[%s3359 + $0xf8] sm:$0xff]
      %3392 = vmatprep.subr.mxu0 %v3361
      %3393 = vmatpush1.msra.mxu0 %v3360
      %3394 = vmatprep.subr.mxu0 %v3363
      %3395 = vmatpush1.msra.mxu0 %v3362
      %3396 = vmatprep.subr.mxu0 %v3365
      %3397 = vmatpush1.msra.mxu0 %v3364
      %3398 = vmatprep.subr.mxu0 %v3367
      %3399 = vmatpush1.msra.mxu0 %v3366
      %3400 = vmatprep.subr.mxu0 %v3369
      %3401 = vmatpush1.msra.mxu0 %v3368
      %3402 = vmatprep.subr.mxu0 %v3371
      %3403 = vmatpush1.msra.mxu0 %v3370
      %3404 = vmatprep.subr.mxu0 %v3373
      %3405 = vmatpush1.msra.mxu0 %v3372
      %3406 = vmatprep.subr.mxu0 %v3375
      %3407 = vmatpush1.msra.mxu0 %v3374
      %3408 = vmatprep.subr.mxu0 %v3377
      %3409 = vmatpush1.msra.mxu0 %v3376
      %3410 = vmatprep.subr.mxu0 %v3379
      %3411 = vmatpush1.msra.mxu0 %v3378
      %3412 = vmatprep.subr.mxu0 %v3381
      %3413 = vmatpush1.msra.mxu0 %v3380
      %3414 = vmatprep.subr.mxu0 %v3383
      %3415 = vmatpush1.msra.mxu0 %v3382
      %3416 = vmatprep.subr.mxu0 %v3385
      %3417 = vmatpush1.msra.mxu0 %v3384
      %3418 = vmatprep.subr.mxu0 %v3387
      %3419 = vmatpush1.msra.mxu0 %v3386
      %3420 = vmatprep.subr.mxu0 %v3389
      %3421 = vmatpush1.msra.mxu0 %v3388
      %3422 = vmatprep.subr.mxu0 %v3391
      %3423 = vmatpush1.msra.mxu0 %v3390
      %3424 = vmatprep.subr.mxu0 0.0
      %3425 = vmatpush1.msra.mxu0 0.0
      %3426 = vmatprep.subr.mxu0 0.0
      %3427 = vmatpush1.msra.mxu0 0.0
      %3428 = vmatprep.subr.mxu0 0.0
      %3429 = vmatpush1.msra.mxu0 0.0
      %3430 = vmatprep.subr.mxu0 0.0
      %3431 = vmatpush1.msra.mxu0 0.0
      %3432 = vmatprep.subr.mxu0 0.0
      %3433 = vmatpush1.msra.mxu0 0.0
      %3434 = vmatprep.subr.mxu0 0.0
      %3435 = vmatpush1.msra.mxu0 0.0
      %3436 = vmatprep.subr.mxu0 0.0
      %3437 = vmatpush1.msra.mxu0 0.0
      %3438 = vmatprep.subr.mxu0 0.0
      %3439 = vmatpush1.msra.mxu0 0.0
      %3440 = vmatprep.subr.mxu0 0.0
      %3441 = vmatpush1.msra.mxu0 0.0
      %3442 = vmatprep.subr.mxu0 0.0
      %3443 = vmatpush1.msra.mxu0 0.0
      %3444 = vmatprep.subr.mxu0 0.0
      %3445 = vmatpush1.msra.mxu0 0.0
      %3446 = vmatprep.subr.mxu0 0.0
      %3447 = vmatpush1.msra.mxu0 0.0
      %3448 = vmatprep.subr.mxu0 0.0
      %3449 = vmatpush1.msra.mxu0 0.0
      %3450 = vmatprep.subr.mxu0 0.0
      %3451 = vmatpush1.msra.mxu0 0.0
      %3452 = vmatprep.subr.mxu0 0.0
      %3453 = vmatpush1.msra.mxu0 0.0
      %3454 = vmatprep.subr.mxu0 0.0
      %3455 = vmatpush1.msra.mxu0 0.0
      %3456 = vmatprep.mubr.f32.mxu0 0.0
      %3457 = vmatmul.mubr.f32.gmra.mrb[0].mxu0 %v3117
      %v3458 = vpop.f32.mrb[0].mxu0
      %v3459 = vadd.f32 0.0, %v3458
      %v3460 = vpop.f32.mrb[0].mxu0
      %v3461 = vadd.f32 0.0, %v3460
      %3462 = vdwg.mxu0
      %v3463 = vadd.f32 %v3357, %v3459
      %v3464 = vadd.f32 %v3358, %v3461
      %s3465 = scalar_lea.vmem %s6, 768
      %v3466 = vld [vmem:[%s3465] sm:$0xff]
      %v3467 = vld [vmem:[%s3465 + $0x8] sm:$0xff]
      %v3468 = vld [vmem:[%s3465 + $0x10] sm:$0xff]
      %v3469 = vld [vmem:[%s3465 + $0x18] sm:$0xff]
      %v3470 = vld [vmem:[%s3465 + $0x20] sm:$0xff]
      %v3471 = vld [vmem:[%s3465 + $0x28] sm:$0xff]
      %v3472 = vld [vmem:[%s3465 + $0x30] sm:$0xff]
      %v3473 = vld [vmem:[%s3465 + $0x38] sm:$0xff]
      %v3474 = vld [vmem:[%s3465 + $0x40] sm:$0xff]
      %v3475 = vld [vmem:[%s3465 + $0x48] sm:$0xff]
      %v3476 = vld [vmem:[%s3465 + $0x50] sm:$0xff]
      %v3477 = vld [vmem:[%s3465 + $0x58] sm:$0xff]
      %v3478 = vld [vmem:[%s3465 + $0x60] sm:$0xff]
      %v3479 = vld [vmem:[%s3465 + $0x68] sm:$0xff]
      %v3480 = vld [vmem:[%s3465 + $0x70] sm:$0xff]
      %v3481 = vld [vmem:[%s3465 + $0x78] sm:$0xff]
      %v3482 = vld [vmem:[%s3465 + $0x80] sm:$0xff]
      %v3483 = vld [vmem:[%s3465 + $0x88] sm:$0xff]
      %v3484 = vld [vmem:[%s3465 + $0x90] sm:$0xff]
      %v3485 = vld [vmem:[%s3465 + $0x98] sm:$0xff]
      %v3486 = vld [vmem:[%s3465 + $0xa0] sm:$0xff]
      %v3487 = vld [vmem:[%s3465 + $0xa8] sm:$0xff]
      %v3488 = vld [vmem:[%s3465 + $0xb0] sm:$0xff]
      %v3489 = vld [vmem:[%s3465 + $0xb8] sm:$0xff]
      %v3490 = vld [vmem:[%s3465 + $0xc0] sm:$0xff]
      %v3491 = vld [vmem:[%s3465 + $0xc8] sm:$0xff]
      %v3492 = vld [vmem:[%s3465 + $0xd0] sm:$0xff]
      %v3493 = vld [vmem:[%s3465 + $0xd8] sm:$0xff]
      %v3494 = vld [vmem:[%s3465 + $0xe0] sm:$0xff]
      %v3495 = vld [vmem:[%s3465 + $0xe8] sm:$0xff]
      %v3496 = vld [vmem:[%s3465 + $0xf0] sm:$0xff]
      %v3497 = vld [vmem:[%s3465 + $0xf8] sm:$0xff]
      %3498 = vmatprep.subr.mxu0 %v3467
      %3499 = vmatpush1.msra.mxu0 %v3466
      %3500 = vmatprep.subr.mxu0 %v3469
      %3501 = vmatpush1.msra.mxu0 %v3468
      %3502 = vmatprep.subr.mxu0 %v3471
      %3503 = vmatpush1.msra.mxu0 %v3470
      %3504 = vmatprep.subr.mxu0 %v3473
      %3505 = vmatpush1.msra.mxu0 %v3472
      %3506 = vmatprep.subr.mxu0 %v3475
      %3507 = vmatpush1.msra.mxu0 %v3474
      %3508 = vmatprep.subr.mxu0 %v3477
      %3509 = vmatpush1.msra.mxu0 %v3476
      %3510 = vmatprep.subr.mxu0 %v3479
      %3511 = vmatpush1.msra.mxu0 %v3478
      %3512 = vmatprep.subr.mxu0 %v3481
      %3513 = vmatpush1.msra.mxu0 %v3480
      %3514 = vmatprep.subr.mxu0 %v3483
      %3515 = vmatpush1.msra.mxu0 %v3482
      %3516 = vmatprep.subr.mxu0 %v3485
      %3517 = vmatpush1.msra.mxu0 %v3484
      %3518 = vmatprep.subr.mxu0 %v3487
      %3519 = vmatpush1.msra.mxu0 %v3486
      %3520 = vmatprep.subr.mxu0 %v3489
      %3521 = vmatpush1.msra.mxu0 %v3488
      %3522 = vmatprep.subr.mxu0 %v3491
      %3523 = vmatpush1.msra.mxu0 %v3490
      %3524 = vmatprep.subr.mxu0 %v3493
      %3525 = vmatpush1.msra.mxu0 %v3492
      %3526 = vmatprep.subr.mxu0 %v3495
      %3527 = vmatpush1.msra.mxu0 %v3494
      %3528 = vmatprep.subr.mxu0 %v3497
      %3529 = vmatpush1.msra.mxu0 %v3496
      %3530 = vmatprep.subr.mxu0 0.0
      %3531 = vmatpush1.msra.mxu0 0.0
      %3532 = vmatprep.subr.mxu0 0.0
      %3533 = vmatpush1.msra.mxu0 0.0
      %3534 = vmatprep.subr.mxu0 0.0
      %3535 = vmatpush1.msra.mxu0 0.0
      %3536 = vmatprep.subr.mxu0 0.0
      %3537 = vmatpush1.msra.mxu0 0.0
      %3538 = vmatprep.subr.mxu0 0.0
      %3539 = vmatpush1.msra.mxu0 0.0
      %3540 = vmatprep.subr.mxu0 0.0
      %3541 = vmatpush1.msra.mxu0 0.0
      %3542 = vmatprep.subr.mxu0 0.0
      %3543 = vmatpush1.msra.mxu0 0.0
      %3544 = vmatprep.subr.mxu0 0.0
      %3545 = vmatpush1.msra.mxu0 0.0
      %3546 = vmatprep.subr.mxu0 0.0
      %3547 = vmatpush1.msra.mxu0 0.0
      %3548 = vmatprep.subr.mxu0 0.0
      %3549 = vmatpush1.msra.mxu0 0.0
      %3550 = vmatprep.subr.mxu0 0.0
      %3551 = vmatpush1.msra.mxu0 0.0
      %3552 = vmatprep.subr.mxu0 0.0
      %3553 = vmatpush1.msra.mxu0 0.0
      %3554 = vmatprep.subr.mxu0 0.0
      %3555 = vmatpush1.msra.mxu0 0.0
      %3556 = vmatprep.subr.mxu0 0.0
      %3557 = vmatpush1.msra.mxu0 0.0
      %3558 = vmatprep.subr.mxu0 0.0
      %3559 = vmatpush1.msra.mxu0 0.0
      %3560 = vmatprep.subr.mxu0 0.0
      %3561 = vmatpush1.msra.mxu0 0.0
      %3562 = vmatprep.mubr.f32.mxu0 0.0
      %3563 = vmatmul.mubr.f32.gmra.mrb[0].mxu0 %v3122
      %v3564 = vpop.f32.mrb[0].mxu0
      %v3565 = vadd.f32 0.0, %v3564
      %v3566 = vpop.f32.mrb[0].mxu0
      %v3567 = vadd.f32 0.0, %v3566
      %3568 = vdwg.mxu0
      %v3569 = vadd.f32 %v3463, %v3565
      %v3570 = vadd.f32 %v3464, %v3567
      %s3571 = scalar_lea.vmem %s6, 1024
      %v3572 = vld [vmem:[%s3571] sm:$0xff]
      %v3573 = vld [vmem:[%s3571 + $0x8] sm:$0xff]
      %v3574 = vld [vmem:[%s3571 + $0x10] sm:$0xff]
      %v3575 = vld [vmem:[%s3571 + $0x18] sm:$0xff]
      %v3576 = vld [vmem:[%s3571 + $0x20] sm:$0xff]
      %v3577 = vld [vmem:[%s3571 + $0x28] sm:$0xff]
      %v3578 = vld [vmem:[%s3571 + $0x30] sm:$0xff]
      %v3579 = vld [vmem:[%s3571 + $0x38] sm:$0xff]
      %v3580 = vld [vmem:[%s3571 + $0x40] sm:$0xff]
      %v3581 = vld [vmem:[%s3571 + $0x48] sm:$0xff]
      %v3582 = vld [vmem:[%s3571 + $0x50] sm:$0xff]
      %v3583 = vld [vmem:[%s3571 + $0x58] sm:$0xff]
      %v3584 = vld [vmem:[%s3571 + $0x60] sm:$0xff]
      %v3585 = vld [vmem:[%s3571 + $0x68] sm:$0xff]
      %v3586 = vld [vmem:[%s3571 + $0x70] sm:$0xff]
      %v3587 = vld [vmem:[%s3571 + $0x78] sm:$0xff]
      %v3588 = vld [vmem:[%s3571 + $0x80] sm:$0xff]
      %v3589 = vld [vmem:[%s3571 + $0x88] sm:$0xff]
      %v3590 = vld [vmem:[%s3571 + $0x90] sm:$0xff]
      %v3591 = vld [vmem:[%s3571 + $0x98] sm:$0xff]
      %v3592 = vld [vmem:[%s3571 + $0xa0] sm:$0xff]
      %v3593 = vld [vmem:[%s3571 + $0xa8] sm:$0xff]
      %v3594 = vld [vmem:[%s3571 + $0xb0] sm:$0xff]
      %v3595 = vld [vmem:[%s3571 + $0xb8] sm:$0xff]
      %v3596 = vld [vmem:[%s3571 + $0xc0] sm:$0xff]
      %v3597 = vld [vmem:[%s3571 + $0xc8] sm:$0xff]
      %v3598 = vld [vmem:[%s3571 + $0xd0] sm:$0xff]
      %v3599 = vld [vmem:[%s3571 + $0xd8] sm:$0xff]
      %v3600 = vld [vmem:[%s3571 + $0xe0] sm:$0xff]
      %v3601 = vld [vmem:[%s3571 + $0xe8] sm:$0xff]
      %v3602 = vld [vmem:[%s3571 + $0xf0] sm:$0xff]
      %v3603 = vld [vmem:[%s3571 + $0xf8] sm:$0xff]
      %3604 = vmatprep.subr.mxu0 %v3573
      %3605 = vmatpush1.msra.mxu0 %v3572
      %3606 = vmatprep.subr.mxu0 %v3575
      %3607 = vmatpush1.msra.mxu0 %v3574
      %3608 = vmatprep.subr.mxu0 %v3577
      %3609 = vmatpush1.msra.mxu0 %v3576
      %3610 = vmatprep.subr.mxu0 %v3579
      %3611 = vmatpush1.msra.mxu0 %v3578
      %3612 = vmatprep.subr.mxu0 %v3581
      %3613 = vmatpush1.msra.mxu0 %v3580
      %3614 = vmatprep.subr.mxu0 %v3583
      %3615 = vmatpush1.msra.mxu0 %v3582
      %3616 = vmatprep.subr.mxu0 %v3585
      %3617 = vmatpush1.msra.mxu0 %v3584
      %3618 = vmatprep.subr.mxu0 %v3587
      %3619 = vmatpush1.msra.mxu0 %v3586
      %3620 = vmatprep.subr.mxu0 %v3589
      %3621 = vmatpush1.msra.mxu0 %v3588
      %3622 = vmatprep.subr.mxu0 %v3591
      %3623 = vmatpush1.msra.mxu0 %v3590
      %3624 = vmatprep.subr.mxu0 %v3593
      %3625 = vmatpush1.msra.mxu0 %v3592
      %3626 = vmatprep.subr.mxu0 %v3595
      %3627 = vmatpush1.msra.mxu0 %v3594
      %3628 = vmatprep.subr.mxu0 %v3597
      %3629 = vmatpush1.msra.mxu0 %v3596
      %3630 = vmatprep.subr.mxu0 %v3599
      %3631 = vmatpush1.msra.mxu0 %v3598
      %3632 = vmatprep.subr.mxu0 %v3601
      %3633 = vmatpush1.msra.mxu0 %v3600
      %3634 = vmatprep.subr.mxu0 %v3603
      %3635 = vmatpush1.msra.mxu0 %v3602
      %3636 = vmatprep.subr.mxu0 0.0
      %3637 = vmatpush1.msra.mxu0 0.0
      %3638 = vmatprep.subr.mxu0 0.0
      %3639 = vmatpush1.msra.mxu0 0.0
      %3640 = vmatprep.subr.mxu0 0.0
      %3641 = vmatpush1.msra.mxu0 0.0
      %3642 = vmatprep.subr.mxu0 0.0
      %3643 = vmatpush1.msra.mxu0 0.0
      %3644 = vmatprep.subr.mxu0 0.0
      %3645 = vmatpush1.msra.mxu0 0.0
      %3646 = vmatprep.subr.mxu0 0.0
      %3647 = vmatpush1.msra.mxu0 0.0
      %3648 = vmatprep.subr.mxu0 0.0
      %3649 = vmatpush1.msra.mxu0 0.0
      %3650 = vmatprep.subr.mxu0 0.0
      %3651 = vmatpush1.msra.mxu0 0.0
      %3652 = vmatprep.subr.mxu0 0.0
      %3653 = vmatpush1.msra.mxu0 0.0
      %3654 = vmatprep.subr.mxu0 0.0
      %3655 = vmatpush1.msra.mxu0 0.0
      %3656 = vmatprep.subr.mxu0 0.0
      %3657 = vmatpush1.msra.mxu0 0.0
      %3658 = vmatprep.subr.mxu0 0.0
      %3659 = vmatpush1.msra.mxu0 0.0
      %3660 = vmatprep.subr.mxu0 0.0
      %3661 = vmatpush1.msra.mxu0 0.0
      %3662 = vmatprep.subr.mxu0 0.0
      %3663 = vmatpush1.msra.mxu0 0.0
      %3664 = vmatprep.subr.mxu0 0.0
      %3665 = vmatpush1.msra.mxu0 0.0
      %3666 = vmatprep.subr.mxu0 0.0
      %3667 = vmatpush1.msra.mxu0 0.0
      %3668 = vmatprep.mubr.f32.mxu0 0.0
      %3669 = vmatmul.mubr.f32.gmra.mrb[0].mxu0 %v3127
      %v3670 = vpop.f32.mrb[0].mxu0
      %v3671 = vadd.f32 0.0, %v3670
      %v3672 = vpop.f32.mrb[0].mxu0
      %v3673 = vadd.f32 0.0, %v3672
      %3674 = vdwg.mxu0
      %v3675 = vadd.f32 %v3569, %v3671
      %v3676 = vadd.f32 %v3570, %v3673
      %s3677 = scalar_lea.vmem %s6, 1280
      %v3678 = vld [vmem:[%s3677] sm:$0xff]
      %v3679 = vld [vmem:[%s3677 + $0x8] sm:$0xff]
      %v3680 = vld [vmem:[%s3677 + $0x10] sm:$0xff]
      %v3681 = vld [vmem:[%s3677 + $0x18] sm:$0xff]
      %v3682 = vld [vmem:[%s3677 + $0x20] sm:$0xff]
      %v3683 = vld [vmem:[%s3677 + $0x28] sm:$0xff]
      %v3684 = vld [vmem:[%s3677 + $0x30] sm:$0xff]
      %v3685 = vld [vmem:[%s3677 + $0x38] sm:$0xff]
      %v3686 = vld [vmem:[%s3677 + $0x40] sm:$0xff]
      %v3687 = vld [vmem:[%s3677 + $0x48] sm:$0xff]
      %v3688 = vld [vmem:[%s3677 + $0x50] sm:$0xff]
      %v3689 = vld [vmem:[%s3677 + $0x58] sm:$0xff]
      %v3690 = vld [vmem:[%s3677 + $0x60] sm:$0xff]
      %v3691 = vld [vmem:[%s3677 + $0x68] sm:$0xff]
      %v3692 = vld [vmem:[%s3677 + $0x70] sm:$0xff]
      %v3693 = vld [vmem:[%s3677 + $0x78] sm:$0xff]
      %v3694 = vld [vmem:[%s3677 + $0x80] sm:$0xff]
      %v3695 = vld [vmem:[%s3677 + $0x88] sm:$0xff]
      %v3696 = vld [vmem:[%s3677 + $0x90] sm:$0xff]
      %v3697 = vld [vmem:[%s3677 + $0x98] sm:$0xff]
      %v3698 = vld [vmem:[%s3677 + $0xa0] sm:$0xff]
      %v3699 = vld [vmem:[%s3677 + $0xa8] sm:$0xff]
      %v3700 = vld [vmem:[%s3677 + $0xb0] sm:$0xff]
      %v3701 = vld [vmem:[%s3677 + $0xb8] sm:$0xff]
      %v3702 = vld [vmem:[%s3677 + $0xc0] sm:$0xff]
      %v3703 = vld [vmem:[%s3677 + $0xc8] sm:$0xff]
      %v3704 = vld [vmem:[%s3677 + $0xd0] sm:$0xff]
      %v3705 = vld [vmem:[%s3677 + $0xd8] sm:$0xff]
      %v3706 = vld [vmem:[%s3677 + $0xe0] sm:$0xff]
      %v3707 = vld [vmem:[%s3677 + $0xe8] sm:$0xff]
      %v3708 = vld [vmem:[%s3677 + $0xf0] sm:$0xff]
      %v3709 = vld [vmem:[%s3677 + $0xf8] sm:$0xff]
      %3710 = vmatprep.subr.mxu0 %v3679
      %3711 = vmatpush1.msra.mxu0 %v3678
      %3712 = vmatprep.subr.mxu0 %v3681
      %3713 = vmatpush1.msra.mxu0 %v3680
      %3714 = vmatprep.subr.mxu0 %v3683
      %3715 = vmatpush1.msra.mxu0 %v3682
      %3716 = vmatprep.subr.mxu0 %v3685
      %3717 = vmatpush1.msra.mxu0 %v3684
      %3718 = vmatprep.subr.mxu0 %v3687
      %3719 = vmatpush1.msra.mxu0 %v3686
      %3720 = vmatprep.subr.mxu0 %v3689
      %3721 = vmatpush1.msra.mxu0 %v3688
      %3722 = vmatprep.subr.mxu0 %v3691
      %3723 = vmatpush1.msra.mxu0 %v3690
      %3724 = vmatprep.subr.mxu0 %v3693
      %3725 = vmatpush1.msra.mxu0 %v3692
      %3726 = vmatprep.subr.mxu0 %v3695
      %3727 = vmatpush1.msra.mxu0 %v3694
      %3728 = vmatprep.subr.mxu0 %v3697
      %3729 = vmatpush1.msra.mxu0 %v3696
      %3730 = vmatprep.subr.mxu0 %v3699
      %3731 = vmatpush1.msra.mxu0 %v3698
      %3732 = vmatprep.subr.mxu0 %v3701
      %3733 = vmatpush1.msra.mxu0 %v3700
      %3734 = vmatprep.subr.mxu0 %v3703
      %3735 = vmatpush1.msra.mxu0 %v3702
      %3736 = vmatprep.subr.mxu0 %v3705
      %3737 = vmatpush1.msra.mxu0 %v3704
      %3738 = vmatprep.subr.mxu0 %v3707
      %3739 = vmatpush1.msra.mxu0 %v3706
      %3740 = vmatprep.subr.mxu0 %v3709
      %3741 = vmatpush1.msra.mxu0 %v3708
      %3742 = vmatprep.subr.mxu0 0.0
      %3743 = vmatpush1.msra.mxu0 0.0
      %3744 = vmatprep.subr.mxu0 0.0
      %3745 = vmatpush1.msra.mxu0 0.0
      %3746 = vmatprep.subr.mxu0 0.0
      %3747 = vmatpush1.msra.mxu0 0.0
      %3748 = vmatprep.subr.mxu0 0.0
      %3749 = vmatpush1.msra.mxu0 0.0
      %3750 = vmatprep.subr.mxu0 0.0
      %3751 = vmatpush1.msra.mxu0 0.0
      %3752 = vmatprep.subr.mxu0 0.0
      %3753 = vmatpush1.msra.mxu0 0.0
      %3754 = vmatprep.subr.mxu0 0.0
      %3755 = vmatpush1.msra.mxu0 0.0
      %3756 = vmatprep.subr.mxu0 0.0
      %3757 = vmatpush1.msra.mxu0 0.0
      %3758 = vmatprep.subr.mxu0 0.0
      %3759 = vmatpush1.msra.mxu0 0.0
      %3760 = vmatprep.subr.mxu0 0.0
      %3761 = vmatpush1.msra.mxu0 0.0
      %3762 = vmatprep.subr.mxu0 0.0
      %3763 = vmatpush1.msra.mxu0 0.0
      %3764 = vmatprep.subr.mxu0 0.0
      %3765 = vmatpush1.msra.mxu0 0.0
      %3766 = vmatprep.subr.mxu0 0.0
      %3767 = vmatpush1.msra.mxu0 0.0
      %3768 = vmatprep.subr.mxu0 0.0
      %3769 = vmatpush1.msra.mxu0 0.0
      %3770 = vmatprep.subr.mxu0 0.0
      %3771 = vmatpush1.msra.mxu0 0.0
      %3772 = vmatprep.subr.mxu0 0.0
      %3773 = vmatpush1.msra.mxu0 0.0
      %3774 = vmatprep.mubr.f32.mxu0 0.0
      %3775 = vmatmul.mubr.f32.gmra.mrb[0].mxu0 %v3132
      %v3776 = vpop.f32.mrb[0].mxu0
      %v3777 = vadd.f32 0.0, %v3776
      %v3778 = vpop.f32.mrb[0].mxu0
      %v3779 = vadd.f32 0.0, %v3778
      %3780 = vdwg.mxu0
      %v3781 = vadd.f32 %v3675, %v3777
      %v3782 = vadd.f32 %v3676, %v3779
      %v3783 = vmax.f32 %v3781, 0.0
      %v3784 = vmax.f32 %v3782, 0.0
      %v3785 = vld [vmem:[%s7] sm:$0xff]
      %v3786 = vld [vmem:[%s7 + $0x8] sm:$0xff]
      %v3787 = vld [vmem:[%s7 + $0x10] sm:$0xff]
      %v3788 = vld [vmem:[%s7 + $0x18] sm:$0xff]
      %v3789 = vld [vmem:[%s7 + $0x20] sm:$0xff]
      %v3790 = vld [vmem:[%s7 + $0x28] sm:$0xff]
      %v3791 = vld [vmem:[%s7 + $0x30] sm:$0xff]
      %v3792 = vld [vmem:[%s7 + $0x38] sm:$0xff]
      %v3793 = vld [vmem:[%s7 + $0x40] sm:$0xff]
      %v3794 = vld [vmem:[%s7 + $0x48] sm:$0xff]
      %v3795 = vld [vmem:[%s7 + $0x50] sm:$0xff]
      %v3796 = vld [vmem:[%s7 + $0x58] sm:$0xff]
      %v3797 = vld [vmem:[%s7 + $0x60] sm:$0xff]
      %v3798 = vld [vmem:[%s7 + $0x68] sm:$0xff]
      %v3799 = vld [vmem:[%s7 + $0x70] sm:$0xff]
      %v3800 = vld [vmem:[%s7 + $0x78] sm:$0xff]
      %v3801 = vld [vmem:[%s7 + $0x80] sm:$0xff]
      %v3802 = vld [vmem:[%s7 + $0x88] sm:$0xff]
      %v3803 = vld [vmem:[%s7 + $0x90] sm:$0x3f]
      %v3804 = vld [vmem:[%s9 + $0x2] sm:$0x1]
      %v3805 = vlaneseq
      %v3806 = vshrl.u32 %v3805, 7
      %v3807 = vsub.s32 0, %v3806
      %v3808 = vrot.slane %v3804, %v3807
      %vm3809 = vcmask 179200
      %v3811 = vsel %vm3809, %v3784, 0
      %vm3813 = vcmask 1045504
      %v3815 = vsel %vm3813, %v3803, 0
      %3817 = vmatprep.subr.mxu0 0.0
      %3818 = vmatpush1.msra.mxu0 %v3785
      %3819 = vmatprep.subr.mxu0 0.0
      %3820 = vmatpush1.msra.mxu0 %v3786
      %3821 = vmatprep.subr.mxu0 0.0
      %3822 = vmatpush1.msra.mxu0 %v3787
      %3823 = vmatprep.subr.mxu0 0.0
      %3824 = vmatpush1.msra.mxu0 %v3788
      %3825 = vmatprep.subr.mxu0 0.0
      %3826 = vmatpush1.msra.mxu0 %v3789
      %3827 = vmatprep.subr.mxu0 0.0
      %3828 = vmatpush1.msra.mxu0 %v3790
      %3829 = vmatprep.subr.mxu0 0.0
      %3830 = vmatpush1.msra.mxu0 %v3791
      %3831 = vmatprep.subr.mxu0 0.0
      %3832 = vmatpush1.msra.mxu0 %v3792
      %3833 = vmatprep.subr.mxu0 0.0
      %3834 = vmatpush1.msra.mxu0 %v3793
      %3835 = vmatprep.subr.mxu0 0.0
      %3836 = vmatpush1.msra.mxu0 %v3794
      %3837 = vmatprep.subr.mxu0 0.0
      %3838 = vmatpush1.msra.mxu0 %v3795
      %3839 = vmatprep.subr.mxu0 0.0
      %3840 = vmatpush1.msra.mxu0 %v3796
      %3841 = vmatprep.subr.mxu0 0.0
      %3842 = vmatpush1.msra.mxu0 %v3797
      %3843 = vmatprep.subr.mxu0 0.0
      %3844 = vmatpush1.msra.mxu0 %v3798
      %3845 = vmatprep.subr.mxu0 0.0
      %3846 = vmatpush1.msra.mxu0 %v3799
      %3847 = vmatprep.subr.mxu0 0.0
      %3848 = vmatpush1.msra.mxu0 %v3800
      %3849 = vmatprep.subr.mxu0 0.0
      %3850 = vmatpush1.msra.mxu0 %v3801
      %3851 = vmatprep.subr.mxu0 0.0
      %3852 = vmatpush1.msra.mxu0 %v3802
      %3853 = vmatprep.subr.mxu0 0.0
      %3854 = vmatpush1.msra.mxu0 %v3815
      %3855 = vmatprep.subr.mxu0 0.0
      %3856 = vmatpush1.msra.mxu0 0.0
      %3857 = vmatprep.subr.mxu0 0.0
      %3858 = vmatpush1.msra.mxu0 0.0
      %3859 = vmatprep.subr.mxu0 0.0
      %3860 = vmatpush1.msra.mxu0 0.0
      %3861 = vmatprep.subr.mxu0 0.0
      %3862 = vmatpush1.msra.mxu0 0.0
      %3863 = vmatprep.subr.mxu0 0.0
      %3864 = vmatpush1.msra.mxu0 0.0
      %3865 = vmatprep.subr.mxu0 0.0
      %3866 = vmatpush1.msra.mxu0 0.0
      %3867 = vmatprep.subr.mxu0 0.0
      %3868 = vmatpush1.msra.mxu0 0.0
      %3869 = vmatprep.subr.mxu0 0.0
      %3870 = vmatpush1.msra.mxu0 0.0
      %3871 = vmatprep.subr.mxu0 0.0
      %3872 = vmatpush1.msra.mxu0 0.0
      %3873 = vmatprep.subr.mxu0 0.0
      %3874 = vmatpush1.msra.mxu0 0.0
      %3875 = vmatprep.subr.mxu0 0.0
      %3876 = vmatpush1.msra.mxu0 0.0
      %3877 = vmatprep.subr.mxu0 0.0
      %3878 = vmatpush1.msra.mxu0 0.0
      %3879 = vmatprep.subr.mxu0 0.0
      %3880 = vmatpush1.msra.mxu0 0.0
      %3881 = vmatprep.mubr.f32.mxu0 %v3811
      %3882 = vmatmul.mubr.f32.gmra.mrb[0].mxu0 %v3783
      %v3883 = vpop.f32.mrb[0].mxu0
      %v3884 = vadd.f32 %v3808, %v3883
      %v3885 = vpop.f32.mrb[0].mxu0
      %3886 = vdwg.mxu0
      %v3887 = vmax.f32 %v3884, 0.0
      %v3888 = vld [vmem:[%s8] sm:$0xff]
      %v3889 = vld [vmem:[%s8 + $0x8] sm:$0xff]
      %v3890 = vld [vmem:[%s8 + $0x10] sm:$0xff]
      %v3891 = vld [vmem:[%s8 + $0x18] sm:$0xff]
      %v3892 = vld [vmem:[%s8 + $0x20] sm:$0xff]
      %v3893 = vld [vmem:[%s8 + $0x28] sm:$0xff]
      %v3894 = vld [vmem:[%s8 + $0x30] sm:$0x3]
      %v3895 = vld [vmem:[%s9 + $0x3] sm:$0x1]
      %v3896 = vlaneseq
      %v3897 = vshrl.u32 %v3896, 7
      %v3898 = vsub.s32 0, %v3897
      %v3899 = vrot.slane %v3895, %v3898
      %vm3900 = vcmask 408576
      %v3902 = vsel %vm3900, %v3887, 0
      %vm3904 = vcmask 1041408
      %v3906 = vsel %vm3904, %v3894, 0
      %3908 = vmatprep.subr.mxu0 0.0
      %3909 = vmatpush1.msra.mxu0 %v3888
      %3910 = vmatprep.subr.mxu0 0.0
      %3911 = vmatpush1.msra.mxu0 %v3889
      %3912 = vmatprep.subr.mxu0 0.0
      %3913 = vmatpush1.msra.mxu0 %v3890
      %3914 = vmatprep.subr.mxu0 0.0
      %3915 = vmatpush1.msra.mxu0 %v3891
      %3916 = vmatprep.subr.mxu0 0.0
      %3917 = vmatpush1.msra.mxu0 %v3892
      %3918 = vmatprep.subr.mxu0 0.0
      %3919 = vmatpush1.msra.mxu0 %v3893
      %3920 = vmatprep.subr.mxu0 0.0
      %3921 = vmatpush1.msra.mxu0 %v3906
      %3922 = vmatprep.subr.mxu0 0.0
      %3923 = vmatpush1.msra.mxu0 0.0
      %3924 = vmatprep.subr.mxu0 0.0
      %3925 = vmatpush1.msra.mxu0 0.0
      %3926 = vmatprep.subr.mxu0 0.0
      %3927 = vmatpush1.msra.mxu0 0.0
      %3928 = vmatprep.subr.mxu0 0.0
      %3929 = vmatpush1.msra.mxu0 0.0
      %3930 = vmatprep.subr.mxu0 0.0
      %3931 = vmatpush1.msra.mxu0 0.0
      %3932 = vmatprep.subr.mxu0 0.0
      %3933 = vmatpush1.msra.mxu0 0.0
      %3934 = vmatprep.subr.mxu0 0.0
      %3935 = vmatpush1.msra.mxu0 0.0
      %3936 = vmatprep.subr.mxu0 0.0
      %3937 = vmatpush1.msra.mxu0 0.0
      %3938 = vmatprep.subr.mxu0 0.0
      %3939 = vmatpush1.msra.mxu0 0.0
      %3940 = vmatprep.subr.mxu0 0.0
      %3941 = vmatpush1.msra.mxu0 0.0
      %3942 = vmatprep.subr.mxu0 0.0
      %3943 = vmatpush1.msra.mxu0 0.0
      %3944 = vmatprep.subr.mxu0 0.0
      %3945 = vmatpush1.msra.mxu0 0.0
      %3946 = vmatprep.subr.mxu0 0.0
      %3947 = vmatpush1.msra.mxu0 0.0
      %3948 = vmatprep.subr.mxu0 0.0
      %3949 = vmatpush1.msra.mxu0 0.0
      %3950 = vmatprep.subr.mxu0 0.0
      %3951 = vmatpush1.msra.mxu0 0.0
      %3952 = vmatprep.subr.mxu0 0.0
      %3953 = vmatpush1.msra.mxu0 0.0
      %3954 = vmatprep.subr.mxu0 0.0
      %3955 = vmatpush1.msra.mxu0 0.0
      %3956 = vmatprep.subr.mxu0 0.0
      %3957 = vmatpush1.msra.mxu0 0.0
      %3958 = vmatprep.subr.mxu0 0.0
      %3959 = vmatpush1.msra.mxu0 0.0
      %3960 = vmatprep.subr.mxu0 0.0
      %3961 = vmatpush1.msra.mxu0 0.0
      %3962 = vmatprep.subr.mxu0 0.0
      %3963 = vmatpush1.msra.mxu0 0.0
      %3964 = vmatprep.subr.mxu0 0.0
      %3965 = vmatpush1.msra.mxu0 0.0
      %3966 = vmatprep.subr.mxu0 0.0
      %3967 = vmatpush1.msra.mxu0 0.0
      %3968 = vmatprep.subr.mxu0 0.0
      %3969 = vmatpush1.msra.mxu0 0.0
      %3970 = vmatprep.subr.mxu0 0.0
      %3971 = vmatpush1.msra.mxu0 0.0
      %3972 = vmatprep.mubr.f32.mxu0 0.0
      %3973 = vmatmul.mubr.f32.gmra.mrb[0].mxu0 %v3902
      %v3974 = vpop.f32.mrb[0].mxu0
      %v3975 = vadd.f32 %v3899, %v3974
      %v3976 = vpop.f32.mrb[0].mxu0
      %3977 = vdwg.mxu0
      %vm3978 = vcmask 15360
      %3979 = vst.msk [vmem:[%s359] sm:$0xff] %vm3978, %v3975
      %p3980 = scmp.lt.s32.totalorder %s21, 1
      %s3981 = scalar_select %p3980, %s21, 1
      %s3982 = smul.addr %s3981, 8
      %s3983 = scalar_lea.vmem %s10, %s3982
      // Predicated region
      $region61: #{conv1_forward.1} parent=59 // pred_check
        %p3984 = pneg %p254
      $region62: #{conv1_forward.1} parent=59 // pred_check_branch
        %3986 = sbr.rel (%p3984) target = $region64
      $region63: #{conv1_forward.1} parent=59 // pred_region
        _
      $region64: #{conv1_forward.1} parent=59 // pred_fallthru
        _
    $region60: #{conv1_forward.1} parent=5 // pred_fallthru
      _
    %p3987 = scmp.le.s32.totalorder 2, %s16
    // Predicated region
    $region65: #{conv1_forward.1} parent=5 // pred_check
      %p3988 = pneg %p3987
    $region66: #{conv1_forward.1} parent=5 // pred_check_branch
      %3990 = sbr.rel (%p3988) target = $region68
    $region67: #{conv1_forward.1} parent=5 // pred_region
      %s3991 = ssub.s32 %s16, 2
      // Predicated region
      $region69: #{conv1_forward.1} parent=67 // pred_check
        %p3992 = pneg %p260
      $region70: #{conv1_forward.1} parent=67 // pred_check_branch
        %3994 = sbr.rel (%p3992) target = $region72
      $region71: #{conv1_forward.1} parent=67 // pred_region
        %p3995 = scmp.lt.s32.totalorder %s22, 1
        %s3996 = scalar_select %p3995, %s22, 1
        %s3997 = smul.addr %s3996, 8
        %s3998 = scalar_lea.vmem %s10, %s3997
      $region72: #{conv1_forward.1} parent=67 // pred_fallthru
        _
    $region68: #{conv1_forward.1} parent=5 // pred_fallthru
      _
  $region6: #{conv1_forward.1} parent=0 // loop_footer
    %s20 = sadd.s32 1, %s16
  $region7: #{conv1_forward.1} parent=0 // loop_footer_branch
    %15 = sbr.rel target = $region3
  $region8: #{conv1_forward.1} parent=0 // loop_exit
    _

</llo_original>
